<compile_context>
chip_gen: v6e
topology: v6e:2x2x1
jax: 0.10.0
libtpu: 0.0.40
codegen_flags: <defaults>
</compile_context>

<pallas_src>
import jax
import jax.numpy as jnp
from jax.experimental import pallas as pl
from jax.experimental.pallas import tpu as pltpu

B_BLK = 8      # batch rows per block (second-minor tiling unit, multiple of 8)
LANE = 128     # TPU lane width; seq tiles are multiples of this


def _round_up(x, m):
    return (x + m - 1) // m * m


def attention_kernel(blkmax_ref,                               # scalar prefetch (SMEM)
                     hidden_ref, enc_ref, lens_ref,            # inputs
                     wh_ref, we_ref, bhe_ref, wo_ref,          # resident weights
                     out_ref,                                  # (B_BLK, n_seq, S_TILE), resident over seq axis
                     hb_ref, m_ref, l_ref):                    # VMEM scratch
    i = pl.program_id(0)                   # batch block
    j = pl.program_id(1)                   # seq tile ("arbitrary" axis)
    n_seq = pl.num_programs(1)
    L, _, H = hidden_ref.shape
    _, S_T, _ = enc_ref.shape

    # ---- once per batch block: hidden mean + projection, accumulator / output init ----
    @pl.when(j == 0)
    def _init():
        h_mean = jnp.mean(hidden_ref[...], axis=0)                         # (B_BLK, H)
        # bh and be are both folded into this broadcast row:
        #   tanh((e + be) + (h@Wh + bh)) == tanh(e + (h@Wh + bh + be))
        hb_ref[...] = jnp.dot(h_mean, wh_ref[...],
                              preferred_element_type=jnp.float32) + bhe_ref[...]
        m_ref[...] = jnp.full_like(m_ref, -1e30)
        l_ref[...] = jnp.zeros_like(l_ref)
        out_ref[...] = jnp.zeros_like(out_ref)

    blk_start = j * S_T

    # ---- skip seq tiles that are entirely past every row's length in this batch block ----
    @pl.when(blk_start < blkmax_ref[i])
    def _compute():
        enc = enc_ref[...]                                                 # (B_BLK, S_T, H)
        # Encoder projection on the MXU: (B_BLK*S_T, H) @ (H, H)
        e = jnp.dot(enc.reshape(B_BLK * S_T, H), we_ref[...],
                    preferred_element_type=jnp.float32).reshape(B_BLK, S_T, H)
        res = jnp.tanh(e + hb_ref[...][:, None, :])                        # (B_BLK, S_T, H)

        # out-projection Linear(H, 1) as VPU multiply + lane reduce (no 1-wide MXU pass).
        energy = jnp.sum(res * wo_ref[...][None, :, :], axis=-1)           # (B_BLK, S_T)

        # Length mask for this tile.
        pos = blk_start + jax.lax.broadcasted_iota(jnp.int32, (B_BLK, S_T), 1)
        mask = pos < lens_ref[...]                                         # (B_BLK, S_T)
        em = jnp.where(mask, energy, -1e30)

        # Online (flash-style) masked softmax update.
        m_prev = m_ref[...]
        m_new = jnp.maximum(m_prev, jnp.max(em, axis=1, keepdims=True))
        alpha = jnp.exp(m_prev - m_new)
        p = jnp.where(mask, jnp.exp(em - m_new), 0.0)
        l_ref[...] = alpha * l_ref[...] + jnp.sum(p, axis=1, keepdims=True)
        m_ref[...] = m_new

        out_ref[...] = out_ref[...] * alpha[:, :, None]    # rescale previously written tiles
        out_ref[:, pl.ds(j, 1), :] = p[:, None, :]         # write this tile's (unnormalized) weights

    # ---- finalize: normalize the whole resident row ----
    @pl.when(j == n_seq - 1)
    def _finalize():
        l = l_ref[...]
        safe_l = jnp.where(l > 0.0, l, 1.0)                # fully-masked rows stay exactly zero
        out_ref[...] = out_ref[...] * (1.0 / safe_l)[:, :, None]


def bahdanau_attention(hidden, encoder_output, enc_len, params, *, s_tile=None):
    """hidden: (L, B, H) f32, encoder_output: (B, S, H) f32, enc_len: (B,) int."""
    L, B, H = hidden.shape
    S = encoder_output.shape[1]

    # ---- tile selection: seq tile is a multiple of 128, sized against a VMEM budget ----
    if s_tile is None:
        per_row_bytes = B_BLK * H * 4
        s_tile = max(LANE, min(512, (4 * (2 ** 20) // per_row_bytes) // LANE * LANE))
    assert s_tile % LANE == 0
    S_pad = _round_up(max(S, 1), s_tile)
    B_pad = _round_up(B, B_BLK)
    n_bblk = B_pad // B_BLK
    n_seq = S_pad // s_tile

    # ---- pad inputs to the tiled shapes (padding rows get length 0 -> zero output) ----
    hidden_p = jnp.pad(hidden.astype(jnp.float32), ((0, 0), (0, B_pad - B), (0, 0)))
    enc_p = jnp.pad(encoder_output.astype(jnp.float32),
                    ((0, B_pad - B), (0, S_pad - S), (0, 0)))
    lens = jnp.pad(enc_len.astype(jnp.int32), (0, B_pad - B)).reshape(B_pad, 1)
    blk_max = lens.reshape(n_bblk, B_BLK).max(axis=1)          # scalar prefetch -> SMEM

    # bh + be folded into one broadcast row; bo dropped (softmax shift-invariant).
    bhe = (params["bh"] + params["be"]).astype(jnp.float32)    # (1, H)
    wo_row = params["wo_row"].astype(jnp.float32)              # (1, H)
    wh_t = params["wh_t"].astype(jnp.float32)
    we_t = params["we_t"].astype(jnp.float32)

    # ---- VMEM budget: double-buffered enc stream + resident weights / out row / scratch ----
    est = 4 * (2 * B_BLK * s_tile * H          # enc tiles (double-buffered)
               + 2 * L * B_BLK * H             # hidden block (double-buffered)
               + 2 * H * H + 2 * H             # wh_t, we_t, bhe, wo (resident)
               + B_BLK * S_pad                 # resident output row
               + B_BLK * (H + 2))              # scratch hb / m / l
    vmem_limit = int(min(32 * (2 ** 20), max(int(1.5 * est) + (1 << 20), 8 * (2 ** 20))))

    grid_spec = pltpu.PrefetchScalarGridSpec(
        num_scalar_prefetch=1,
        grid=(n_bblk, n_seq),
        in_specs=[
            pl.BlockSpec((L, B_BLK, H), lambda i, j, bm: (0, i, 0)),       # hidden (resident over j)
            pl.BlockSpec((B_BLK, s_tile, H), lambda i, j, bm: (i, j, 0)),  # encoder stream
            pl.BlockSpec((B_BLK, 1), lambda i, j, bm: (i, 0)),             # lengths
            pl.BlockSpec((H, H), lambda i, j, bm: (0, 0)),                 # wh_t (resident)
            pl.BlockSpec((H, H), lambda i, j, bm: (0, 0)),                 # we_t (resident)
            pl.BlockSpec((1, H), lambda i, j, bm: (0, 0)),                 # bh + be
            pl.BlockSpec((1, H), lambda i, j, bm: (0, 0)),                 # wo row
        ],
        out_specs=pl.BlockSpec((B_BLK, n_seq, s_tile), lambda i, j, bm: (i, 0, 0)),
        scratch_shapes=[
            pltpu.VMEM((B_BLK, H), jnp.float32),   # hoisted hidden projection
            pltpu.VMEM((B_BLK, 1), jnp.float32),   # running max
            pltpu.VMEM((B_BLK, 1), jnp.float32),   # running sum
        ],
    )

    out = pl.pallas_call(
        attention_kernel,
        grid_spec=grid_spec,
        out_shape=jax.ShapeDtypeStruct((B_pad, n_seq, s_tile), jnp.float32),
        compiler_params=pltpu.CompilerParams(
            dimension_semantics=("parallel", "arbitrary"),
            vmem_limit_bytes=vmem_limit),
    )(blk_max, hidden_p, enc_p, lens, wh_t, we_t, bhe, wo_row)

    out = out.reshape(B_pad, S_pad)[:B, :S]
    return out[..., None]                                       # (B, S, 1)


def init_params(key, hidden_size):
    """Deterministic synthetic parameters (nn.Linear shapes: weight (out,in), bias (out,))."""
    ks = jax.random.split(key, 6)
    H = hidden_size
    wh = jax.random.normal(ks[0], (H, H), jnp.float32) * 0.1    # hidden_proj.weight
    bh = jax.random.normal(ks[1], (H,), jnp.float32) * 0.1
    we = jax.random.normal(ks[2], (H, H), jnp.float32) * 0.1    # encoder_output_proj.weight
    be = jax.random.normal(ks[3], (H,), jnp.float32) * 0.1
    wo = jax.random.normal(ks[4], (1, H), jnp.float32) * 0.1    # out.weight
    bo = jax.random.normal(ks[5], (1,), jnp.float32) * 0.1
    # pre-transpose square weights to (in, out); biases as (1, H) rows; wo kept as (1, H) row.
    return dict(wh_t=wh.T, bh=bh.reshape(1, H),
                we_t=we.T, be=be.reshape(1, H),
                wo_row=wo, bo=bo[0])
    # NOTE: self.proj / self.tanh members of the module are unused in forward -> not needed.


def reference(hidden, encoder_output, enc_len, params):
    """Pure-JAX reference mirroring the PyTorch forward (including both biases)."""
    L, B, H = hidden.shape
    S = encoder_output.shape[1]
    h_mean = jnp.mean(hidden, axis=0)                                      # (B, H)
    h_attn = h_mean @ params["wh_t"] + params["bh"]                        # (B, H)
    e_attn = encoder_output @ params["we_t"] + params["be"]                # (B, S, H)
    res = jnp.tanh(e_attn + h_attn[:, None, :])
    energy = jnp.einsum("bsh,h->bs", res, params["wo_row"][0]) + params["bo"]
    out = jnp.zeros((B, S), jnp.float32)
    for b in range(B):
        le = int(enc_len[b])
        if le > 0:
            out = out.at[b, :le].set(jax.nn.softmax(energy[b, :le]))
    return out[..., None]


if __name__ == "__main__":
    key = jax.random.PRNGKey(0)
    B, L, S, H = 3, 3, 200, 32            # batch, decoder_layer, seq, hidden_size
    k1, k2, k3 = jax.random.split(key, 3)

    hidden = jax.random.normal(k1, (L, B, H), jnp.float32)
    encoder_output = jax.random.normal(k2, (B, S, H), jnp.float32)
    enc_len = jnp.array([200, 73, 0], dtype=jnp.int32)   # full, partial, empty rows
    params = init_params(k3, H)

    # s_tile=128 -> 2 seq tiles: exercises the online softmax, tile skip and masking paths.
    out = bahdanau_attention(hidden, encoder_output, enc_len, params, s_tile=128)
    out = jax.block_until_ready(out)

    ref = reference(hidden, encoder_output, enc_len, params)
    assert out.shape == (B, S, 1)
    assert jnp.allclose(out, ref, atol=1e-5, rtol=1e-5), (out[..., 0], ref[..., 0])
    print("KERNEL_OK")
</pallas_src>

<mosaic_0001>
module attributes {stable_mosaic.version = 11 : i64} {
  func.func @attention_kernel(%arg0: i32, %arg1: i32, %arg2: memref<1xi32, #tpu.memory_space<smem>>, %arg3: memref<3x8x32xf32, #tpu.memory_space<vmem>>, %arg4: memref<8x128x32xf32, #tpu.memory_space<vmem>>, %arg5: memref<8x1xi32, #tpu.memory_space<vmem>>, %arg6: memref<32x32xf32, #tpu.memory_space<vmem>>, %arg7: memref<32x32xf32, #tpu.memory_space<vmem>>, %arg8: memref<1x32xf32, #tpu.memory_space<vmem>>, %arg9: memref<1x32xf32, #tpu.memory_space<vmem>>, %arg10: memref<8x2x128xf32, #tpu.memory_space<vmem>>, %arg11: memref<8x32xf32, #tpu.memory_space<vmem>>, %arg12: memref<8x1xf32, #tpu.memory_space<vmem>>, %arg13: memref<8x1xf32, #tpu.memory_space<vmem>>) attributes {dimension_semantics = [#tpu.dimension_semantics<parallel>, #tpu.dimension_semantics<arbitrary>], iteration_bounds = array<i64: 1, 2>, scalar_prefetch = 1 : i64, scratch_operands = 3 : i64, tpu.core_type = #tpu.core_type<tc>, window_params = [{transform_indices = @transform_0, window_bounds = array<i64: 3, 8, 32>}, {transform_indices = @transform_1, window_bounds = array<i64: 8, 128, 32>}, {transform_indices = @transform_2, window_bounds = array<i64: 8, 1>}, {pipeline_mode = #tpu.pipeline_mode<synchronous>, transform_indices = @transform_3, window_bounds = array<i64: 32, 32>}, {pipeline_mode = #tpu.pipeline_mode<synchronous>, transform_indices = @transform_4, window_bounds = array<i64: 32, 32>}, {pipeline_mode = #tpu.pipeline_mode<synchronous>, transform_indices = @transform_5, window_bounds = array<i64: 1, 32>}, {pipeline_mode = #tpu.pipeline_mode<synchronous>, transform_indices = @transform_6, window_bounds = array<i64: 1, 32>}, {transform_indices = @transform_7, window_bounds = array<i64: 8, 2, 128>}]} {
    %c0_i32 = arith.constant 0 : i32
    %0 = arith.cmpi eq, %arg1, %c0_i32 : i32
    %1 = arith.extui %0 : i1 to i32
    %c0_i32_0 = arith.constant 0 : i32
    %2 = arith.cmpi ne, %1, %c0_i32_0 : i32
    scf.if %2 {
      %c0 = arith.constant 0 : index
      %c0_3 = arith.constant 0 : index
      %c0_4 = arith.constant 0 : index
      %12 = vector.load %arg3[%c0, %c0_3, %c0_4] : memref<3x8x32xf32, #tpu.memory_space<vmem>>, vector<3x8x32xf32>
      %cst = arith.constant dense<0.000000e+00> : vector<8x32xf32>
      %13 = vector.multi_reduction <add>, %12, %cst [0] : vector<3x8x32xf32> to vector<8x32xf32>
      %cst_5 = arith.constant 3.000000e+00 : f32
      %14 = vector.broadcast %cst_5 : f32 to vector<8x32xf32>
      %15 = arith.divf %13, %14 : vector<8x32xf32>
      %c0_6 = arith.constant 0 : index
      %c0_7 = arith.constant 0 : index
      %16 = vector.load %arg6[%c0_6, %c0_7] : memref<32x32xf32, #tpu.memory_space<vmem>>, vector<32x32xf32>
      %cst_8 = arith.constant dense<0.000000e+00> : vector<8x32xf32>
      %17 = tpu.matmul %15, %16, %cst_8 {dimension_numbers = #tpu.dot_dimension_numbers<[1], [0], [0], [1], [0, 0, 1, 1], [], []>} : vector<8x32xf32>, vector<32x32xf32>, vector<8x32xf32> -> vector<8x32xf32>
      %c0_9 = arith.constant 0 : index
      %c0_10 = arith.constant 0 : index
      %18 = vector.load %arg8[%c0_9, %c0_10] : memref<1x32xf32, #tpu.memory_space<vmem>>, vector<1x32xf32>
      %19 = vector.broadcast %18 : vector<1x32xf32> to vector<8x32xf32>
      %20 = arith.addf %17, %19 : vector<8x32xf32>
      %c0_11 = arith.constant 0 : index
      %c0_12 = arith.constant 0 : index
      %21 = vector.load %arg11[%c0_11, %c0_12] : memref<8x32xf32, #tpu.memory_space<vmem>>, vector<8x32xf32>
      tpu.vector_store %arg11[%c0_11, %c0_12], %20 {strides = array<i32>} : memref<8x32xf32, #tpu.memory_space<vmem>>, vector<8x32xf32>,
      %cst_13 = arith.constant -1.000000e+30 : f32
      %22 = vector.broadcast %cst_13 : f32 to vector<8x1xf32>
      %c0_14 = arith.constant 0 : index
      %c0_15 = arith.constant 0 : index
      %23 = vector.load %arg12[%c0_14, %c0_15] : memref<8x1xf32, #tpu.memory_space<vmem>>, vector<8x1xf32>
      tpu.vector_store %arg12[%c0_14, %c0_15], %22 {strides = array<i32>} : memref<8x1xf32, #tpu.memory_space<vmem>>, vector<8x1xf32>,
      %cst_16 = arith.constant 0.000000e+00 : f32
      %24 = vector.broadcast %cst_16 : f32 to vector<8x1xf32>
      %c0_17 = arith.constant 0 : index
      %c0_18 = arith.constant 0 : index
      %25 = vector.load %arg13[%c0_17, %c0_18] : memref<8x1xf32, #tpu.memory_space<vmem>>, vector<8x1xf32>
      tpu.vector_store %arg13[%c0_17, %c0_18], %24 {strides = array<i32>} : memref<8x1xf32, #tpu.memory_space<vmem>>, vector<8x1xf32>,
      %cst_19 = arith.constant 0.000000e+00 : f32
      %26 = vector.broadcast %cst_19 : f32 to vector<8x2x128xf32>
      %c0_20 = arith.constant 0 : index
      %c0_21 = arith.constant 0 : index
      %c0_22 = arith.constant 0 : index
      %27 = vector.load %arg10[%c0_20, %c0_21, %c0_22] : memref<8x2x128xf32, #tpu.memory_space<vmem>>, vector<8x2x128xf32>
      tpu.vector_store %arg10[%c0_20, %c0_21, %c0_22], %26 {strides = array<i32>} : memref<8x2x128xf32, #tpu.memory_space<vmem>>, vector<8x2x128xf32>,
    } else {
    }
    %c128_i32 = arith.constant 128 : i32
    %3 = arith.muli %arg1, %c128_i32 : i32
    %4 = arith.index_cast %arg0 : i32 to index
    %5 = memref.load %arg2[%4] : memref<1xi32, #tpu.memory_space<smem>>
    %6 = arith.cmpi slt, %3, %5 : i32
    %7 = arith.extui %6 : i1 to i32
    %c0_i32_1 = arith.constant 0 : i32
    %8 = arith.cmpi ne, %7, %c0_i32_1 : i32
    scf.if %8 {
      %c0 = arith.constant 0 : index
      %c0_3 = arith.constant 0 : index
      %c0_4 = arith.constant 0 : index
      %12 = vector.load %arg4[%c0, %c0_3, %c0_4] : memref<8x128x32xf32, #tpu.memory_space<vmem>>, vector<8x128x32xf32>
      %13 = vector.shape_cast %12 : vector<8x128x32xf32> to vector<1024x32xf32>
      %c0_5 = arith.constant 0 : index
      %c0_6 = arith.constant 0 : index
      %14 = vector.load %arg7[%c0_5, %c0_6] : memref<32x32xf32, #tpu.memory_space<vmem>>, vector<32x32xf32>
      %cst = arith.constant dense<0.000000e+00> : vector<1024x32xf32>
      %15 = tpu.matmul %13, %14, %cst {dimension_numbers = #tpu.dot_dimension_numbers<[1], [0], [0], [1], [0, 0, 1, 1], [], []>} : vector<1024x32xf32>, vector<32x32xf32>, vector<1024x32xf32> -> vector<1024x32xf32>
      %16 = vector.shape_cast %15 : vector<1024x32xf32> to vector<8x128x32xf32>
      %c0_7 = arith.constant 0 : index
      %c0_8 = arith.constant 0 : index
      %17 = vector.load %arg11[%c0_7, %c0_8] : memref<8x32xf32, #tpu.memory_space<vmem>>, vector<8x32xf32>
      %18 = vector.shape_cast %17 : vector<8x32xf32> to vector<8x1x32xf32>
      %19 = vector.broadcast %18 : vector<8x1x32xf32> to vector<8x128x32xf32>
      %20 = arith.addf %16, %19 : vector<8x128x32xf32>
      %21 = math.tanh %20 : vector<8x128x32xf32>
      %c0_9 = arith.constant 0 : index
      %c0_10 = arith.constant 0 : index
      %22 = vector.load %arg9[%c0_9, %c0_10] : memref<1x32xf32, #tpu.memory_space<vmem>>, vector<1x32xf32>
      %23 = vector.shape_cast %22 : vector<1x32xf32> to vector<1x1x32xf32>
      %24 = vector.broadcast %23 : vector<1x1x32xf32> to vector<8x128x32xf32>
      %25 = arith.mulf %21, %24 : vector<8x128x32xf32>
      %cst_11 = arith.constant dense<0.000000e+00> : vector<8x128xf32>
      %26 = vector.multi_reduction <add>, %25, %cst_11 [2] : vector<8x128x32xf32> to vector<8x128xf32>
      %27 = tpu.iota {dimensions = array<i32: 1>} : vector<8x128xi32>
      %28 = vector.broadcast %3 : i32 to vector<8x128xi32>
      %29 = arith.addi %28, %27 : vector<8x128xi32>
      %c0_12 = arith.constant 0 : index
      %c0_13 = arith.constant 0 : index
      %30 = vector.load %arg5[%c0_12, %c0_13] : memref<8x1xi32, #tpu.memory_space<vmem>>, vector<8x1xi32>
      %31 = vector.broadcast %30 : vector<8x1xi32> to vector<8x128xi32>
      %32 = arith.cmpi slt, %29, %31 : vector<8x128xi32>
      %cst_14 = arith.constant -1.000000e+30 : f32
      %33 = vector.broadcast %cst_14 : f32 to vector<8x128xf32>
      %34 = arith.select %32, %26, %33 : vector<8x128xi1>, vector<8x128xf32>
      %c0_15 = arith.constant 0 : index
      %c0_16 = arith.constant 0 : index
      %35 = vector.load %arg12[%c0_15, %c0_16] : memref<8x1xf32, #tpu.memory_space<vmem>>, vector<8x1xf32>
      %cst_17 = arith.constant dense<0xFF800000> : vector<8xf32>
      %36 = vector.multi_reduction <maximumf>, %34, %cst_17 [1] : vector<8x128xf32> to vector<8xf32>
      %37 = vector.shape_cast %36 : vector<8xf32> to vector<8x1xf32>
      %38 = arith.maximumf %35, %37 : vector<8x1xf32>
      %39 = arith.subf %35, %38 : vector<8x1xf32>
      %40 = math.exp %39 : vector<8x1xf32>
      %41 = vector.broadcast %38 : vector<8x1xf32> to vector<8x128xf32>
      %42 = arith.subf %34, %41 : vector<8x128xf32>
      %43 = math.exp %42 : vector<8x128xf32>
      %cst_18 = arith.constant 0.000000e+00 : f32
      %44 = vector.broadcast %cst_18 : f32 to vector<8x128xf32>
      %45 = arith.select %32, %43, %44 : vector<8x128xi1>, vector<8x128xf32>
      %c0_19 = arith.constant 0 : index
      %c0_20 = arith.constant 0 : index
      %46 = vector.load %arg13[%c0_19, %c0_20] : memref<8x1xf32, #tpu.memory_space<vmem>>, vector<8x1xf32>
      %47 = arith.mulf %40, %46 : vector<8x1xf32>
      %cst_21 = arith.constant dense<0.000000e+00> : vector<8xf32>
      %48 = vector.multi_reduction <add>, %45, %cst_21 [1] : vector<8x128xf32> to vector<8xf32>
      %49 = vector.shape_cast %48 : vector<8xf32> to vector<8x1xf32>
      %50 = arith.addf %47, %49 : vector<8x1xf32>
      %c0_22 = arith.constant 0 : index
      %c0_23 = arith.constant 0 : index
      %51 = vector.load %arg13[%c0_22, %c0_23] : memref<8x1xf32, #tpu.memory_space<vmem>>, vector<8x1xf32>
      tpu.vector_store %arg13[%c0_22, %c0_23], %50 {strides = array<i32>} : memref<8x1xf32, #tpu.memory_space<vmem>>, vector<8x1xf32>,
      %c0_24 = arith.constant 0 : index
      %c0_25 = arith.constant 0 : index
      %52 = vector.load %arg12[%c0_24, %c0_25] : memref<8x1xf32, #tpu.memory_space<vmem>>, vector<8x1xf32>
      tpu.vector_store %arg12[%c0_24, %c0_25], %38 {strides = array<i32>} : memref<8x1xf32, #tpu.memory_space<vmem>>, vector<8x1xf32>,
      %c0_26 = arith.constant 0 : index
      %c0_27 = arith.constant 0 : index
      %c0_28 = arith.constant 0 : index
      %53 = vector.load %arg10[%c0_26, %c0_27, %c0_28] : memref<8x2x128xf32, #tpu.memory_space<vmem>>, vector<8x2x128xf32>
      %54 = vector.shape_cast %40 : vector<8x1xf32> to vector<8x1x1xf32>
      %55 = vector.broadcast %54 : vector<8x1x1xf32> to vector<8x2x128xf32>
      %56 = arith.mulf %53, %55 : vector<8x2x128xf32>
      %c0_29 = arith.constant 0 : index
      %c0_30 = arith.constant 0 : index
      %c0_31 = arith.constant 0 : index
      %57 = vector.load %arg10[%c0_29, %c0_30, %c0_31] : memref<8x2x128xf32, #tpu.memory_space<vmem>>, vector<8x2x128xf32>
      tpu.vector_store %arg10[%c0_29, %c0_30, %c0_31], %56 {strides = array<i32>} : memref<8x2x128xf32, #tpu.memory_space<vmem>>, vector<8x2x128xf32>,
      %58 = vector.shape_cast %45 : vector<8x128xf32> to vector<8x1x128xf32>
      %c0_32 = arith.constant 0 : index
      %59 = arith.index_cast %arg1 : i32 to index
      %c0_33 = arith.constant 0 : index
      %60 = vector.load %arg10[%c0_32, %59, %c0_33] : memref<8x2x128xf32, #tpu.memory_space<vmem>>, vector<8x1x128xf32>
      tpu.vector_store %arg10[%c0_32, %59, %c0_33], %58 {strides = array<i32>} : memref<8x2x128xf32, #tpu.memory_space<vmem>>, vector<8x1x128xf32>,
    } else {
    }
    %c1_i32 = arith.constant 1 : i32
    %9 = arith.cmpi eq, %arg1, %c1_i32 : i32
    %10 = arith.extui %9 : i1 to i32
    %c0_i32_2 = arith.constant 0 : i32
    %11 = arith.cmpi ne, %10, %c0_i32_2 : i32
    scf.if %11 {
      %c0 = arith.constant 0 : index
      %c0_3 = arith.constant 0 : index
      %12 = vector.load %arg13[%c0, %c0_3] : memref<8x1xf32, #tpu.memory_space<vmem>>, vector<8x1xf32>
      %cst = arith.constant 0.000000e+00 : f32
      %13 = vector.broadcast %cst : f32 to vector<8x1xf32>
      %14 = arith.cmpf ogt, %12, %13 : vector<8x1xf32>
      %cst_4 = arith.constant 1.000000e+00 : f32
      %15 = vector.broadcast %cst_4 : f32 to vector<8x1xf32>
      %16 = arith.select %14, %12, %15 : vector<8x1xi1>, vector<8x1xf32>
      %c0_5 = arith.constant 0 : index
      %c0_6 = arith.constant 0 : index
      %c0_7 = arith.constant 0 : index
      %17 = vector.load %arg10[%c0_5, %c0_6, %c0_7] : memref<8x2x128xf32, #tpu.memory_space<vmem>>, vector<8x2x128xf32>
      %cst_8 = arith.constant 1.000000e+00 : f32
      %18 = vector.broadcast %cst_8 : f32 to vector<8x1xf32>
      %19 = arith.divf %18, %16 : vector<8x1xf32>
      %20 = vector.shape_cast %19 : vector<8x1xf32> to vector<8x1x1xf32>
      %21 = vector.broadcast %20 : vector<8x1x1xf32> to vector<8x2x128xf32>
      %22 = arith.mulf %17, %21 : vector<8x2x128xf32>
      %c0_9 = arith.constant 0 : index
      %c0_10 = arith.constant 0 : index
      %c0_11 = arith.constant 0 : index
      %23 = vector.load %arg10[%c0_9, %c0_10, %c0_11] : memref<8x2x128xf32, #tpu.memory_space<vmem>>, vector<8x2x128xf32>
      tpu.vector_store %arg10[%c0_9, %c0_10, %c0_11], %22 {strides = array<i32>} : memref<8x2x128xf32, #tpu.memory_space<vmem>>, vector<8x2x128xf32>,
    } else {
    }
    return
  }
  func.func @transform_0(%arg0: i32, %arg1: i32, %arg2: memref<1xi32, #tpu.memory_space<smem>>) -> (i32, i32, i32) {
    %c0_i32 = arith.constant 0 : i32
    %c0_i32_0 = arith.constant 0 : i32
    %c0_i32_1 = arith.constant 0 : i32
    return %c0_i32, %arg0, %c0_i32_0 : i32, i32, i32
  }
  func.func @transform_1(%arg0: i32, %arg1: i32, %arg2: memref<1xi32, #tpu.memory_space<smem>>) -> (i32, i32, i32) {
    %c0_i32 = arith.constant 0 : i32
    %c0_i32_0 = arith.constant 0 : i32
    return %arg0, %arg1, %c0_i32 : i32, i32, i32
  }
  func.func @transform_2(%arg0: i32, %arg1: i32, %arg2: memref<1xi32, #tpu.memory_space<smem>>) -> (i32, i32) {
    %c0_i32 = arith.constant 0 : i32
    %c0_i32_0 = arith.constant 0 : i32
    return %arg0, %c0_i32 : i32, i32
  }
  func.func @transform_3(%arg0: i32, %arg1: i32, %arg2: memref<1xi32, #tpu.memory_space<smem>>) -> (i32, i32) {
    %c0_i32 = arith.constant 0 : i32
    %c0_i32_0 = arith.constant 0 : i32
    %c0_i32_1 = arith.constant 0 : i32
    return %c0_i32, %c0_i32_0 : i32, i32
  }
  func.func @transform_4(%arg0: i32, %arg1: i32, %arg2: memref<1xi32, #tpu.memory_space<smem>>) -> (i32, i32) {
    %c0_i32 = arith.constant 0 : i32
    %c0_i32_0 = arith.constant 0 : i32
    %c0_i32_1 = arith.constant 0 : i32
    return %c0_i32, %c0_i32_0 : i32, i32
  }
  func.func @transform_5(%arg0: i32, %arg1: i32, %arg2: memref<1xi32, #tpu.memory_space<smem>>) -> (i32, i32) {
    %c0_i32 = arith.constant 0 : i32
    %c0_i32_0 = arith.constant 0 : i32
    %c0_i32_1 = arith.constant 0 : i32
    return %c0_i32, %c0_i32_0 : i32, i32
  }
  func.func @transform_6(%arg0: i32, %arg1: i32, %arg2: memref<1xi32, #tpu.memory_space<smem>>) -> (i32, i32) {
    %c0_i32 = arith.constant 0 : i32
    %c0_i32_0 = arith.constant 0 : i32
    %c0_i32_1 = arith.constant 0 : i32
    return %c0_i32, %c0_i32_0 : i32, i32
  }
  func.func @transform_7(%arg0: i32, %arg1: i32, %arg2: memref<1xi32, #tpu.memory_space<smem>>) -> (i32, i32, i32) {
    %c0_i32 = arith.constant 0 : i32
    %c0_i32_0 = arith.constant 0 : i32
    %c0_i32_1 = arith.constant 0 : i32
    return %arg0, %c0_i32, %c0_i32_0 : i32, i32, i32
  }
}

</mosaic_0001>

<llo_original>
// kernel: tpu_custom_call.1
$region0: #{tpu_custom_call.1}
  #allocation0 [shape = 'u32[]', space=smem, size = 0x4, offset = 0x4, fixed_abs, tag = 'smem constant byte address 0x4 - core index']
  #allocation1 [shape = 'u32[144,128]{1,0:T(1,128)}', space=vmem, size = 0x12000, scoped, tag = 'internal scratch']
  #allocation2 [shape = 'f32[8,32]{1,0:T(8,128)}', space=vmem, size = 0x1000, scoped, tag = 'scratch operand']
  #allocation3 [shape = 'f32[8,1]{1,0:T(8,128)}', space=vmem, size = 0x1000, scoped, tag = 'scratch operand']
  #allocation4 [shape = 'f32[8,1]{1,0:T(8,128)}', space=vmem, size = 0x1000, scoped, tag = 'scratch operand']
  #allocation5 [shape = 's32[1]{0}', space=sflag, size = 0x4, scoped, tag = 'scoped memory for tpu_custom_call.1']
  #allocation6 [shape = 's32[1]{0:T(128)S(6)}', space=smem, size = 0x200, scoped, tag = 'prefetched SMEM operand 0']
  %s0 = inlined_call_operand.<no memory space> [shape: s32[1], index: 0, kind: input, shape index: {}]
  %s1 = inlined_call_operand.vmem [shape: f32[3,8,32], index: 1, kind: input, shape index: {}]
  %s2 = inlined_call_operand.vmem [shape: f32[8,256,32], index: 2, kind: input, shape index: {}]
  %s3 = inlined_call_operand.vmem [shape: s32[8,1], index: 3, kind: input, shape index: {}]
  %s4 = inlined_call_operand.vmem [shape: f32[32,32], index: 4, kind: input, shape index: {}]
  %s5 = inlined_call_operand.vmem [shape: f32[32,32], index: 5, kind: input, shape index: {}]
  %s6 = inlined_call_operand.vmem [shape: f32[1,32], index: 6, kind: input, shape index: {}]
  %s7 = inlined_call_operand.vmem [shape: f32[1,32], index: 7, kind: input, shape index: {}]
  %s8 = inlined_call_operand.hbm [shape: f32[8,2,128], index: 8, kind: output, shape index: {}]
  %s9 = sld [smem:[#allocation0]]
  $region111: #{tpu_custom_call.1} parent=0
    _
  %s11 = ssub.s32 1, %s9
  %s12 = scalar_select 0, %s11, %s9
  %13 = sst [smem:[#allocation6]] %s0
  $region1: #{tpu_custom_call.1} parent=0
    #allocation7 [shape = 'u8[1048576]{0}', space=vmem, size = 0x100000, scoped, tag = 'input window, operand 2']
    #allocation8 [shape = 'u8[8192]{0}', space=vmem, size = 0x2000, scoped, tag = 'output window, operand 0, single buffered']
    #allocation9 [shape = 's32[2]{0}', space=sflag, size = 0x8, scoped, tag = 'scoped memory for tpu_custom_call.1']
    %14 = vsyncpa [#allocation9], 0
    loop: start=0, step=1, limit=4
    $region2: #{tpu_custom_call.1} parent=1 // loop_pre_header
      _
    $region3: #{tpu_custom_call.1} parent=1 // loop_header
      %s16 = sphi 0, %s20
      %p17 = scmp.ge.s32.totalorder %s16, 4
      %s23 = sphi 0, %s35
      %s24 = sphi 0, %s31
      %s25 = sphi 0, %s23
      %s26 = sphi 0, %s24
      %s27 = sphi 0, %s25
      %s28 = sphi 0, %s26
      %s38 = sphi 0, %s40
      %s41 = sphi 0, %s38
      %s42 = sphi 0, %s41
      %s58 = sphi 0, %s42
      %s66 = sphi 0, %s68
      %s69 = sphi 0, %s66
      %s70 = sphi 0, %s69
      %s86 = sphi 0, %s70
      %s92 = sphi 0, %s94
      %s95 = sphi 0, %s92
      %s96 = sphi 0, %s95
      %s112 = sphi 0, %s96
      %s116 = sphi 0, %s116
      %s118 = sphi 0, %s116
      %s119 = sphi 0, %s118
      %s133 = sphi 0, %s119
      %s137 = sphi 0, %s137
      %s139 = sphi 0, %s137
      %s140 = sphi 0, %s139
      %s154 = sphi 0, %s140
      %s158 = sphi 0, %s158
      %s160 = sphi 0, %s158
      %s161 = sphi 0, %s160
      %s175 = sphi 0, %s161
      %s179 = sphi 0, %s179
      %s181 = sphi 0, %s179
      %s182 = sphi 0, %s181
      %s196 = sphi 0, %s182
      %s202 = sphi 0, %s204
      %s205 = sphi 0, %s202
      %s206 = sphi 0, %s205
      %s222 = sphi 0, %s206
    $region4: #{tpu_custom_call.1} parent=1 // loop_header_branch
      %19 = sbr.rel (%p17) target = $region8
    $region5: #{tpu_custom_call.1} parent=1 // loop_body
      %s21 = ssub.s32 %s16, 1
      %s22 = ssub.s32 %s16, 2
      %s29 = sadd.s32 1, %s24
      %p30 = scmp.ge.s32.totalorder %s29, 2
      %s31 = scalar_select %p30, 0, %s29
      %s32 = sadd.s32 1, %s23
      %s33 = scalar_select %p30, %s32, %s23
      %p34 = scmp.ge.s32.totalorder %s33, 1
      %s35 = scalar_select %p34, 0, %s33
      %s36 = ssub.s32 %s23, %s35
      %p37 = scmp.eq.s32.totalorder %s36, 0
      %s39 = sadd.s32 %s38, 1
      %s40 = scalar_select %p37, %s38, %s39
      %p43 = pneg %p37
      %p44 = scmp.eq.s32.totalorder %s16, 1
      %p45 = por %p43, %p44
      %p46 = scmp.ne.s32.totalorder %s38, %s41
      %p47 = scmp.eq.s32.totalorder %s16, 0
      %p48 = por %p46, %p47
      %p49 = scmp.ne.s32.totalorder %s38, %s41
      %p50 = scmp.eq.s32.totalorder %s21, 1
      %p51 = por %p49, %p50
      %p52 = scmp.ne.s32.totalorder %s41, %s42
      %p53 = scmp.eq.s32.totalorder %s21, 0
      %p54 = por %p52, %p53
      %p55 = scmp.ne.s32.totalorder %s41, %s42
      %p56 = scmp.eq.s32.totalorder %s22, 1
      %p57 = por %p55, %p56
      %p59 = scmp.ne.s32.totalorder %s42, %s58
      %p60 = scmp.eq.s32.totalorder %s22, 0
      %p61 = por %p59, %p60
      %s62 = ssub.s32 %s23, %s35
      %s63 = ssub.s32 %s24, %s31
      %s64 = sor.u32 %s62, %s63
      %p65 = scmp.eq.s32.totalorder %s64, 0
      %s67 = sadd.s32 %s66, 1
      %s68 = scalar_select %p65, %s66, %s67
      %p71 = pneg %p65
      %p72 = scmp.eq.s32.totalorder %s16, 1
      %p73 = por %p71, %p72
      %p74 = scmp.ne.s32.totalorder %s66, %s69
      %p75 = scmp.eq.s32.totalorder %s16, 0
      %p76 = por %p74, %p75
      %p77 = scmp.ne.s32.totalorder %s66, %s69
      %p78 = scmp.eq.s32.totalorder %s21, 1
      %p79 = por %p77, %p78
      %p80 = scmp.ne.s32.totalorder %s69, %s70
      %p81 = scmp.eq.s32.totalorder %s21, 0
      %p82 = por %p80, %p81
      %p83 = scmp.ne.s32.totalorder %s69, %s70
      %p84 = scmp.eq.s32.totalorder %s22, 1
      %p85 = por %p83, %p84
      %p87 = scmp.ne.s32.totalorder %s70, %s86
      %p88 = scmp.eq.s32.totalorder %s22, 0
      %p89 = por %p87, %p88
      %s90 = ssub.s32 %s23, %s35
      %p91 = scmp.eq.s32.totalorder %s90, 0
      %s93 = sadd.s32 %s92, 1
      %s94 = scalar_select %p91, %s92, %s93
      %p97 = pneg %p91
      %p98 = scmp.eq.s32.totalorder %s16, 1
      %p99 = por %p97, %p98
      %p100 = scmp.ne.s32.totalorder %s92, %s95
      %p101 = scmp.eq.s32.totalorder %s16, 0
      %p102 = por %p100, %p101
      %p103 = scmp.ne.s32.totalorder %s92, %s95
      %p104 = scmp.eq.s32.totalorder %s21, 1
      %p105 = por %p103, %p104
      %p106 = scmp.ne.s32.totalorder %s95, %s96
      %p107 = scmp.eq.s32.totalorder %s21, 0
      %p108 = por %p106, %p107
      %p109 = scmp.ne.s32.totalorder %s95, %s96
      %p110 = scmp.eq.s32.totalorder %s22, 1
      %p111 = por %p109, %p110
      %p113 = scmp.ne.s32.totalorder %s96, %s112
      %p114 = scmp.eq.s32.totalorder %s22, 0
      %p115 = por %p113, %p114
      %s117 = sadd.s32 %s116, 1
      %p120 = scmp.eq.s32.totalorder %s16, 1
      %p121 = scmp.ne.s32.totalorder %s116, %s118
      %p122 = scmp.eq.s32.totalorder %s16, 0
      %p123 = por %p121, %p122
      %p124 = scmp.ne.s32.totalorder %s116, %s118
      %p125 = scmp.eq.s32.totalorder %s21, 1
      %p126 = por %p124, %p125
      %p127 = scmp.ne.s32.totalorder %s118, %s119
      %p128 = scmp.eq.s32.totalorder %s21, 0
      %p129 = por %p127, %p128
      %p130 = scmp.ne.s32.totalorder %s118, %s119
      %p131 = scmp.eq.s32.totalorder %s22, 1
      %p132 = por %p130, %p131
      %p134 = scmp.ne.s32.totalorder %s119, %s133
      %p135 = scmp.eq.s32.totalorder %s22, 0
      %p136 = por %p134, %p135
      %s138 = sadd.s32 %s137, 1
      %p141 = scmp.eq.s32.totalorder %s16, 1
      %p142 = scmp.ne.s32.totalorder %s137, %s139
      %p143 = scmp.eq.s32.totalorder %s16, 0
      %p144 = por %p142, %p143
      %p145 = scmp.ne.s32.totalorder %s137, %s139
      %p146 = scmp.eq.s32.totalorder %s21, 1
      %p147 = por %p145, %p146
      %p148 = scmp.ne.s32.totalorder %s139, %s140
      %p149 = scmp.eq.s32.totalorder %s21, 0
      %p150 = por %p148, %p149
      %p151 = scmp.ne.s32.totalorder %s139, %s140
      %p152 = scmp.eq.s32.totalorder %s22, 1
      %p153 = por %p151, %p152
      %p155 = scmp.ne.s32.totalorder %s140, %s154
      %p156 = scmp.eq.s32.totalorder %s22, 0
      %p157 = por %p155, %p156
      %s159 = sadd.s32 %s158, 1
      %p162 = scmp.eq.s32.totalorder %s16, 1
      %p163 = scmp.ne.s32.totalorder %s158, %s160
      %p164 = scmp.eq.s32.totalorder %s16, 0
      %p165 = por %p163, %p164
      %p166 = scmp.ne.s32.totalorder %s158, %s160
      %p167 = scmp.eq.s32.totalorder %s21, 1
      %p168 = por %p166, %p167
      %p169 = scmp.ne.s32.totalorder %s160, %s161
      %p170 = scmp.eq.s32.totalorder %s21, 0
      %p171 = por %p169, %p170
      %p172 = scmp.ne.s32.totalorder %s160, %s161
      %p173 = scmp.eq.s32.totalorder %s22, 1
      %p174 = por %p172, %p173
      %p176 = scmp.ne.s32.totalorder %s161, %s175
      %p177 = scmp.eq.s32.totalorder %s22, 0
      %p178 = por %p176, %p177
      %s180 = sadd.s32 %s179, 1
      %p183 = scmp.eq.s32.totalorder %s16, 1
      %p184 = scmp.ne.s32.totalorder %s179, %s181
      %p185 = scmp.eq.s32.totalorder %s16, 0
      %p186 = por %p184, %p185
      %p187 = scmp.ne.s32.totalorder %s179, %s181
      %p188 = scmp.eq.s32.totalorder %s21, 1
      %p189 = por %p187, %p188
      %p190 = scmp.ne.s32.totalorder %s181, %s182
      %p191 = scmp.eq.s32.totalorder %s21, 0
      %p192 = por %p190, %p191
      %p193 = scmp.ne.s32.totalorder %s181, %s182
      %p194 = scmp.eq.s32.totalorder %s22, 1
      %p195 = por %p193, %p194
      %p197 = scmp.ne.s32.totalorder %s182, %s196
      %p198 = scmp.eq.s32.totalorder %s22, 0
      %p199 = por %p197, %p198
      %s200 = ssub.s32 %s23, %s35
      %p201 = scmp.eq.s32.totalorder %s200, 0
      %s203 = sadd.s32 %s202, 1
      %s204 = scalar_select %p201, %s202, %s203
      %p207 = pneg %p201
      %p208 = scmp.eq.s32.totalorder %s16, 1
      %p209 = por %p207, %p208
      %p210 = scmp.ne.s32.totalorder %s202, %s205
      %p211 = scmp.eq.s32.totalorder %s16, 0
      %p212 = por %p210, %p211
      %p213 = scmp.ne.s32.totalorder %s202, %s205
      %p214 = scmp.eq.s32.totalorder %s21, 1
      %p215 = por %p213, %p214
      %p216 = scmp.ne.s32.totalorder %s205, %s206
      %p217 = scmp.eq.s32.totalorder %s21, 0
      %p218 = por %p216, %p217
      %p219 = scmp.ne.s32.totalorder %s205, %s206
      %p220 = scmp.eq.s32.totalorder %s22, 1
      %p221 = por %p219, %p220
      %p223 = scmp.ne.s32.totalorder %s206, %s222
      %p224 = scmp.eq.s32.totalorder %s22, 0
      %p225 = por %p223, %p224
      %p226 = scmp.le.s32.totalorder 1, %s16
      %p227 = scmp.lt.s32.totalorder %s16, 3
      %p228 = pnand %p226, %p227
      %p229 = pneg %p228
      // Predicated region
      $region9: #{tpu_custom_call.1} parent=5 // pred_check
        _
      $region10: #{tpu_custom_call.1} parent=5 // pred_check_branch
        %231 = sbr.rel (%p228) target = $region12
      $region11: #{tpu_custom_call.1} parent=5 // pred_region
        %s232 = ssub.s32 %s16, 1
        // Predicated region
        $region13: #{tpu_custom_call.1} parent=11 // pred_check
          %p233 = pneg %p54
        $region14: #{tpu_custom_call.1} parent=11 // pred_check_branch
          %235 = sbr.rel (%p233) target = $region16
        $region15: #{tpu_custom_call.1} parent=11 // pred_region
          %p236 = scmp.lt.s32.totalorder %s25, 0
          %s237 = scalar_select %p236, %s25, 0
          %s238 = smul.addr %s237, 8
          %s239 = scalar_lea.vmem %s1, %s238
        $region16: #{tpu_custom_call.1} parent=11 // pred_fallthru
          _
        // Predicated region
        $region17: #{tpu_custom_call.1} parent=11 // pred_check
          %p240 = pneg %p108
        $region18: #{tpu_custom_call.1} parent=11 // pred_check_branch
          %242 = sbr.rel (%p240) target = $region20
        $region19: #{tpu_custom_call.1} parent=11 // pred_region
          %p243 = scmp.lt.s32.totalorder %s25, 0
          %s244 = scalar_select %p243, %s25, 0
          %s245 = smul.addr %s244, 8
          %s246 = scalar_lea.vmem %s3, %s245
        $region20: #{tpu_custom_call.1} parent=11 // pred_fallthru
          _
        // Predicated region
        $region21: #{tpu_custom_call.1} parent=11 // pred_check
          %p247 = pneg %p129
        $region22: #{tpu_custom_call.1} parent=11 // pred_check_branch
          %249 = sbr.rel (%p247) target = $region24
        $region23: #{tpu_custom_call.1} parent=11 // pred_region
          _
        $region24: #{tpu_custom_call.1} parent=11 // pred_fallthru
          _
        // Predicated region
        $region25: #{tpu_custom_call.1} parent=11 // pred_check
          %p250 = pneg %p150
        $region26: #{tpu_custom_call.1} parent=11 // pred_check_branch
          %252 = sbr.rel (%p250) target = $region28
        $region27: #{tpu_custom_call.1} parent=11 // pred_region
          _
        $region28: #{tpu_custom_call.1} parent=11 // pred_fallthru
          _
        // Predicated region
        $region29: #{tpu_custom_call.1} parent=11 // pred_check
          %p253 = pneg %p171
        $region30: #{tpu_custom_call.1} parent=11 // pred_check_branch
          %255 = sbr.rel (%p253) target = $region32
        $region31: #{tpu_custom_call.1} parent=11 // pred_region
          _
        $region32: #{tpu_custom_call.1} parent=11 // pred_fallthru
          _
        // Predicated region
        $region33: #{tpu_custom_call.1} parent=11 // pred_check
          %p256 = pneg %p192
        $region34: #{tpu_custom_call.1} parent=11 // pred_check_branch
          %258 = sbr.rel (%p256) target = $region36
        $region35: #{tpu_custom_call.1} parent=11 // pred_region
          _
        $region36: #{tpu_custom_call.1} parent=11 // pred_fallthru
          _
      $region12: #{tpu_custom_call.1} parent=5 // pred_fallthru
        _
      %p259 = scmp.lt.s32.totalorder %s16, 2
      // Predicated region
      $region37: #{tpu_custom_call.1} parent=5 // pred_check
        %p260 = pneg %p259
      $region38: #{tpu_custom_call.1} parent=5 // pred_check_branch
        %262 = sbr.rel (%p260) target = $region40
      $region39: #{tpu_custom_call.1} parent=5 // pred_region
        // Predicated region
        $region41: #{tpu_custom_call.1} parent=39 // pred_check
          %p263 = pneg %p76
        $region42: #{tpu_custom_call.1} parent=39 // pred_check_branch
          %265 = sbr.rel (%p263) target = $region44
        $region43: #{tpu_custom_call.1} parent=39 // pred_region
          %s266 = sand.u32 %s66, 1
          %s267 = sand.u32 %s66, 1
          %s268 = smul.addr %s267, 1024
          %s269 = scalar_lea.vmem [#allocation7], %s268
          %s270 = smul.u32 8, %s23
          %s271 = smul.u32 16, %s24
          %s272 = smul.addr %s270, 32
          %s273 = sadd.s32 %s271, %s272
          %s274 = smul.addr %s273, 8
          %s275 = scalar_lea.vmem %s2, %s274
          // Predicated region
          $region45: #{tpu_custom_call.1} parent=43 // pred_check
            _
          $region46: #{tpu_custom_call.1} parent=43 // pred_check_branch
            %277 = sbr.rel (0) target = $region48
          $region47: #{tpu_custom_call.1} parent=43 // pred_region
            // Predicated region
            $region49: #{tpu_custom_call.1} parent=47 // pred_check
              _
            $region50: #{tpu_custom_call.1} parent=47 // pred_check_branch
              %279 = sbr.rel (0) target = $region52
            $region51: #{tpu_custom_call.1} parent=47 // pred_region
              // Predicated region
              $region64: #{tpu_custom_call.1} parent=51 // pred_check
                _
              $region65: #{tpu_custom_call.1} parent=51 // pred_check_branch
                %549 = sbr.rel (0) target = $region67
              $region66: #{tpu_custom_call.1} parent=51 // pred_region
                loop: start=0, step=1, limit=1
                $region68: #{tpu_custom_call.1} parent=66 // loop_pre_header
                  _
                $region69: #{tpu_custom_call.1} parent=66 // loop_header
                  %s551 = sphi 0, %s555
                  %p552 = scmp.ge.s32.totalorder %s551, 1
                  %s556 = sphi %s275, %s275
                  %s557 = sphi %s269, %s269
                $region70: #{tpu_custom_call.1} parent=66 // loop_header_branch
                  %554 = sbr.rel (%p552) target = $region74
                $region71: #{tpu_custom_call.1} parent=66 // loop_body
                  %v558 = vld [vmem:[%s556] sm:$0xff]
                  %559 = vst [vmem:[%s557] sm:$0xff] %v558
                  %v560 = vld [vmem:[%s556 + $0x8] sm:$0xff]
                  %561 = vst [vmem:[%s557 + $0x8] sm:$0xff] %v560
                  %v562 = vld [vmem:[%s556 + $0x10] sm:$0xff]
                  %563 = vst [vmem:[%s557 + $0x10] sm:$0xff] %v562
                  %v564 = vld [vmem:[%s556 + $0x18] sm:$0xff]
                  %565 = vst [vmem:[%s557 + $0x18] sm:$0xff] %v564
                  %v566 = vld [vmem:[%s556 + $0x20] sm:$0xff]
                  %567 = vst [vmem:[%s557 + $0x20] sm:$0xff] %v566
                  %v568 = vld [vmem:[%s556 + $0x28] sm:$0xff]
                  %569 = vst [vmem:[%s557 + $0x28] sm:$0xff] %v568
                  %v570 = vld [vmem:[%s556 + $0x30] sm:$0xff]
                  %571 = vst [vmem:[%s557 + $0x30] sm:$0xff] %v570
                  %v572 = vld [vmem:[%s556 + $0x38] sm:$0xff]
                  %573 = vst [vmem:[%s557 + $0x38] sm:$0xff] %v572
                  %v574 = vld [vmem:[%s556 + $0x40] sm:$0xff]
                  %575 = vst [vmem:[%s557 + $0x40] sm:$0xff] %v574
                  %v576 = vld [vmem:[%s556 + $0x48] sm:$0xff]
                  %577 = vst [vmem:[%s557 + $0x48] sm:$0xff] %v576
                  %v578 = vld [vmem:[%s556 + $0x50] sm:$0xff]
                  %579 = vst [vmem:[%s557 + $0x50] sm:$0xff] %v578
                  %v580 = vld [vmem:[%s556 + $0x58] sm:$0xff]
                  %581 = vst [vmem:[%s557 + $0x58] sm:$0xff] %v580
                  %v582 = vld [vmem:[%s556 + $0x60] sm:$0xff]
                  %583 = vst [vmem:[%s557 + $0x60] sm:$0xff] %v582
                  %v584 = vld [vmem:[%s556 + $0x68] sm:$0xff]
                  %585 = vst [vmem:[%s557 + $0x68] sm:$0xff] %v584
                  %v586 = vld [vmem:[%s556 + $0x70] sm:$0xff]
                  %587 = vst [vmem:[%s557 + $0x70] sm:$0xff] %v586
                  %v588 = vld [vmem:[%s556 + $0x78] sm:$0xff]
                  %589 = vst [vmem:[%s557 + $0x78] sm:$0xff] %v588
                  %v590 = vld [vmem:[%s556 + $0x100] sm:$0xff]
                  %591 = vst [vmem:[%s557 + $0x80] sm:$0xff] %v590
                  %v592 = vld [vmem:[%s556 + $0x108] sm:$0xff]
                  %593 = vst [vmem:[%s557 + $0x88] sm:$0xff] %v592
                  %v594 = vld [vmem:[%s556 + $0x110] sm:$0xff]
                  %595 = vst [vmem:[%s557 + $0x90] sm:$0xff] %v594
                  %v596 = vld [vmem:[%s556 + $0x118] sm:$0xff]
                  %597 = vst [vmem:[%s557 + $0x98] sm:$0xff] %v596
                  %v598 = vld [vmem:[%s556 + $0x120] sm:$0xff]
                  %599 = vst [vmem:[%s557 + $0xa0] sm:$0xff] %v598
                  %v600 = vld [vmem:[%s556 + $0x128] sm:$0xff]
                  %601 = vst [vmem:[%s557 + $0xa8] sm:$0xff] %v600
                  %v602 = vld [vmem:[%s556 + $0x130] sm:$0xff]
                  %603 = vst [vmem:[%s557 + $0xb0] sm:$0xff] %v602
                  %v604 = vld [vmem:[%s556 + $0x138] sm:$0xff]
                  %605 = vst [vmem:[%s557 + $0xb8] sm:$0xff] %v604
                  %v606 = vld [vmem:[%s556 + $0x140] sm:$0xff]
                  %607 = vst [vmem:[%s557 + $0xc0] sm:$0xff] %v606
                  %v608 = vld [vmem:[%s556 + $0x148] sm:$0xff]
                  %609 = vst [vmem:[%s557 + $0xc8] sm:$0xff] %v608
                  %v610 = vld [vmem:[%s556 + $0x150] sm:$0xff]
                  %611 = vst [vmem:[%s557 + $0xd0] sm:$0xff] %v610
                  %v612 = vld [vmem:[%s556 + $0x158] sm:$0xff]
                  %613 = vst [vmem:[%s557 + $0xd8] sm:$0xff] %v612
                  %v614 = vld [vmem:[%s556 + $0x160] sm:$0xff]
                  %615 = vst [vmem:[%s557 + $0xe0] sm:$0xff] %v614
                  %v616 = vld [vmem:[%s556 + $0x168] sm:$0xff]
                  %617 = vst [vmem:[%s557 + $0xe8] sm:$0xff] %v616
                  %v618 = vld [vmem:[%s556 + $0x170] sm:$0xff]
                  %619 = vst [vmem:[%s557 + $0xf0] sm:$0xff] %v618
                  %v620 = vld [vmem:[%s556 + $0x178] sm:$0xff]
                  %621 = vst [vmem:[%s557 + $0xf8] sm:$0xff] %v620
                  %v622 = vld [vmem:[%s556 + $0x200] sm:$0xff]
                  %623 = vst [vmem:[%s557 + $0x100] sm:$0xff] %v622
                  %v624 = vld [vmem:[%s556 + $0x208] sm:$0xff]
                  %625 = vst [vmem:[%s557 + $0x108] sm:$0xff] %v624
                  %v626 = vld [vmem:[%s556 + $0x210] sm:$0xff]
                  %627 = vst [vmem:[%s557 + $0x110] sm:$0xff] %v626
                  %v628 = vld [vmem:[%s556 + $0x218] sm:$0xff]
                  %629 = vst [vmem:[%s557 + $0x118] sm:$0xff] %v628
                  %v630 = vld [vmem:[%s556 + $0x220] sm:$0xff]
                  %631 = vst [vmem:[%s557 + $0x120] sm:$0xff] %v630
                  %v632 = vld [vmem:[%s556 + $0x228] sm:$0xff]
                  %633 = vst [vmem:[%s557 + $0x128] sm:$0xff] %v632
                  %v634 = vld [vmem:[%s556 + $0x230] sm:$0xff]
                  %635 = vst [vmem:[%s557 + $0x130] sm:$0xff] %v634
                  %v636 = vld [vmem:[%s556 + $0x238] sm:$0xff]
                  %637 = vst [vmem:[%s557 + $0x138] sm:$0xff] %v636
                  %v638 = vld [vmem:[%s556 + $0x240] sm:$0xff]
                  %639 = vst [vmem:[%s557 + $0x140] sm:$0xff] %v638
                  %v640 = vld [vmem:[%s556 + $0x248] sm:$0xff]
                  %641 = vst [vmem:[%s557 + $0x148] sm:$0xff] %v640
                  %v642 = vld [vmem:[%s556 + $0x250] sm:$0xff]
                  %643 = vst [vmem:[%s557 + $0x150] sm:$0xff] %v642
                  %v644 = vld [vmem:[%s556 + $0x258] sm:$0xff]
                  %645 = vst [vmem:[%s557 + $0x158] sm:$0xff] %v644
                  %v646 = vld [vmem:[%s556 + $0x260] sm:$0xff]
                  %647 = vst [vmem:[%s557 + $0x160] sm:$0xff] %v646
                  %v648 = vld [vmem:[%s556 + $0x268] sm:$0xff]
                  %649 = vst [vmem:[%s557 + $0x168] sm:$0xff] %v648
                  %v650 = vld [vmem:[%s556 + $0x270] sm:$0xff]
                  %651 = vst [vmem:[%s557 + $0x170] sm:$0xff] %v650
                  %v652 = vld [vmem:[%s556 + $0x278] sm:$0xff]
                  %653 = vst [vmem:[%s557 + $0x178] sm:$0xff] %v652
                  %v654 = vld [vmem:[%s556 + $0x300] sm:$0xff]
                  %655 = vst [vmem:[%s557 + $0x180] sm:$0xff] %v654
                  %v656 = vld [vmem:[%s556 + $0x308] sm:$0xff]
                  %657 = vst [vmem:[%s557 + $0x188] sm:$0xff] %v656
                  %v658 = vld [vmem:[%s556 + $0x310] sm:$0xff]
                  %659 = vst [vmem:[%s557 + $0x190] sm:$0xff] %v658
                  %v660 = vld [vmem:[%s556 + $0x318] sm:$0xff]
                  %661 = vst [vmem:[%s557 + $0x198] sm:$0xff] %v660
                  %v662 = vld [vmem:[%s556 + $0x320] sm:$0xff]
                  %663 = vst [vmem:[%s557 + $0x1a0] sm:$0xff] %v662
                  %v664 = vld [vmem:[%s556 + $0x328] sm:$0xff]
                  %665 = vst [vmem:[%s557 + $0x1a8] sm:$0xff] %v664
                  %v666 = vld [vmem:[%s556 + $0x330] sm:$0xff]
                  %667 = vst [vmem:[%s557 + $0x1b0] sm:$0xff] %v666
                  %v668 = vld [vmem:[%s556 + $0x338] sm:$0xff]
                  %669 = vst [vmem:[%s557 + $0x1b8] sm:$0xff] %v668
                  %v670 = vld [vmem:[%s556 + $0x340] sm:$0xff]
                  %671 = vst [vmem:[%s557 + $0x1c0] sm:$0xff] %v670
                  %v672 = vld [vmem:[%s556 + $0x348] sm:$0xff]
                  %673 = vst [vmem:[%s557 + $0x1c8] sm:$0xff] %v672
                  %v674 = vld [vmem:[%s556 + $0x350] sm:$0xff]
                  %675 = vst [vmem:[%s557 + $0x1d0] sm:$0xff] %v674
                  %v676 = vld [vmem:[%s556 + $0x358] sm:$0xff]
                  %677 = vst [vmem:[%s557 + $0x1d8] sm:$0xff] %v676
                  %v678 = vld [vmem:[%s556 + $0x360] sm:$0xff]
                  %679 = vst [vmem:[%s557 + $0x1e0] sm:$0xff] %v678
                  %v680 = vld [vmem:[%s556 + $0x368] sm:$0xff]
                  %681 = vst [vmem:[%s557 + $0x1e8] sm:$0xff] %v680
                  %v682 = vld [vmem:[%s556 + $0x370] sm:$0xff]
                  %683 = vst [vmem:[%s557 + $0x1f0] sm:$0xff] %v682
                  %v684 = vld [vmem:[%s556 + $0x378] sm:$0xff]
                  %685 = vst [vmem:[%s557 + $0x1f8] sm:$0xff] %v684
                  %v686 = vld [vmem:[%s556 + $0x400] sm:$0xff]
                  %687 = vst [vmem:[%s557 + $0x200] sm:$0xff] %v686
                  %v688 = vld [vmem:[%s556 + $0x408] sm:$0xff]
                  %689 = vst [vmem:[%s557 + $0x208] sm:$0xff] %v688
                  %v690 = vld [vmem:[%s556 + $0x410] sm:$0xff]
                  %691 = vst [vmem:[%s557 + $0x210] sm:$0xff] %v690
                  %v692 = vld [vmem:[%s556 + $0x418] sm:$0xff]
                  %693 = vst [vmem:[%s557 + $0x218] sm:$0xff] %v692
                  %v694 = vld [vmem:[%s556 + $0x420] sm:$0xff]
                  %695 = vst [vmem:[%s557 + $0x220] sm:$0xff] %v694
                  %v696 = vld [vmem:[%s556 + $0x428] sm:$0xff]
                  %697 = vst [vmem:[%s557 + $0x228] sm:$0xff] %v696
                  %v698 = vld [vmem:[%s556 + $0x430] sm:$0xff]
                  %699 = vst [vmem:[%s557 + $0x230] sm:$0xff] %v698
                  %v700 = vld [vmem:[%s556 + $0x438] sm:$0xff]
                  %701 = vst [vmem:[%s557 + $0x238] sm:$0xff] %v700
                  %v702 = vld [vmem:[%s556 + $0x440] sm:$0xff]
                  %703 = vst [vmem:[%s557 + $0x240] sm:$0xff] %v702
                  %v704 = vld [vmem:[%s556 + $0x448] sm:$0xff]
                  %705 = vst [vmem:[%s557 + $0x248] sm:$0xff] %v704
                  %v706 = vld [vmem:[%s556 + $0x450] sm:$0xff]
                  %707 = vst [vmem:[%s557 + $0x250] sm:$0xff] %v706
                  %v708 = vld [vmem:[%s556 + $0x458] sm:$0xff]
                  %709 = vst [vmem:[%s557 + $0x258] sm:$0xff] %v708
                  %v710 = vld [vmem:[%s556 + $0x460] sm:$0xff]
                  %711 = vst [vmem:[%s557 + $0x260] sm:$0xff] %v710
                  %v712 = vld [vmem:[%s556 + $0x468] sm:$0xff]
                  %713 = vst [vmem:[%s557 + $0x268] sm:$0xff] %v712
                  %v714 = vld [vmem:[%s556 + $0x470] sm:$0xff]
                  %715 = vst [vmem:[%s557 + $0x270] sm:$0xff] %v714
                  %v716 = vld [vmem:[%s556 + $0x478] sm:$0xff]
                  %717 = vst [vmem:[%s557 + $0x278] sm:$0xff] %v716
                  %v718 = vld [vmem:[%s556 + $0x500] sm:$0xff]
                  %719 = vst [vmem:[%s557 + $0x280] sm:$0xff] %v718
                  %v720 = vld [vmem:[%s556 + $0x508] sm:$0xff]
                  %721 = vst [vmem:[%s557 + $0x288] sm:$0xff] %v720
                  %v722 = vld [vmem:[%s556 + $0x510] sm:$0xff]
                  %723 = vst [vmem:[%s557 + $0x290] sm:$0xff] %v722
                  %v724 = vld [vmem:[%s556 + $0x518] sm:$0xff]
                  %725 = vst [vmem:[%s557 + $0x298] sm:$0xff] %v724
                  %v726 = vld [vmem:[%s556 + $0x520] sm:$0xff]
                  %727 = vst [vmem:[%s557 + $0x2a0] sm:$0xff] %v726
                  %v728 = vld [vmem:[%s556 + $0x528] sm:$0xff]
                  %729 = vst [vmem:[%s557 + $0x2a8] sm:$0xff] %v728
                  %v730 = vld [vmem:[%s556 + $0x530] sm:$0xff]
                  %731 = vst [vmem:[%s557 + $0x2b0] sm:$0xff] %v730
                  %v732 = vld [vmem:[%s556 + $0x538] sm:$0xff]
                  %733 = vst [vmem:[%s557 + $0x2b8] sm:$0xff] %v732
                  %v734 = vld [vmem:[%s556 + $0x540] sm:$0xff]
                  %735 = vst [vmem:[%s557 + $0x2c0] sm:$0xff] %v734
                  %v736 = vld [vmem:[%s556 + $0x548] sm:$0xff]
                  %737 = vst [vmem:[%s557 + $0x2c8] sm:$0xff] %v736
                  %v738 = vld [vmem:[%s556 + $0x550] sm:$0xff]
                  %739 = vst [vmem:[%s557 + $0x2d0] sm:$0xff] %v738
                  %v740 = vld [vmem:[%s556 + $0x558] sm:$0xff]
                  %741 = vst [vmem:[%s557 + $0x2d8] sm:$0xff] %v740
                  %v742 = vld [vmem:[%s556 + $0x560] sm:$0xff]
                  %743 = vst [vmem:[%s557 + $0x2e0] sm:$0xff] %v742
                  %v744 = vld [vmem:[%s556 + $0x568] sm:$0xff]
                  %745 = vst [vmem:[%s557 + $0x2e8] sm:$0xff] %v744
                  %v746 = vld [vmem:[%s556 + $0x570] sm:$0xff]
                  %747 = vst [vmem:[%s557 + $0x2f0] sm:$0xff] %v746
                  %v748 = vld [vmem:[%s556 + $0x578] sm:$0xff]
                  %749 = vst [vmem:[%s557 + $0x2f8] sm:$0xff] %v748
                  %v750 = vld [vmem:[%s556 + $0x600] sm:$0xff]
                  %751 = vst [vmem:[%s557 + $0x300] sm:$0xff] %v750
                  %v752 = vld [vmem:[%s556 + $0x608] sm:$0xff]
                  %753 = vst [vmem:[%s557 + $0x308] sm:$0xff] %v752
                  %v754 = vld [vmem:[%s556 + $0x610] sm:$0xff]
                  %755 = vst [vmem:[%s557 + $0x310] sm:$0xff] %v754
                  %v756 = vld [vmem:[%s556 + $0x618] sm:$0xff]
                  %757 = vst [vmem:[%s557 + $0x318] sm:$0xff] %v756
                  %v758 = vld [vmem:[%s556 + $0x620] sm:$0xff]
                  %759 = vst [vmem:[%s557 + $0x320] sm:$0xff] %v758
                  %v760 = vld [vmem:[%s556 + $0x628] sm:$0xff]
                  %761 = vst [vmem:[%s557 + $0x328] sm:$0xff] %v760
                  %v762 = vld [vmem:[%s556 + $0x630] sm:$0xff]
                  %763 = vst [vmem:[%s557 + $0x330] sm:$0xff] %v762
                  %v764 = vld [vmem:[%s556 + $0x638] sm:$0xff]
                  %765 = vst [vmem:[%s557 + $0x338] sm:$0xff] %v764
                  %v766 = vld [vmem:[%s556 + $0x640] sm:$0xff]
                  %767 = vst [vmem:[%s557 + $0x340] sm:$0xff] %v766
                  %v768 = vld [vmem:[%s556 + $0x648] sm:$0xff]
                  %769 = vst [vmem:[%s557 + $0x348] sm:$0xff] %v768
                  %v770 = vld [vmem:[%s556 + $0x650] sm:$0xff]
                  %771 = vst [vmem:[%s557 + $0x350] sm:$0xff] %v770
                  %v772 = vld [vmem:[%s556 + $0x658] sm:$0xff]
                  %773 = vst [vmem:[%s557 + $0x358] sm:$0xff] %v772
                  %v774 = vld [vmem:[%s556 + $0x660] sm:$0xff]
                  %775 = vst [vmem:[%s557 + $0x360] sm:$0xff] %v774
                  %v776 = vld [vmem:[%s556 + $0x668] sm:$0xff]
                  %777 = vst [vmem:[%s557 + $0x368] sm:$0xff] %v776
                  %v778 = vld [vmem:[%s556 + $0x670] sm:$0xff]
                  %779 = vst [vmem:[%s557 + $0x370] sm:$0xff] %v778
                  %v780 = vld [vmem:[%s556 + $0x678] sm:$0xff]
                  %781 = vst [vmem:[%s557 + $0x378] sm:$0xff] %v780
                  %v782 = vld [vmem:[%s556 + $0x700] sm:$0xff]
                  %783 = vst [vmem:[%s557 + $0x380] sm:$0xff] %v782
                  %v784 = vld [vmem:[%s556 + $0x708] sm:$0xff]
                  %785 = vst [vmem:[%s557 + $0x388] sm:$0xff] %v784
                  %v786 = vld [vmem:[%s556 + $0x710] sm:$0xff]
                  %787 = vst [vmem:[%s557 + $0x390] sm:$0xff] %v786
                  %v788 = vld [vmem:[%s556 + $0x718] sm:$0xff]
                  %789 = vst [vmem:[%s557 + $0x398] sm:$0xff] %v788
                  %v790 = vld [vmem:[%s556 + $0x720] sm:$0xff]
                  %791 = vst [vmem:[%s557 + $0x3a0] sm:$0xff] %v790
                  %v792 = vld [vmem:[%s556 + $0x728] sm:$0xff]
                  %793 = vst [vmem:[%s557 + $0x3a8] sm:$0xff] %v792
                  %v794 = vld [vmem:[%s556 + $0x730] sm:$0xff]
                  %795 = vst [vmem:[%s557 + $0x3b0] sm:$0xff] %v794
                  %v796 = vld [vmem:[%s556 + $0x738] sm:$0xff]
                  %797 = vst [vmem:[%s557 + $0x3b8] sm:$0xff] %v796
                  %v798 = vld [vmem:[%s556 + $0x740] sm:$0xff]
                  %799 = vst [vmem:[%s557 + $0x3c0] sm:$0xff] %v798
                  %v800 = vld [vmem:[%s556 + $0x748] sm:$0xff]
                  %801 = vst [vmem:[%s557 + $0x3c8] sm:$0xff] %v800
                  %v802 = vld [vmem:[%s556 + $0x750] sm:$0xff]
                  %803 = vst [vmem:[%s557 + $0x3d0] sm:$0xff] %v802
                  %v804 = vld [vmem:[%s556 + $0x758] sm:$0xff]
                  %805 = vst [vmem:[%s557 + $0x3d8] sm:$0xff] %v804
                  %v806 = vld [vmem:[%s556 + $0x760] sm:$0xff]
                  %807 = vst [vmem:[%s557 + $0x3e0] sm:$0xff] %v806
                  %v808 = vld [vmem:[%s556 + $0x768] sm:$0xff]
                  %809 = vst [vmem:[%s557 + $0x3e8] sm:$0xff] %v808
                  %v810 = vld [vmem:[%s556 + $0x770] sm:$0xff]
                  %811 = vst [vmem:[%s557 + $0x3f0] sm:$0xff] %v810
                  %v812 = vld [vmem:[%s556 + $0x778] sm:$0xff]
                  %813 = vst [vmem:[%s557 + $0x3f8] sm:$0xff] %v812
                $region72: #{tpu_custom_call.1} parent=66 // loop_footer
                  %s555 = sadd.s32 1, %s551
                $region73: #{tpu_custom_call.1} parent=66 // loop_footer_branch
                  %550 = sbr.rel target = $region69
                $region74: #{tpu_custom_call.1} parent=66 // loop_exit
                  _
              $region67: #{tpu_custom_call.1} parent=51 // pred_fallthru
                _
              // Predicated region
              $region75: #{tpu_custom_call.1} parent=51 // pred_check
                _
              $region76: #{tpu_custom_call.1} parent=51 // pred_check_branch
                %815 = sbr.rel target = $region78
              $region77: #{tpu_custom_call.1} parent=51 // pred_region
                _
              $region78: #{tpu_custom_call.1} parent=51 // pred_fallthru
                _
            $region52: #{tpu_custom_call.1} parent=47 // pred_fallthru
              _
            // Predicated region
            $region53: #{tpu_custom_call.1} parent=47 // pred_check
              _
            $region54: #{tpu_custom_call.1} parent=47 // pred_check_branch
              %281 = sbr.rel target = $region56
            $region55: #{tpu_custom_call.1} parent=47 // pred_region
              %s283 = ssub.s32 256, 1
              loop: start=0, step=1, limit=1
              $region57: #{tpu_custom_call.1} parent=55 // loop_pre_header
                _
              $region58: #{tpu_custom_call.1} parent=55 // loop_header
                %s285 = sphi 0, %s289
                %p286 = scmp.ge.s32.totalorder %s285, 1
                %s290 = sphi %s275, %s275
                %s291 = sphi %s269, %s269
              $region59: #{tpu_custom_call.1} parent=55 // loop_header_branch
                %288 = sbr.rel (%p286) target = $region63
              $region60: #{tpu_custom_call.1} parent=55 // loop_body
                %v292 = vld [vmem:[%s290] sm:%s283]
                %293 = vst [vmem:[%s291] sm:%s283] %v292
                %v294 = vld [vmem:[%s290 + $0x8] sm:%s283]
                %295 = vst [vmem:[%s291 + $0x8] sm:%s283] %v294
                %v296 = vld [vmem:[%s290 + $0x10] sm:%s283]
                %297 = vst [vmem:[%s291 + $0x10] sm:%s283] %v296
                %v298 = vld [vmem:[%s290 + $0x18] sm:%s283]
                %299 = vst [vmem:[%s291 + $0x18] sm:%s283] %v298
                %v300 = vld [vmem:[%s290 + $0x20] sm:%s283]
                %301 = vst [vmem:[%s291 + $0x20] sm:%s283] %v300
                %v302 = vld [vmem:[%s290 + $0x28] sm:%s283]
                %303 = vst [vmem:[%s291 + $0x28] sm:%s283] %v302
                %v304 = vld [vmem:[%s290 + $0x30] sm:%s283]
                %305 = vst [vmem:[%s291 + $0x30] sm:%s283] %v304
                %v306 = vld [vmem:[%s290 + $0x38] sm:%s283]
                %307 = vst [vmem:[%s291 + $0x38] sm:%s283] %v306
                %v308 = vld [vmem:[%s290 + $0x40] sm:%s283]
                %309 = vst [vmem:[%s291 + $0x40] sm:%s283] %v308
                %v310 = vld [vmem:[%s290 + $0x48] sm:%s283]
                %311 = vst [vmem:[%s291 + $0x48] sm:%s283] %v310
                %v312 = vld [vmem:[%s290 + $0x50] sm:%s283]
                %313 = vst [vmem:[%s291 + $0x50] sm:%s283] %v312
                %v314 = vld [vmem:[%s290 + $0x58] sm:%s283]
                %315 = vst [vmem:[%s291 + $0x58] sm:%s283] %v314
                %v316 = vld [vmem:[%s290 + $0x60] sm:%s283]
                %317 = vst [vmem:[%s291 + $0x60] sm:%s283] %v316
                %v318 = vld [vmem:[%s290 + $0x68] sm:%s283]
                %319 = vst [vmem:[%s291 + $0x68] sm:%s283] %v318
                %v320 = vld [vmem:[%s290 + $0x70] sm:%s283]
                %321 = vst [vmem:[%s291 + $0x70] sm:%s283] %v320
                %v322 = vld [vmem:[%s290 + $0x78] sm:%s283]
                %323 = vst [vmem:[%s291 + $0x78] sm:%s283] %v322
                %v324 = vld [vmem:[%s290 + $0x100] sm:%s283]
                %325 = vst [vmem:[%s291 + $0x80] sm:%s283] %v324
                %v326 = vld [vmem:[%s290 + $0x108] sm:%s283]
                %327 = vst [vmem:[%s291 + $0x88] sm:%s283] %v326
                %v328 = vld [vmem:[%s290 + $0x110] sm:%s283]
                %329 = vst [vmem:[%s291 + $0x90] sm:%s283] %v328
                %v330 = vld [vmem:[%s290 + $0x118] sm:%s283]
                %331 = vst [vmem:[%s291 + $0x98] sm:%s283] %v330
                %v332 = vld [vmem:[%s290 + $0x120] sm:%s283]
                %333 = vst [vmem:[%s291 + $0xa0] sm:%s283] %v332
                %v334 = vld [vmem:[%s290 + $0x128] sm:%s283]
                %335 = vst [vmem:[%s291 + $0xa8] sm:%s283] %v334
                %v336 = vld [vmem:[%s290 + $0x130] sm:%s283]
                %337 = vst [vmem:[%s291 + $0xb0] sm:%s283] %v336
                %v338 = vld [vmem:[%s290 + $0x138] sm:%s283]
                %339 = vst [vmem:[%s291 + $0xb8] sm:%s283] %v338
                %v340 = vld [vmem:[%s290 + $0x140] sm:%s283]
                %341 = vst [vmem:[%s291 + $0xc0] sm:%s283] %v340
                %v342 = vld [vmem:[%s290 + $0x148] sm:%s283]
                %343 = vst [vmem:[%s291 + $0xc8] sm:%s283] %v342
                %v344 = vld [vmem:[%s290 + $0x150] sm:%s283]
                %345 = vst [vmem:[%s291 + $0xd0] sm:%s283] %v344
                %v346 = vld [vmem:[%s290 + $0x158] sm:%s283]
                %347 = vst [vmem:[%s291 + $0xd8] sm:%s283] %v346
                %v348 = vld [vmem:[%s290 + $0x160] sm:%s283]
                %349 = vst [vmem:[%s291 + $0xe0] sm:%s283] %v348
                %v350 = vld [vmem:[%s290 + $0x168] sm:%s283]
                %351 = vst [vmem:[%s291 + $0xe8] sm:%s283] %v350
                %v352 = vld [vmem:[%s290 + $0x170] sm:%s283]
                %353 = vst [vmem:[%s291 + $0xf0] sm:%s283] %v352
                %v354 = vld [vmem:[%s290 + $0x178] sm:%s283]
                %355 = vst [vmem:[%s291 + $0xf8] sm:%s283] %v354
                %v356 = vld [vmem:[%s290 + $0x200] sm:%s283]
                %357 = vst [vmem:[%s291 + $0x100] sm:%s283] %v356
                %v358 = vld [vmem:[%s290 + $0x208] sm:%s283]
                %359 = vst [vmem:[%s291 + $0x108] sm:%s283] %v358
                %v360 = vld [vmem:[%s290 + $0x210] sm:%s283]
                %361 = vst [vmem:[%s291 + $0x110] sm:%s283] %v360
                %v362 = vld [vmem:[%s290 + $0x218] sm:%s283]
                %363 = vst [vmem:[%s291 + $0x118] sm:%s283] %v362
                %v364 = vld [vmem:[%s290 + $0x220] sm:%s283]
                %365 = vst [vmem:[%s291 + $0x120] sm:%s283] %v364
                %v366 = vld [vmem:[%s290 + $0x228] sm:%s283]
                %367 = vst [vmem:[%s291 + $0x128] sm:%s283] %v366
                %v368 = vld [vmem:[%s290 + $0x230] sm:%s283]
                %369 = vst [vmem:[%s291 + $0x130] sm:%s283] %v368
                %v370 = vld [vmem:[%s290 + $0x238] sm:%s283]
                %371 = vst [vmem:[%s291 + $0x138] sm:%s283] %v370
                %v372 = vld [vmem:[%s290 + $0x240] sm:%s283]
                %373 = vst [vmem:[%s291 + $0x140] sm:%s283] %v372
                %v374 = vld [vmem:[%s290 + $0x248] sm:%s283]
                %375 = vst [vmem:[%s291 + $0x148] sm:%s283] %v374
                %v376 = vld [vmem:[%s290 + $0x250] sm:%s283]
                %377 = vst [vmem:[%s291 + $0x150] sm:%s283] %v376
                %v378 = vld [vmem:[%s290 + $0x258] sm:%s283]
                %379 = vst [vmem:[%s291 + $0x158] sm:%s283] %v378
                %v380 = vld [vmem:[%s290 + $0x260] sm:%s283]
                %381 = vst [vmem:[%s291 + $0x160] sm:%s283] %v380
                %v382 = vld [vmem:[%s290 + $0x268] sm:%s283]
                %383 = vst [vmem:[%s291 + $0x168] sm:%s283] %v382
                %v384 = vld [vmem:[%s290 + $0x270] sm:%s283]
                %385 = vst [vmem:[%s291 + $0x170] sm:%s283] %v384
                %v386 = vld [vmem:[%s290 + $0x278] sm:%s283]
                %387 = vst [vmem:[%s291 + $0x178] sm:%s283] %v386
                %v388 = vld [vmem:[%s290 + $0x300] sm:%s283]
                %389 = vst [vmem:[%s291 + $0x180] sm:%s283] %v388
                %v390 = vld [vmem:[%s290 + $0x308] sm:%s283]
                %391 = vst [vmem:[%s291 + $0x188] sm:%s283] %v390
                %v392 = vld [vmem:[%s290 + $0x310] sm:%s283]
                %393 = vst [vmem:[%s291 + $0x190] sm:%s283] %v392
                %v394 = vld [vmem:[%s290 + $0x318] sm:%s283]
                %395 = vst [vmem:[%s291 + $0x198] sm:%s283] %v394
                %v396 = vld [vmem:[%s290 + $0x320] sm:%s283]
                %397 = vst [vmem:[%s291 + $0x1a0] sm:%s283] %v396
                %v398 = vld [vmem:[%s290 + $0x328] sm:%s283]
                %399 = vst [vmem:[%s291 + $0x1a8] sm:%s283] %v398
                %v400 = vld [vmem:[%s290 + $0x330] sm:%s283]
                %401 = vst [vmem:[%s291 + $0x1b0] sm:%s283] %v400
                %v402 = vld [vmem:[%s290 + $0x338] sm:%s283]
                %403 = vst [vmem:[%s291 + $0x1b8] sm:%s283] %v402
                %v404 = vld [vmem:[%s290 + $0x340] sm:%s283]
                %405 = vst [vmem:[%s291 + $0x1c0] sm:%s283] %v404
                %v406 = vld [vmem:[%s290 + $0x348] sm:%s283]
                %407 = vst [vmem:[%s291 + $0x1c8] sm:%s283] %v406
                %v408 = vld [vmem:[%s290 + $0x350] sm:%s283]
                %409 = vst [vmem:[%s291 + $0x1d0] sm:%s283] %v408
                %v410 = vld [vmem:[%s290 + $0x358] sm:%s283]
                %411 = vst [vmem:[%s291 + $0x1d8] sm:%s283] %v410
                %v412 = vld [vmem:[%s290 + $0x360] sm:%s283]
                %413 = vst [vmem:[%s291 + $0x1e0] sm:%s283] %v412
                %v414 = vld [vmem:[%s290 + $0x368] sm:%s283]
                %415 = vst [vmem:[%s291 + $0x1e8] sm:%s283] %v414
                %v416 = vld [vmem:[%s290 + $0x370] sm:%s283]
                %417 = vst [vmem:[%s291 + $0x1f0] sm:%s283] %v416
                %v418 = vld [vmem:[%s290 + $0x378] sm:%s283]
                %419 = vst [vmem:[%s291 + $0x1f8] sm:%s283] %v418
                %v420 = vld [vmem:[%s290 + $0x400] sm:%s283]
                %421 = vst [vmem:[%s291 + $0x200] sm:%s283] %v420
                %v422 = vld [vmem:[%s290 + $0x408] sm:%s283]
                %423 = vst [vmem:[%s291 + $0x208] sm:%s283] %v422
                %v424 = vld [vmem:[%s290 + $0x410] sm:%s283]
                %425 = vst [vmem:[%s291 + $0x210] sm:%s283] %v424
                %v426 = vld [vmem:[%s290 + $0x418] sm:%s283]
                %427 = vst [vmem:[%s291 + $0x218] sm:%s283] %v426
                %v428 = vld [vmem:[%s290 + $0x420] sm:%s283]
                %429 = vst [vmem:[%s291 + $0x220] sm:%s283] %v428
                %v430 = vld [vmem:[%s290 + $0x428] sm:%s283]
                %431 = vst [vmem:[%s291 + $0x228] sm:%s283] %v430
                %v432 = vld [vmem:[%s290 + $0x430] sm:%s283]
                %433 = vst [vmem:[%s291 + $0x230] sm:%s283] %v432
                %v434 = vld [vmem:[%s290 + $0x438] sm:%s283]
                %435 = vst [vmem:[%s291 + $0x238] sm:%s283] %v434
                %v436 = vld [vmem:[%s290 + $0x440] sm:%s283]
                %437 = vst [vmem:[%s291 + $0x240] sm:%s283] %v436
                %v438 = vld [vmem:[%s290 + $0x448] sm:%s283]
                %439 = vst [vmem:[%s291 + $0x248] sm:%s283] %v438
                %v440 = vld [vmem:[%s290 + $0x450] sm:%s283]
                %441 = vst [vmem:[%s291 + $0x250] sm:%s283] %v440
                %v442 = vld [vmem:[%s290 + $0x458] sm:%s283]
                %443 = vst [vmem:[%s291 + $0x258] sm:%s283] %v442
                %v444 = vld [vmem:[%s290 + $0x460] sm:%s283]
                %445 = vst [vmem:[%s291 + $0x260] sm:%s283] %v444
                %v446 = vld [vmem:[%s290 + $0x468] sm:%s283]
                %447 = vst [vmem:[%s291 + $0x268] sm:%s283] %v446
                %v448 = vld [vmem:[%s290 + $0x470] sm:%s283]
                %449 = vst [vmem:[%s291 + $0x270] sm:%s283] %v448
                %v450 = vld [vmem:[%s290 + $0x478] sm:%s283]
                %451 = vst [vmem:[%s291 + $0x278] sm:%s283] %v450
                %v452 = vld [vmem:[%s290 + $0x500] sm:%s283]
                %453 = vst [vmem:[%s291 + $0x280] sm:%s283] %v452
                %v454 = vld [vmem:[%s290 + $0x508] sm:%s283]
                %455 = vst [vmem:[%s291 + $0x288] sm:%s283] %v454
                %v456 = vld [vmem:[%s290 + $0x510] sm:%s283]
                %457 = vst [vmem:[%s291 + $0x290] sm:%s283] %v456
                %v458 = vld [vmem:[%s290 + $0x518] sm:%s283]
                %459 = vst [vmem:[%s291 + $0x298] sm:%s283] %v458
                %v460 = vld [vmem:[%s290 + $0x520] sm:%s283]
                %461 = vst [vmem:[%s291 + $0x2a0] sm:%s283] %v460
                %v462 = vld [vmem:[%s290 + $0x528] sm:%s283]
                %463 = vst [vmem:[%s291 + $0x2a8] sm:%s283] %v462
                %v464 = vld [vmem:[%s290 + $0x530] sm:%s283]
                %465 = vst [vmem:[%s291 + $0x2b0] sm:%s283] %v464
                %v466 = vld [vmem:[%s290 + $0x538] sm:%s283]
                %467 = vst [vmem:[%s291 + $0x2b8] sm:%s283] %v466
                %v468 = vld [vmem:[%s290 + $0x540] sm:%s283]
                %469 = vst [vmem:[%s291 + $0x2c0] sm:%s283] %v468
                %v470 = vld [vmem:[%s290 + $0x548] sm:%s283]
                %471 = vst [vmem:[%s291 + $0x2c8] sm:%s283] %v470
                %v472 = vld [vmem:[%s290 + $0x550] sm:%s283]
                %473 = vst [vmem:[%s291 + $0x2d0] sm:%s283] %v472
                %v474 = vld [vmem:[%s290 + $0x558] sm:%s283]
                %475 = vst [vmem:[%s291 + $0x2d8] sm:%s283] %v474
                %v476 = vld [vmem:[%s290 + $0x560] sm:%s283]
                %477 = vst [vmem:[%s291 + $0x2e0] sm:%s283] %v476
                %v478 = vld [vmem:[%s290 + $0x568] sm:%s283]
                %479 = vst [vmem:[%s291 + $0x2e8] sm:%s283] %v478
                %v480 = vld [vmem:[%s290 + $0x570] sm:%s283]
                %481 = vst [vmem:[%s291 + $0x2f0] sm:%s283] %v480
                %v482 = vld [vmem:[%s290 + $0x578] sm:%s283]
                %483 = vst [vmem:[%s291 + $0x2f8] sm:%s283] %v482
                %v484 = vld [vmem:[%s290 + $0x600] sm:%s283]
                %485 = vst [vmem:[%s291 + $0x300] sm:%s283] %v484
                %v486 = vld [vmem:[%s290 + $0x608] sm:%s283]
                %487 = vst [vmem:[%s291 + $0x308] sm:%s283] %v486
                %v488 = vld [vmem:[%s290 + $0x610] sm:%s283]
                %489 = vst [vmem:[%s291 + $0x310] sm:%s283] %v488
                %v490 = vld [vmem:[%s290 + $0x618] sm:%s283]
                %491 = vst [vmem:[%s291 + $0x318] sm:%s283] %v490
                %v492 = vld [vmem:[%s290 + $0x620] sm:%s283]
                %493 = vst [vmem:[%s291 + $0x320] sm:%s283] %v492
                %v494 = vld [vmem:[%s290 + $0x628] sm:%s283]
                %495 = vst [vmem:[%s291 + $0x328] sm:%s283] %v494
                %v496 = vld [vmem:[%s290 + $0x630] sm:%s283]
                %497 = vst [vmem:[%s291 + $0x330] sm:%s283] %v496
                %v498 = vld [vmem:[%s290 + $0x638] sm:%s283]
                %499 = vst [vmem:[%s291 + $0x338] sm:%s283] %v498
                %v500 = vld [vmem:[%s290 + $0x640] sm:%s283]
                %501 = vst [vmem:[%s291 + $0x340] sm:%s283] %v500
                %v502 = vld [vmem:[%s290 + $0x648] sm:%s283]
                %503 = vst [vmem:[%s291 + $0x348] sm:%s283] %v502
                %v504 = vld [vmem:[%s290 + $0x650] sm:%s283]
                %505 = vst [vmem:[%s291 + $0x350] sm:%s283] %v504
                %v506 = vld [vmem:[%s290 + $0x658] sm:%s283]
                %507 = vst [vmem:[%s291 + $0x358] sm:%s283] %v506
                %v508 = vld [vmem:[%s290 + $0x660] sm:%s283]
                %509 = vst [vmem:[%s291 + $0x360] sm:%s283] %v508
                %v510 = vld [vmem:[%s290 + $0x668] sm:%s283]
                %511 = vst [vmem:[%s291 + $0x368] sm:%s283] %v510
                %v512 = vld [vmem:[%s290 + $0x670] sm:%s283]
                %513 = vst [vmem:[%s291 + $0x370] sm:%s283] %v512
                %v514 = vld [vmem:[%s290 + $0x678] sm:%s283]
                %515 = vst [vmem:[%s291 + $0x378] sm:%s283] %v514
                %v516 = vld [vmem:[%s290 + $0x700] sm:%s283]
                %517 = vst [vmem:[%s291 + $0x380] sm:%s283] %v516
                %v518 = vld [vmem:[%s290 + $0x708] sm:%s283]
                %519 = vst [vmem:[%s291 + $0x388] sm:%s283] %v518
                %v520 = vld [vmem:[%s290 + $0x710] sm:%s283]
                %521 = vst [vmem:[%s291 + $0x390] sm:%s283] %v520
                %v522 = vld [vmem:[%s290 + $0x718] sm:%s283]
                %523 = vst [vmem:[%s291 + $0x398] sm:%s283] %v522
                %v524 = vld [vmem:[%s290 + $0x720] sm:%s283]
                %525 = vst [vmem:[%s291 + $0x3a0] sm:%s283] %v524
                %v526 = vld [vmem:[%s290 + $0x728] sm:%s283]
                %527 = vst [vmem:[%s291 + $0x3a8] sm:%s283] %v526
                %v528 = vld [vmem:[%s290 + $0x730] sm:%s283]
                %529 = vst [vmem:[%s291 + $0x3b0] sm:%s283] %v528
                %v530 = vld [vmem:[%s290 + $0x738] sm:%s283]
                %531 = vst [vmem:[%s291 + $0x3b8] sm:%s283] %v530
                %v532 = vld [vmem:[%s290 + $0x740] sm:%s283]
                %533 = vst [vmem:[%s291 + $0x3c0] sm:%s283] %v532
                %v534 = vld [vmem:[%s290 + $0x748] sm:%s283]
                %535 = vst [vmem:[%s291 + $0x3c8] sm:%s283] %v534
                %v536 = vld [vmem:[%s290 + $0x750] sm:%s283]
                %537 = vst [vmem:[%s291 + $0x3d0] sm:%s283] %v536
                %v538 = vld [vmem:[%s290 + $0x758] sm:%s283]
                %539 = vst [vmem:[%s291 + $0x3d8] sm:%s283] %v538
                %v540 = vld [vmem:[%s290 + $0x760] sm:%s283]
                %541 = vst [vmem:[%s291 + $0x3e0] sm:%s283] %v540
                %v542 = vld [vmem:[%s290 + $0x768] sm:%s283]
                %543 = vst [vmem:[%s291 + $0x3e8] sm:%s283] %v542
                %v544 = vld [vmem:[%s290 + $0x770] sm:%s283]
                %545 = vst [vmem:[%s291 + $0x3f0] sm:%s283] %v544
                %v546 = vld [vmem:[%s290 + $0x778] sm:%s283]
                %547 = vst [vmem:[%s291 + $0x3f8] sm:%s283] %v546
              $region61: #{tpu_custom_call.1} parent=55 // loop_footer
                %s289 = sadd.s32 1, %s285
              $region62: #{tpu_custom_call.1} parent=55 // loop_footer_branch
                %284 = sbr.rel target = $region58
              $region63: #{tpu_custom_call.1} parent=55 // loop_exit
                _
            $region56: #{tpu_custom_call.1} parent=47 // pred_fallthru
              _
          $region48: #{tpu_custom_call.1} parent=43 // pred_fallthru
            _
          %816 = vnop
        $region44: #{tpu_custom_call.1} parent=39 // pred_fallthru
          _
      $region40: #{tpu_custom_call.1} parent=5 // pred_fallthru
        _
      %p817 = scmp.le.s32.totalorder 1, %s16
      %p818 = scmp.lt.s32.totalorder %s16, 3
      %p819 = pnand %p817, %p818
      %p820 = pneg %p819
      // Predicated region
      $region79: #{tpu_custom_call.1} parent=5 // pred_check
        _
      $region80: #{tpu_custom_call.1} parent=5 // pred_check_branch
        %822 = sbr.rel (%p819) target = $region82
      $region81: #{tpu_custom_call.1} parent=5 // pred_region
        %s823 = ssub.s32 %s16, 1
        %s824 = sand.u32 %s69, 1
        %s825 = sand.u32 %s69, 1
        %s826 = smul.addr %s825, 1024
        %s827 = scalar_lea.vmem [#allocation7], %s826
        // Predicated region
        $region83: #{tpu_custom_call.1} parent=81 // pred_check
          %p828 = pneg %p82
        $region84: #{tpu_custom_call.1} parent=81 // pred_check_branch
          %830 = sbr.rel (%p828) target = $region86
        $region85: #{tpu_custom_call.1} parent=81 // pred_region
          _
        $region86: #{tpu_custom_call.1} parent=81 // pred_fallthru
          _
        %p831 = scmp.lt.s32.totalorder %s25, 0
        %s832 = scalar_select %p831, %s25, 0
        %s833 = smul.addr %s832, 8
        %s834 = scalar_lea.vmem %s1, %s833
        %p835 = pneg %p54
        %p836 = pneg %p51
        %s837 = sand.u32 %s69, 1
        %s838 = sand.u32 %s69, 1
        %s839 = smul.addr %s838, 1024
        %s840 = scalar_lea.vmem [#allocation7], %s839
        %p841 = pneg %p82
        %p842 = pneg %p79
        %p843 = scmp.lt.s32.totalorder %s25, 0
        %s844 = scalar_select %p843, %s25, 0
        %s845 = smul.addr %s844, 8
        %s846 = scalar_lea.vmem %s3, %s845
        %p847 = pneg %p108
        %p848 = pneg %p105
        %p849 = pneg %p129
        %p850 = pneg %p126
        %p851 = pneg %p150
        %p852 = pneg %p147
        %p853 = pneg %p171
        %p854 = pneg %p168
        %p855 = pneg %p192
        %p856 = pneg %p189
        %p857 = pneg %p218
        %p858 = pneg %p215
        %p859 = scmp.lt.s32.totalorder %s25, 0
        %s860 = scalar_select %p859, %s25, 0
        %s861 = smul.addr %s860, 8
        %s862 = scalar_lea.vmem %s1, %s861
        %s863 = smul.u32 8, %s25
        %s864 = smul.u32 16, %s26
        %p865 = scmp.lt.s32.totalorder %s25, 0
        %s866 = scalar_select %p865, %s25, 0
        %s867 = smul.addr %s866, 8
        %s868 = scalar_lea.vmem %s3, %s867
        %s869 = smul.u32 8, %s25
        %p870 = scmp.eq.s32.totalorder %s26, 0
        // Predicated region
        $region87: #{tpu_custom_call.1} parent=81 // pred_check
          %p871 = pneg %p870
        $region88: #{tpu_custom_call.1} parent=81 // pred_check_branch
          %873 = sbr.rel (%p871) target = $region90
        $region89: #{tpu_custom_call.1} parent=81 // pred_region
          %v874 = vld [vmem:[%s862] sm:$0xff]
          %v875 = vld [vmem:[%s862 + $0x8] sm:$0xff]
          %v876 = vld [vmem:[%s862 + $0x10] sm:$0xff]
          %vm877 = vcmask 261120
          %v878 = vsel %vm877, %v874, 0.0
          %v879 = vsel %vm877, %v875, 0.0
          %v880 = vadd.f32 %v878, %v879
          %v881 = vsel %vm877, %v876, 0.0
          %v882 = vadd.f32 %v880, %v881
          %v883 = vrcp.pop 3.0
          %v884 = vmul.f32 %v882, %v883
          %v885 = vld [vmem:[%s4] sm:$0xff]
          %v886 = vld [vmem:[%s4 + $0x8] sm:$0xff]
          %v887 = vld [vmem:[%s4 + $0x10] sm:$0xff]
          %v888 = vld [vmem:[%s4 + $0x18] sm:$0xff]
          %v889 = vld [vmem:[%s6] sm:$0x1]
          %v891 = vlaneseq
          %v892 = vshrl.u32 %v891, 7
          %v893 = vsub.s32 0, %v892
          %v894 = vrot.slane %v889, %v893
          %v897 = vsel %vm877, %v884, 0
          %899 = vmatprep.subr.mxu0 0.0
          %900 = vmatpush1.msra.mxu0 0.0
          %901 = vmatprep.subr.mxu0 0.0
          %902 = vmatpush1.msra.mxu0 0.0
          %903 = vmatprep.subr.mxu0 0.0
          %904 = vmatpush1.msra.mxu0 0.0
          %905 = vmatprep.subr.mxu0 0.0
          %906 = vmatpush1.msra.mxu0 0.0
          %907 = vmatprep.subr.mxu0 0.0
          %908 = vmatpush1.msra.mxu0 0.0
          %909 = vmatprep.subr.mxu0 0.0
          %910 = vmatpush1.msra.mxu0 0.0
          %911 = vmatprep.subr.mxu0 0.0
          %912 = vmatpush1.msra.mxu0 0.0
          %913 = vmatprep.subr.mxu0 0.0
          %914 = vmatpush1.msra.mxu0 0.0
          %915 = vmatprep.subr.mxu0 0.0
          %916 = vmatpush1.msra.mxu0 0.0
          %917 = vmatprep.subr.mxu0 0.0
          %918 = vmatpush1.msra.mxu0 0.0
          %919 = vmatprep.subr.mxu0 0.0
          %920 = vmatpush1.msra.mxu0 0.0
          %921 = vmatprep.subr.mxu0 0.0
          %922 = vmatpush1.msra.mxu0 0.0
          %923 = vmatprep.subr.mxu0 0.0
          %924 = vmatpush1.msra.mxu0 %v888
          %925 = vmatprep.subr.mxu0 0.0
          %926 = vmatpush1.msra.mxu0 %v887
          %927 = vmatprep.subr.mxu0 0.0
          %928 = vmatpush1.msra.mxu0 %v886
          %929 = vmatprep.subr.mxu0 0.0
          %930 = vmatpush1.msra.mxu0 %v885
          %931 = vmatprep.subr.mxu0 0.0
          %932 = vmatpush2.msra.mxu0 0.0
          %933 = vmatprep.subr.mxu0 0.0
          %934 = vmatpush2.msra.mxu0 0.0
          %935 = vmatprep.subr.mxu0 0.0
          %936 = vmatpush2.msra.mxu0 0.0
          %937 = vmatprep.subr.mxu0 0.0
          %938 = vmatpush2.msra.mxu0 0.0
          %939 = vmatprep.subr.mxu0 0.0
          %940 = vmatpush2.msra.mxu0 0.0
          %941 = vmatprep.subr.mxu0 0.0
          %942 = vmatpush2.msra.mxu0 0.0
          %943 = vmatprep.subr.mxu0 0.0
          %944 = vmatpush2.msra.mxu0 0.0
          %945 = vmatprep.subr.mxu0 0.0
          %946 = vmatpush2.msra.mxu0 0.0
          %947 = vmatprep.subr.mxu0 0.0
          %948 = vmatpush2.msra.mxu0 0.0
          %949 = vmatprep.subr.mxu0 0.0
          %950 = vmatpush2.msra.mxu0 0.0
          %951 = vmatprep.subr.mxu0 0.0
          %952 = vmatpush2.msra.mxu0 0.0
          %953 = vmatprep.subr.mxu0 0.0
          %954 = vmatpush2.msra.mxu0 0.0
          %955 = vmatprep.subr.mxu0 0.0
          %956 = vmatpush2.msra.mxu0 0.0
          %957 = vmatprep.subr.mxu0 0.0
          %958 = vmatpush2.msra.mxu0 0.0
          %959 = vmatprep.subr.mxu0 0.0
          %960 = vmatpush2.msra.mxu0 0.0
          %961 = vmatprep.subr.mxu0 0.0
          %962 = vmatpush2.msra.mxu0 0.0
          %963 = vmatprep.mubr.f32.mxu0 0.0
          %964 = vmatmul.mubr.f32.gmra.mxu0 %v897
          %v965 = vpop.f32.mrf.mxu0
          %v966 = vadd.f32 %v894, %v965
          %v967 = vpop.f32.mrf.mxu0
          %968 = vdwg.mxu0
          %969 = vst.msk [vmem:[#allocation2] sm:$0xff] %vm877, %v966
          %vm970 = vcmask 7168
          %971 = vst.msk [vmem:[#allocation3] sm:$0xff] %vm970, -1e+30
          %972 = vst.msk [vmem:[#allocation4] sm:$0xff] %vm970, 0.0
          %973 = vst [vmem:[#allocation8] sm:$0x3] 0.0
          %974 = vst [vmem:[#allocation8 + $0x2] sm:$0x3] 0.0
          %975 = vst [vmem:[#allocation8 + $0x4] sm:$0x3] 0.0
          %976 = vst [vmem:[#allocation8 + $0x6] sm:$0x3] 0.0
          %977 = vst [vmem:[#allocation8 + $0x8] sm:$0x3] 0.0
          %978 = vst [vmem:[#allocation8 + $0xa] sm:$0x3] 0.0
          %979 = vst [vmem:[#allocation8 + $0xc] sm:$0x3] 0.0
          %980 = vst [vmem:[#allocation8 + $0xe] sm:$0x3] 0.0
        $region90: #{tpu_custom_call.1} parent=81 // pred_fallthru
          _
        %s981 = smul.u32 %s26, 128
        %s982 = sld [smem:[#allocation6 + %s25]]
        %p983 = scmp.lt.s32.totalorder %s981, %s982
        // Predicated region
        $region91: #{tpu_custom_call.1} parent=81 // pred_check
          %p984 = pneg %p983
        $region92: #{tpu_custom_call.1} parent=81 // pred_check_branch
          %986 = sbr.rel (%p984) target = $region94
        $region93: #{tpu_custom_call.1} parent=81 // pred_region
          %v987 = vld [vmem:[%s827] sm:$0xff]
          %v988 = vld [vmem:[%s827 + $0x8] sm:$0xff]
          %v989 = vld [vmem:[%s827 + $0x10] sm:$0xff]
          %v990 = vld [vmem:[%s827 + $0x18] sm:$0xff]
          %v991 = vld [vmem:[%s827 + $0x20] sm:$0xff]
          %v992 = vld [vmem:[%s827 + $0x28] sm:$0xff]
          %v993 = vld [vmem:[%s827 + $0x30] sm:$0xff]
          %v994 = vld [vmem:[%s827 + $0x38] sm:$0xff]
          %v995 = vld [vmem:[%s827 + $0x40] sm:$0xff]
          %v996 = vld [vmem:[%s827 + $0x48] sm:$0xff]
          %v997 = vld [vmem:[%s827 + $0x50] sm:$0xff]
          %v998 = vld [vmem:[%s827 + $0x58] sm:$0xff]
          %v999 = vld [vmem:[%s827 + $0x60] sm:$0xff]
          %v1000 = vld [vmem:[%s827 + $0x68] sm:$0xff]
          %v1001 = vld [vmem:[%s827 + $0x70] sm:$0xff]
          %v1002 = vld [vmem:[%s827 + $0x78] sm:$0xff]
          %v1003 = vld [vmem:[%s827 + $0x80] sm:$0xff]
          %v1004 = vld [vmem:[%s827 + $0x88] sm:$0xff]
          %v1005 = vld [vmem:[%s827 + $0x90] sm:$0xff]
          %v1006 = vld [vmem:[%s827 + $0x98] sm:$0xff]
          %v1007 = vld [vmem:[%s827 + $0xa0] sm:$0xff]
          %v1008 = vld [vmem:[%s827 + $0xa8] sm:$0xff]
          %v1009 = vld [vmem:[%s827 + $0xb0] sm:$0xff]
          %v1010 = vld [vmem:[%s827 + $0xb8] sm:$0xff]
          %v1011 = vld [vmem:[%s827 + $0xc0] sm:$0xff]
          %v1012 = vld [vmem:[%s827 + $0xc8] sm:$0xff]
          %v1013 = vld [vmem:[%s827 + $0xd0] sm:$0xff]
          %v1014 = vld [vmem:[%s827 + $0xd8] sm:$0xff]
          %v1015 = vld [vmem:[%s827 + $0xe0] sm:$0xff]
          %v1016 = vld [vmem:[%s827 + $0xe8] sm:$0xff]
          %v1017 = vld [vmem:[%s827 + $0xf0] sm:$0xff]
          %v1018 = vld [vmem:[%s827 + $0xf8] sm:$0xff]
          %v1019 = vld [vmem:[%s827 + $0x100] sm:$0xff]
          %v1020 = vld [vmem:[%s827 + $0x108] sm:$0xff]
          %v1021 = vld [vmem:[%s827 + $0x110] sm:$0xff]
          %v1022 = vld [vmem:[%s827 + $0x118] sm:$0xff]
          %v1023 = vld [vmem:[%s827 + $0x120] sm:$0xff]
          %v1024 = vld [vmem:[%s827 + $0x128] sm:$0xff]
          %v1025 = vld [vmem:[%s827 + $0x130] sm:$0xff]
          %v1026 = vld [vmem:[%s827 + $0x138] sm:$0xff]
          %v1027 = vld [vmem:[%s827 + $0x140] sm:$0xff]
          %v1028 = vld [vmem:[%s827 + $0x148] sm:$0xff]
          %v1029 = vld [vmem:[%s827 + $0x150] sm:$0xff]
          %v1030 = vld [vmem:[%s827 + $0x158] sm:$0xff]
          %v1031 = vld [vmem:[%s827 + $0x160] sm:$0xff]
          %v1032 = vld [vmem:[%s827 + $0x168] sm:$0xff]
          %v1033 = vld [vmem:[%s827 + $0x170] sm:$0xff]
          %v1034 = vld [vmem:[%s827 + $0x178] sm:$0xff]
          %v1035 = vld [vmem:[%s827 + $0x180] sm:$0xff]
          %v1036 = vld [vmem:[%s827 + $0x188] sm:$0xff]
          %v1037 = vld [vmem:[%s827 + $0x190] sm:$0xff]
          %v1038 = vld [vmem:[%s827 + $0x198] sm:$0xff]
          %v1039 = vld [vmem:[%s827 + $0x1a0] sm:$0xff]
          %v1040 = vld [vmem:[%s827 + $0x1a8] sm:$0xff]
          %v1041 = vld [vmem:[%s827 + $0x1b0] sm:$0xff]
          %v1042 = vld [vmem:[%s827 + $0x1b8] sm:$0xff]
          %v1043 = vld [vmem:[%s827 + $0x1c0] sm:$0xff]
          %v1044 = vld [vmem:[%s827 + $0x1c8] sm:$0xff]
          %v1045 = vld [vmem:[%s827 + $0x1d0] sm:$0xff]
          %v1046 = vld [vmem:[%s827 + $0x1d8] sm:$0xff]
          %v1047 = vld [vmem:[%s827 + $0x1e0] sm:$0xff]
          %v1048 = vld [vmem:[%s827 + $0x1e8] sm:$0xff]
          %v1049 = vld [vmem:[%s827 + $0x1f0] sm:$0xff]
          %v1050 = vld [vmem:[%s827 + $0x1f8] sm:$0xff]
          %v1051 = vld [vmem:[%s827 + $0x200] sm:$0xff]
          %v1052 = vld [vmem:[%s827 + $0x208] sm:$0xff]
          %v1053 = vld [vmem:[%s827 + $0x210] sm:$0xff]
          %v1054 = vld [vmem:[%s827 + $0x218] sm:$0xff]
          %v1055 = vld [vmem:[%s827 + $0x220] sm:$0xff]
          %v1056 = vld [vmem:[%s827 + $0x228] sm:$0xff]
          %v1057 = vld [vmem:[%s827 + $0x230] sm:$0xff]
          %v1058 = vld [vmem:[%s827 + $0x238] sm:$0xff]
          %v1059 = vld [vmem:[%s827 + $0x240] sm:$0xff]
          %v1060 = vld [vmem:[%s827 + $0x248] sm:$0xff]
          %v1061 = vld [vmem:[%s827 + $0x250] sm:$0xff]
          %v1062 = vld [vmem:[%s827 + $0x258] sm:$0xff]
          %v1063 = vld [vmem:[%s827 + $0x260] sm:$0xff]
          %v1064 = vld [vmem:[%s827 + $0x268] sm:$0xff]
          %v1065 = vld [vmem:[%s827 + $0x270] sm:$0xff]
          %v1066 = vld [vmem:[%s827 + $0x278] sm:$0xff]
          %v1067 = vld [vmem:[%s827 + $0x280] sm:$0xff]
          %v1068 = vld [vmem:[%s827 + $0x288] sm:$0xff]
          %v1069 = vld [vmem:[%s827 + $0x290] sm:$0xff]
          %v1070 = vld [vmem:[%s827 + $0x298] sm:$0xff]
          %v1071 = vld [vmem:[%s827 + $0x2a0] sm:$0xff]
          %v1072 = vld [vmem:[%s827 + $0x2a8] sm:$0xff]
          %v1073 = vld [vmem:[%s827 + $0x2b0] sm:$0xff]
          %v1074 = vld [vmem:[%s827 + $0x2b8] sm:$0xff]
          %v1075 = vld [vmem:[%s827 + $0x2c0] sm:$0xff]
          %v1076 = vld [vmem:[%s827 + $0x2c8] sm:$0xff]
          %v1077 = vld [vmem:[%s827 + $0x2d0] sm:$0xff]
          %v1078 = vld [vmem:[%s827 + $0x2d8] sm:$0xff]
          %v1079 = vld [vmem:[%s827 + $0x2e0] sm:$0xff]
          %v1080 = vld [vmem:[%s827 + $0x2e8] sm:$0xff]
          %v1081 = vld [vmem:[%s827 + $0x2f0] sm:$0xff]
          %v1082 = vld [vmem:[%s827 + $0x2f8] sm:$0xff]
          %v1083 = vld [vmem:[%s827 + $0x300] sm:$0xff]
          %v1084 = vld [vmem:[%s827 + $0x308] sm:$0xff]
          %v1085 = vld [vmem:[%s827 + $0x310] sm:$0xff]
          %v1086 = vld [vmem:[%s827 + $0x318] sm:$0xff]
          %v1087 = vld [vmem:[%s827 + $0x320] sm:$0xff]
          %v1088 = vld [vmem:[%s827 + $0x328] sm:$0xff]
          %v1089 = vld [vmem:[%s827 + $0x330] sm:$0xff]
          %v1090 = vld [vmem:[%s827 + $0x338] sm:$0xff]
          %v1091 = vld [vmem:[%s827 + $0x340] sm:$0xff]
          %v1092 = vld [vmem:[%s827 + $0x348] sm:$0xff]
          %v1093 = vld [vmem:[%s827 + $0x350] sm:$0xff]
          %v1094 = vld [vmem:[%s827 + $0x358] sm:$0xff]
          %v1095 = vld [vmem:[%s827 + $0x360] sm:$0xff]
          %v1096 = vld [vmem:[%s827 + $0x368] sm:$0xff]
          %v1097 = vld [vmem:[%s827 + $0x370] sm:$0xff]
          %v1098 = vld [vmem:[%s827 + $0x378] sm:$0xff]
          %v1099 = vld [vmem:[%s827 + $0x380] sm:$0xff]
          %v1100 = vld [vmem:[%s827 + $0x388] sm:$0xff]
          %v1101 = vld [vmem:[%s827 + $0x390] sm:$0xff]
          %v1102 = vld [vmem:[%s827 + $0x398] sm:$0xff]
          %v1103 = vld [vmem:[%s827 + $0x3a0] sm:$0xff]
          %v1104 = vld [vmem:[%s827 + $0x3a8] sm:$0xff]
          %v1105 = vld [vmem:[%s827 + $0x3b0] sm:$0xff]
          %v1106 = vld [vmem:[%s827 + $0x3b8] sm:$0xff]
          %v1107 = vld [vmem:[%s827 + $0x3c0] sm:$0xff]
          %v1108 = vld [vmem:[%s827 + $0x3c8] sm:$0xff]
          %v1109 = vld [vmem:[%s827 + $0x3d0] sm:$0xff]
          %v1110 = vld [vmem:[%s827 + $0x3d8] sm:$0xff]
          %v1111 = vld [vmem:[%s827 + $0x3e0] sm:$0xff]
          %v1112 = vld [vmem:[%s827 + $0x3e8] sm:$0xff]
          %v1113 = vld [vmem:[%s827 + $0x3f0] sm:$0xff]
          %v1114 = vld [vmem:[%s827 + $0x3f8] sm:$0xff]
          %v1115 = vld [vmem:[%s5] sm:$0xff]
          %v1116 = vld [vmem:[%s5 + $0x8] sm:$0xff]
          %v1117 = vld [vmem:[%s5 + $0x10] sm:$0xff]
          %v1118 = vld [vmem:[%s5 + $0x18] sm:$0xff]
          %vm1119 = vcmask 261120
          %v1121 = vsel %vm1119, %v987, 0
          %v1124 = vsel %vm1119, %v988, 0
          %v1127 = vsel %vm1119, %v989, 0
          %v1130 = vsel %vm1119, %v990, 0
          %v1133 = vsel %vm1119, %v991, 0
          %v1136 = vsel %vm1119, %v992, 0
          %v1139 = vsel %vm1119, %v993, 0
          %v1142 = vsel %vm1119, %v994, 0
          %v1145 = vsel %vm1119, %v995, 0
          %v1148 = vsel %vm1119, %v996, 0
          %v1151 = vsel %vm1119, %v997, 0
          %v1154 = vsel %vm1119, %v998, 0
          %v1157 = vsel %vm1119, %v999, 0
          %v1160 = vsel %vm1119, %v1000, 0
          %v1163 = vsel %vm1119, %v1001, 0
          %v1166 = vsel %vm1119, %v1002, 0
          %v1169 = vsel %vm1119, %v1003, 0
          %v1172 = vsel %vm1119, %v1004, 0
          %v1175 = vsel %vm1119, %v1005, 0
          %v1178 = vsel %vm1119, %v1006, 0
          %v1181 = vsel %vm1119, %v1007, 0
          %v1184 = vsel %vm1119, %v1008, 0
          %v1187 = vsel %vm1119, %v1009, 0
          %v1190 = vsel %vm1119, %v1010, 0
          %v1193 = vsel %vm1119, %v1011, 0
          %v1196 = vsel %vm1119, %v1012, 0
          %v1199 = vsel %vm1119, %v1013, 0
          %v1202 = vsel %vm1119, %v1014, 0
          %v1205 = vsel %vm1119, %v1015, 0
          %v1208 = vsel %vm1119, %v1016, 0
          %v1211 = vsel %vm1119, %v1017, 0
          %v1214 = vsel %vm1119, %v1018, 0
          %v1217 = vsel %vm1119, %v1019, 0
          %v1220 = vsel %vm1119, %v1020, 0
          %v1223 = vsel %vm1119, %v1021, 0
          %v1226 = vsel %vm1119, %v1022, 0
          %v1229 = vsel %vm1119, %v1023, 0
          %v1232 = vsel %vm1119, %v1024, 0
          %v1235 = vsel %vm1119, %v1025, 0
          %v1238 = vsel %vm1119, %v1026, 0
          %v1241 = vsel %vm1119, %v1027, 0
          %v1244 = vsel %vm1119, %v1028, 0
          %v1247 = vsel %vm1119, %v1029, 0
          %v1250 = vsel %vm1119, %v1030, 0
          %v1253 = vsel %vm1119, %v1031, 0
          %v1256 = vsel %vm1119, %v1032, 0
          %v1259 = vsel %vm1119, %v1033, 0
          %v1262 = vsel %vm1119, %v1034, 0
          %v1265 = vsel %vm1119, %v1035, 0
          %v1268 = vsel %vm1119, %v1036, 0
          %v1271 = vsel %vm1119, %v1037, 0
          %v1274 = vsel %vm1119, %v1038, 0
          %v1277 = vsel %vm1119, %v1039, 0
          %v1280 = vsel %vm1119, %v1040, 0
          %v1283 = vsel %vm1119, %v1041, 0
          %v1286 = vsel %vm1119, %v1042, 0
          %v1289 = vsel %vm1119, %v1043, 0
          %v1292 = vsel %vm1119, %v1044, 0
          %v1295 = vsel %vm1119, %v1045, 0
          %v1298 = vsel %vm1119, %v1046, 0
          %v1301 = vsel %vm1119, %v1047, 0
          %v1304 = vsel %vm1119, %v1048, 0
          %v1307 = vsel %vm1119, %v1049, 0
          %v1310 = vsel %vm1119, %v1050, 0
          %v1313 = vsel %vm1119, %v1051, 0
          %v1316 = vsel %vm1119, %v1052, 0
          %v1319 = vsel %vm1119, %v1053, 0
          %v1322 = vsel %vm1119, %v1054, 0
          %v1325 = vsel %vm1119, %v1055, 0
          %v1328 = vsel %vm1119, %v1056, 0
          %v1331 = vsel %vm1119, %v1057, 0
          %v1334 = vsel %vm1119, %v1058, 0
          %v1337 = vsel %vm1119, %v1059, 0
          %v1340 = vsel %vm1119, %v1060, 0
          %v1343 = vsel %vm1119, %v1061, 0
          %v1346 = vsel %vm1119, %v1062, 0
          %v1349 = vsel %vm1119, %v1063, 0
          %v1352 = vsel %vm1119, %v1064, 0
          %v1355 = vsel %vm1119, %v1065, 0
          %v1358 = vsel %vm1119, %v1066, 0
          %v1361 = vsel %vm1119, %v1067, 0
          %v1364 = vsel %vm1119, %v1068, 0
          %v1367 = vsel %vm1119, %v1069, 0
          %v1370 = vsel %vm1119, %v1070, 0
          %v1373 = vsel %vm1119, %v1071, 0
          %v1376 = vsel %vm1119, %v1072, 0
          %v1379 = vsel %vm1119, %v1073, 0
          %v1382 = vsel %vm1119, %v1074, 0
          %v1385 = vsel %vm1119, %v1075, 0
          %v1388 = vsel %vm1119, %v1076, 0
          %v1391 = vsel %vm1119, %v1077, 0
          %v1394 = vsel %vm1119, %v1078, 0
          %v1397 = vsel %vm1119, %v1079, 0
          %v1400 = vsel %vm1119, %v1080, 0
          %v1403 = vsel %vm1119, %v1081, 0
          %v1406 = vsel %vm1119, %v1082, 0
          %v1409 = vsel %vm1119, %v1083, 0
          %v1412 = vsel %vm1119, %v1084, 0
          %v1415 = vsel %vm1119, %v1085, 0
          %v1418 = vsel %vm1119, %v1086, 0
          %v1421 = vsel %vm1119, %v1087, 0
          %v1424 = vsel %vm1119, %v1088, 0
          %v1427 = vsel %vm1119, %v1089, 0
          %v1430 = vsel %vm1119, %v1090, 0
          %v1433 = vsel %vm1119, %v1091, 0
          %v1436 = vsel %vm1119, %v1092, 0
          %v1439 = vsel %vm1119, %v1093, 0
          %v1442 = vsel %vm1119, %v1094, 0
          %v1445 = vsel %vm1119, %v1095, 0
          %v1448 = vsel %vm1119, %v1096, 0
          %v1451 = vsel %vm1119, %v1097, 0
          %v1454 = vsel %vm1119, %v1098, 0
          %v1457 = vsel %vm1119, %v1099, 0
          %v1460 = vsel %vm1119, %v1100, 0
          %v1463 = vsel %vm1119, %v1101, 0
          %v1466 = vsel %vm1119, %v1102, 0
          %v1469 = vsel %vm1119, %v1103, 0
          %v1472 = vsel %vm1119, %v1104, 0
          %v1475 = vsel %vm1119, %v1105, 0
          %v1478 = vsel %vm1119, %v1106, 0
          %v1481 = vsel %vm1119, %v1107, 0
          %v1484 = vsel %vm1119, %v1108, 0
          %v1487 = vsel %vm1119, %v1109, 0
          %v1490 = vsel %vm1119, %v1110, 0
          %v1493 = vsel %vm1119, %v1111, 0
          %v1496 = vsel %vm1119, %v1112, 0
          %v1499 = vsel %vm1119, %v1113, 0
          %v1502 = vsel %vm1119, %v1114, 0
          %1504 = vmatprep.subr.mxu0 0.0
          %1505 = vmatpush1.msra.mxu0 0.0
          %1506 = vmatprep.subr.mxu0 0.0
          %1507 = vmatpush1.msra.mxu0 0.0
          %1508 = vmatprep.subr.mxu0 0.0
          %1509 = vmatpush1.msra.mxu0 0.0
          %1510 = vmatprep.subr.mxu0 0.0
          %1511 = vmatpush1.msra.mxu0 0.0
          %1512 = vmatprep.subr.mxu0 0.0
          %1513 = vmatpush1.msra.mxu0 0.0
          %1514 = vmatprep.subr.mxu0 0.0
          %1515 = vmatpush1.msra.mxu0 0.0
          %1516 = vmatprep.subr.mxu0 0.0
          %1517 = vmatpush1.msra.mxu0 0.0
          %1518 = vmatprep.subr.mxu0 0.0
          %1519 = vmatpush1.msra.mxu0 0.0
          %1520 = vmatprep.subr.mxu0 0.0
          %1521 = vmatpush1.msra.mxu0 0.0
          %1522 = vmatprep.subr.mxu0 0.0
          %1523 = vmatpush1.msra.mxu0 0.0
          %1524 = vmatprep.subr.mxu0 0.0
          %1525 = vmatpush1.msra.mxu0 0.0
          %1526 = vmatprep.subr.mxu0 0.0
          %1527 = vmatpush1.msra.mxu0 0.0
          %1528 = vmatprep.subr.mxu0 0.0
          %1529 = vmatpush1.msra.mxu0 %v1118
          %1530 = vmatprep.subr.mxu0 0.0
          %1531 = vmatpush1.msra.mxu0 %v1117
          %1532 = vmatprep.subr.mxu0 0.0
          %1533 = vmatpush1.msra.mxu0 %v1116
          %1534 = vmatprep.subr.mxu0 0.0
          %1535 = vmatpush1.msra.mxu0 %v1115
          %1536 = vmatprep.subr.mxu0 0.0
          %1537 = vmatpush2.msra.mxu0 0.0
          %1538 = vmatprep.subr.mxu0 0.0
          %1539 = vmatpush2.msra.mxu0 0.0
          %1540 = vmatprep.subr.mxu0 0.0
          %1541 = vmatpush2.msra.mxu0 0.0
          %1542 = vmatprep.subr.mxu0 0.0
          %1543 = vmatpush2.msra.mxu0 0.0
          %1544 = vmatprep.subr.mxu0 0.0
          %1545 = vmatpush2.msra.mxu0 0.0
          %1546 = vmatprep.subr.mxu0 0.0
          %1547 = vmatpush2.msra.mxu0 0.0
          %1548 = vmatprep.subr.mxu0 0.0
          %1549 = vmatpush2.msra.mxu0 0.0
          %1550 = vmatprep.subr.mxu0 0.0
          %1551 = vmatpush2.msra.mxu0 0.0
          %1552 = vmatprep.subr.mxu0 0.0
          %1553 = vmatpush2.msra.mxu0 0.0
          %1554 = vmatprep.subr.mxu0 0.0
          %1555 = vmatpush2.msra.mxu0 0.0
          %1556 = vmatprep.subr.mxu0 0.0
          %1557 = vmatpush2.msra.mxu0 0.0
          %1558 = vmatprep.subr.mxu0 0.0
          %1559 = vmatpush2.msra.mxu0 0.0
          %1560 = vmatprep.subr.mxu0 0.0
          %1561 = vmatpush2.msra.mxu0 0.0
          %1562 = vmatprep.subr.mxu0 0.0
          %1563 = vmatpush2.msra.mxu0 0.0
          %1564 = vmatprep.subr.mxu0 0.0
          %1565 = vmatpush2.msra.mxu0 0.0
          %1566 = vmatprep.subr.mxu0 0.0
          %1567 = vmatpush2.msra.mxu0 0.0
          %1568 = vmatprep.mubr.f32.mxu0 0.0
          %1569 = vmatmul.mubr.f32.gmra.mxu0 %v1121
          %v1570 = vpop.f32.mrf.mxu0
          %v1571 = vadd.f32 0.0, %v1570
          %v1572 = vpop.f32.mrf.mxu0
          %1573 = vmatprep.mubr.f32.mxu0 0.0
          %1574 = vmatmul.mubr.f32.gmra.mxu0 %v1124
          %v1575 = vpop.f32.mrf.mxu0
          %v1576 = vadd.f32 0.0, %v1575
          %v1577 = vpop.f32.mrf.mxu0
          %1578 = vmatprep.mubr.f32.mxu0 0.0
          %1579 = vmatmul.mubr.f32.gmra.mxu0 %v1127
          %v1580 = vpop.f32.mrf.mxu0
          %v1581 = vadd.f32 0.0, %v1580
          %v1582 = vpop.f32.mrf.mxu0
          %1583 = vmatprep.mubr.f32.mxu0 0.0
          %1584 = vmatmul.mubr.f32.gmra.mxu0 %v1130
          %v1585 = vpop.f32.mrf.mxu0
          %v1586 = vadd.f32 0.0, %v1585
          %v1587 = vpop.f32.mrf.mxu0
          %1588 = vmatprep.mubr.f32.mxu0 0.0
          %1589 = vmatmul.mubr.f32.gmra.mxu0 %v1133
          %v1590 = vpop.f32.mrf.mxu0
          %v1591 = vadd.f32 0.0, %v1590
          %v1592 = vpop.f32.mrf.mxu0
          %1593 = vmatprep.mubr.f32.mxu0 0.0
          %1594 = vmatmul.mubr.f32.gmra.mxu0 %v1136
          %v1595 = vpop.f32.mrf.mxu0
          %v1596 = vadd.f32 0.0, %v1595
          %v1597 = vpop.f32.mrf.mxu0
          %1598 = vmatprep.mubr.f32.mxu0 0.0
          %1599 = vmatmul.mubr.f32.gmra.mxu0 %v1139
          %v1600 = vpop.f32.mrf.mxu0
          %v1601 = vadd.f32 0.0, %v1600
          %v1602 = vpop.f32.mrf.mxu0
          %1603 = vmatprep.mubr.f32.mxu0 0.0
          %1604 = vmatmul.mubr.f32.gmra.mxu0 %v1142
          %v1605 = vpop.f32.mrf.mxu0
          %v1606 = vadd.f32 0.0, %v1605
          %v1607 = vpop.f32.mrf.mxu0
          %1608 = vmatprep.mubr.f32.mxu0 0.0
          %1609 = vmatmul.mubr.f32.gmra.mxu0 %v1145
          %v1610 = vpop.f32.mrf.mxu0
          %v1611 = vadd.f32 0.0, %v1610
          %v1612 = vpop.f32.mrf.mxu0
          %1613 = vmatprep.mubr.f32.mxu0 0.0
          %1614 = vmatmul.mubr.f32.gmra.mxu0 %v1148
          %v1615 = vpop.f32.mrf.mxu0
          %v1616 = vadd.f32 0.0, %v1615
          %v1617 = vpop.f32.mrf.mxu0
          %1618 = vmatprep.mubr.f32.mxu0 0.0
          %1619 = vmatmul.mubr.f32.gmra.mxu0 %v1151
          %v1620 = vpop.f32.mrf.mxu0
          %v1621 = vadd.f32 0.0, %v1620
          %v1622 = vpop.f32.mrf.mxu0
          %1623 = vmatprep.mubr.f32.mxu0 0.0
          %1624 = vmatmul.mubr.f32.gmra.mxu0 %v1154
          %v1625 = vpop.f32.mrf.mxu0
          %v1626 = vadd.f32 0.0, %v1625
          %v1627 = vpop.f32.mrf.mxu0
          %1628 = vmatprep.mubr.f32.mxu0 0.0
          %1629 = vmatmul.mubr.f32.gmra.mxu0 %v1157
          %v1630 = vpop.f32.mrf.mxu0
          %v1631 = vadd.f32 0.0, %v1630
          %v1632 = vpop.f32.mrf.mxu0
          %1633 = vmatprep.mubr.f32.mxu0 0.0
          %1634 = vmatmul.mubr.f32.gmra.mxu0 %v1160
          %v1635 = vpop.f32.mrf.mxu0
          %v1636 = vadd.f32 0.0, %v1635
          %v1637 = vpop.f32.mrf.mxu0
          %1638 = vmatprep.mubr.f32.mxu0 0.0
          %1639 = vmatmul.mubr.f32.gmra.mxu0 %v1163
          %v1640 = vpop.f32.mrf.mxu0
          %v1641 = vadd.f32 0.0, %v1640
          %v1642 = vpop.f32.mrf.mxu0
          %1643 = vmatprep.mubr.f32.mxu0 0.0
          %1644 = vmatmul.mubr.f32.gmra.mxu0 %v1166
          %v1645 = vpop.f32.mrf.mxu0
          %v1646 = vadd.f32 0.0, %v1645
          %v1647 = vpop.f32.mrf.mxu0
          %1648 = vmatprep.mubr.f32.mxu0 0.0
          %1649 = vmatmul.mubr.f32.gmra.mxu0 %v1169
          %v1650 = vpop.f32.mrf.mxu0
          %v1651 = vadd.f32 0.0, %v1650
          %v1652 = vpop.f32.mrf.mxu0
          %1653 = vmatprep.mubr.f32.mxu0 0.0
          %1654 = vmatmul.mubr.f32.gmra.mxu0 %v1172
          %v1655 = vpop.f32.mrf.mxu0
          %v1656 = vadd.f32 0.0, %v1655
          %v1657 = vpop.f32.mrf.mxu0
          %1658 = vmatprep.mubr.f32.mxu0 0.0
          %1659 = vmatmul.mubr.f32.gmra.mxu0 %v1175
          %v1660 = vpop.f32.mrf.mxu0
          %v1661 = vadd.f32 0.0, %v1660
          %v1662 = vpop.f32.mrf.mxu0
          %1663 = vmatprep.mubr.f32.mxu0 0.0
          %1664 = vmatmul.mubr.f32.gmra.mxu0 %v1178
          %v1665 = vpop.f32.mrf.mxu0
          %v1666 = vadd.f32 0.0, %v1665
          %v1667 = vpop.f32.mrf.mxu0
          %1668 = vmatprep.mubr.f32.mxu0 0.0
          %1669 = vmatmul.mubr.f32.gmra.mxu0 %v1181
          %v1670 = vpop.f32.mrf.mxu0
          %v1671 = vadd.f32 0.0, %v1670
          %v1672 = vpop.f32.mrf.mxu0
          %1673 = vmatprep.mubr.f32.mxu0 0.0
          %1674 = vmatmul.mubr.f32.gmra.mxu0 %v1184
          %v1675 = vpop.f32.mrf.mxu0
          %v1676 = vadd.f32 0.0, %v1675
          %v1677 = vpop.f32.mrf.mxu0
          %1678 = vmatprep.mubr.f32.mxu0 0.0
          %1679 = vmatmul.mubr.f32.gmra.mxu0 %v1187
          %v1680 = vpop.f32.mrf.mxu0
          %v1681 = vadd.f32 0.0, %v1680
          %v1682 = vpop.f32.mrf.mxu0
          %1683 = vmatprep.mubr.f32.mxu0 0.0
          %1684 = vmatmul.mubr.f32.gmra.mxu0 %v1190
          %v1685 = vpop.f32.mrf.mxu0
          %v1686 = vadd.f32 0.0, %v1685
          %v1687 = vpop.f32.mrf.mxu0
          %1688 = vmatprep.mubr.f32.mxu0 0.0
          %1689 = vmatmul.mubr.f32.gmra.mxu0 %v1193
          %v1690 = vpop.f32.mrf.mxu0
          %v1691 = vadd.f32 0.0, %v1690
          %v1692 = vpop.f32.mrf.mxu0
          %1693 = vmatprep.mubr.f32.mxu0 0.0
          %1694 = vmatmul.mubr.f32.gmra.mxu0 %v1196
          %v1695 = vpop.f32.mrf.mxu0
          %v1696 = vadd.f32 0.0, %v1695
          %v1697 = vpop.f32.mrf.mxu0
          %1698 = vmatprep.mubr.f32.mxu0 0.0
          %1699 = vmatmul.mubr.f32.gmra.mxu0 %v1199
          %v1700 = vpop.f32.mrf.mxu0
          %v1701 = vadd.f32 0.0, %v1700
          %v1702 = vpop.f32.mrf.mxu0
          %1703 = vmatprep.mubr.f32.mxu0 0.0
          %1704 = vmatmul.mubr.f32.gmra.mxu0 %v1202
          %v1705 = vpop.f32.mrf.mxu0
          %v1706 = vadd.f32 0.0, %v1705
          %v1707 = vpop.f32.mrf.mxu0
          %1708 = vmatprep.mubr.f32.mxu0 0.0
          %1709 = vmatmul.mubr.f32.gmra.mxu0 %v1205
          %v1710 = vpop.f32.mrf.mxu0
          %v1711 = vadd.f32 0.0, %v1710
          %v1712 = vpop.f32.mrf.mxu0
          %1713 = vmatprep.mubr.f32.mxu0 0.0
          %1714 = vmatmul.mubr.f32.gmra.mxu0 %v1208
          %v1715 = vpop.f32.mrf.mxu0
          %v1716 = vadd.f32 0.0, %v1715
          %v1717 = vpop.f32.mrf.mxu0
          %1718 = vmatprep.mubr.f32.mxu0 0.0
          %1719 = vmatmul.mubr.f32.gmra.mxu0 %v1211
          %v1720 = vpop.f32.mrf.mxu0
          %v1721 = vadd.f32 0.0, %v1720
          %v1722 = vpop.f32.mrf.mxu0
          %1723 = vmatprep.mubr.f32.mxu0 0.0
          %1724 = vmatmul.mubr.f32.gmra.mxu0 %v1214
          %v1725 = vpop.f32.mrf.mxu0
          %v1726 = vadd.f32 0.0, %v1725
          %v1727 = vpop.f32.mrf.mxu0
          %1728 = vmatprep.mubr.f32.mxu0 0.0
          %1729 = vmatmul.mubr.f32.gmra.mxu0 %v1217
          %v1730 = vpop.f32.mrf.mxu0
          %v1731 = vadd.f32 0.0, %v1730
          %v1732 = vpop.f32.mrf.mxu0
          %1733 = vmatprep.mubr.f32.mxu0 0.0
          %1734 = vmatmul.mubr.f32.gmra.mxu0 %v1220
          %v1735 = vpop.f32.mrf.mxu0
          %v1736 = vadd.f32 0.0, %v1735
          %v1737 = vpop.f32.mrf.mxu0
          %1738 = vmatprep.mubr.f32.mxu0 0.0
          %1739 = vmatmul.mubr.f32.gmra.mxu0 %v1223
          %v1740 = vpop.f32.mrf.mxu0
          %v1741 = vadd.f32 0.0, %v1740
          %v1742 = vpop.f32.mrf.mxu0
          %1743 = vmatprep.mubr.f32.mxu0 0.0
          %1744 = vmatmul.mubr.f32.gmra.mxu0 %v1226
          %v1745 = vpop.f32.mrf.mxu0
          %v1746 = vadd.f32 0.0, %v1745
          %v1747 = vpop.f32.mrf.mxu0
          %1748 = vmatprep.mubr.f32.mxu0 0.0
          %1749 = vmatmul.mubr.f32.gmra.mxu0 %v1229
          %v1750 = vpop.f32.mrf.mxu0
          %v1751 = vadd.f32 0.0, %v1750
          %v1752 = vpop.f32.mrf.mxu0
          %1753 = vmatprep.mubr.f32.mxu0 0.0
          %1754 = vmatmul.mubr.f32.gmra.mxu0 %v1232
          %v1755 = vpop.f32.mrf.mxu0
          %v1756 = vadd.f32 0.0, %v1755
          %v1757 = vpop.f32.mrf.mxu0
          %1758 = vmatprep.mubr.f32.mxu0 0.0
          %1759 = vmatmul.mubr.f32.gmra.mxu0 %v1235
          %v1760 = vpop.f32.mrf.mxu0
          %v1761 = vadd.f32 0.0, %v1760
          %v1762 = vpop.f32.mrf.mxu0
          %1763 = vmatprep.mubr.f32.mxu0 0.0
          %1764 = vmatmul.mubr.f32.gmra.mxu0 %v1238
          %v1765 = vpop.f32.mrf.mxu0
          %v1766 = vadd.f32 0.0, %v1765
          %v1767 = vpop.f32.mrf.mxu0
          %1768 = vmatprep.mubr.f32.mxu0 0.0
          %1769 = vmatmul.mubr.f32.gmra.mxu0 %v1241
          %v1770 = vpop.f32.mrf.mxu0
          %v1771 = vadd.f32 0.0, %v1770
          %v1772 = vpop.f32.mrf.mxu0
          %1773 = vmatprep.mubr.f32.mxu0 0.0
          %1774 = vmatmul.mubr.f32.gmra.mxu0 %v1244
          %v1775 = vpop.f32.mrf.mxu0
          %v1776 = vadd.f32 0.0, %v1775
          %v1777 = vpop.f32.mrf.mxu0
          %1778 = vmatprep.mubr.f32.mxu0 0.0
          %1779 = vmatmul.mubr.f32.gmra.mxu0 %v1247
          %v1780 = vpop.f32.mrf.mxu0
          %v1781 = vadd.f32 0.0, %v1780
          %v1782 = vpop.f32.mrf.mxu0
          %1783 = vmatprep.mubr.f32.mxu0 0.0
          %1784 = vmatmul.mubr.f32.gmra.mxu0 %v1250
          %v1785 = vpop.f32.mrf.mxu0
          %v1786 = vadd.f32 0.0, %v1785
          %v1787 = vpop.f32.mrf.mxu0
          %1788 = vmatprep.mubr.f32.mxu0 0.0
          %1789 = vmatmul.mubr.f32.gmra.mxu0 %v1253
          %v1790 = vpop.f32.mrf.mxu0
          %v1791 = vadd.f32 0.0, %v1790
          %v1792 = vpop.f32.mrf.mxu0
          %1793 = vmatprep.mubr.f32.mxu0 0.0
          %1794 = vmatmul.mubr.f32.gmra.mxu0 %v1256
          %v1795 = vpop.f32.mrf.mxu0
          %v1796 = vadd.f32 0.0, %v1795
          %v1797 = vpop.f32.mrf.mxu0
          %1798 = vmatprep.mubr.f32.mxu0 0.0
          %1799 = vmatmul.mubr.f32.gmra.mxu0 %v1259
          %v1800 = vpop.f32.mrf.mxu0
          %v1801 = vadd.f32 0.0, %v1800
          %v1802 = vpop.f32.mrf.mxu0
          %1803 = vmatprep.mubr.f32.mxu0 0.0
          %1804 = vmatmul.mubr.f32.gmra.mxu0 %v1262
          %v1805 = vpop.f32.mrf.mxu0
          %v1806 = vadd.f32 0.0, %v1805
          %v1807 = vpop.f32.mrf.mxu0
          %1808 = vmatprep.mubr.f32.mxu0 0.0
          %1809 = vmatmul.mubr.f32.gmra.mxu0 %v1265
          %v1810 = vpop.f32.mrf.mxu0
          %v1811 = vadd.f32 0.0, %v1810
          %v1812 = vpop.f32.mrf.mxu0
          %1813 = vmatprep.mubr.f32.mxu0 0.0
          %1814 = vmatmul.mubr.f32.gmra.mxu0 %v1268
          %v1815 = vpop.f32.mrf.mxu0
          %v1816 = vadd.f32 0.0, %v1815
          %v1817 = vpop.f32.mrf.mxu0
          %1818 = vmatprep.mubr.f32.mxu0 0.0
          %1819 = vmatmul.mubr.f32.gmra.mxu0 %v1271
          %v1820 = vpop.f32.mrf.mxu0
          %v1821 = vadd.f32 0.0, %v1820
          %v1822 = vpop.f32.mrf.mxu0
          %1823 = vmatprep.mubr.f32.mxu0 0.0
          %1824 = vmatmul.mubr.f32.gmra.mxu0 %v1274
          %v1825 = vpop.f32.mrf.mxu0
          %v1826 = vadd.f32 0.0, %v1825
          %v1827 = vpop.f32.mrf.mxu0
          %1828 = vmatprep.mubr.f32.mxu0 0.0
          %1829 = vmatmul.mubr.f32.gmra.mxu0 %v1277
          %v1830 = vpop.f32.mrf.mxu0
          %v1831 = vadd.f32 0.0, %v1830
          %v1832 = vpop.f32.mrf.mxu0
          %1833 = vmatprep.mubr.f32.mxu0 0.0
          %1834 = vmatmul.mubr.f32.gmra.mxu0 %v1280
          %v1835 = vpop.f32.mrf.mxu0
          %v1836 = vadd.f32 0.0, %v1835
          %v1837 = vpop.f32.mrf.mxu0
          %1838 = vmatprep.mubr.f32.mxu0 0.0
          %1839 = vmatmul.mubr.f32.gmra.mxu0 %v1283
          %v1840 = vpop.f32.mrf.mxu0
          %v1841 = vadd.f32 0.0, %v1840
          %v1842 = vpop.f32.mrf.mxu0
          %1843 = vmatprep.mubr.f32.mxu0 0.0
          %1844 = vmatmul.mubr.f32.gmra.mxu0 %v1286
          %v1845 = vpop.f32.mrf.mxu0
          %v1846 = vadd.f32 0.0, %v1845
          %v1847 = vpop.f32.mrf.mxu0
          %1848 = vmatprep.mubr.f32.mxu0 0.0
          %1849 = vmatmul.mubr.f32.gmra.mxu0 %v1289
          %v1850 = vpop.f32.mrf.mxu0
          %v1851 = vadd.f32 0.0, %v1850
          %v1852 = vpop.f32.mrf.mxu0
          %1853 = vmatprep.mubr.f32.mxu0 0.0
          %1854 = vmatmul.mubr.f32.gmra.mxu0 %v1292
          %v1855 = vpop.f32.mrf.mxu0
          %v1856 = vadd.f32 0.0, %v1855
          %v1857 = vpop.f32.mrf.mxu0
          %1858 = vmatprep.mubr.f32.mxu0 0.0
          %1859 = vmatmul.mubr.f32.gmra.mxu0 %v1295
          %v1860 = vpop.f32.mrf.mxu0
          %v1861 = vadd.f32 0.0, %v1860
          %v1862 = vpop.f32.mrf.mxu0
          %1863 = vmatprep.mubr.f32.mxu0 0.0
          %1864 = vmatmul.mubr.f32.gmra.mxu0 %v1298
          %v1865 = vpop.f32.mrf.mxu0
          %v1866 = vadd.f32 0.0, %v1865
          %v1867 = vpop.f32.mrf.mxu0
          %1868 = vmatprep.mubr.f32.mxu0 0.0
          %1869 = vmatmul.mubr.f32.gmra.mxu0 %v1301
          %v1870 = vpop.f32.mrf.mxu0
          %v1871 = vadd.f32 0.0, %v1870
          %v1872 = vpop.f32.mrf.mxu0
          %1873 = vmatprep.mubr.f32.mxu0 0.0
          %1874 = vmatmul.mubr.f32.gmra.mxu0 %v1304
          %v1875 = vpop.f32.mrf.mxu0
          %v1876 = vadd.f32 0.0, %v1875
          %v1877 = vpop.f32.mrf.mxu0
          %1878 = vmatprep.mubr.f32.mxu0 0.0
          %1879 = vmatmul.mubr.f32.gmra.mxu0 %v1307
          %v1880 = vpop.f32.mrf.mxu0
          %v1881 = vadd.f32 0.0, %v1880
          %v1882 = vpop.f32.mrf.mxu0
          %1883 = vmatprep.mubr.f32.mxu0 0.0
          %1884 = vmatmul.mubr.f32.gmra.mxu0 %v1310
          %v1885 = vpop.f32.mrf.mxu0
          %v1886 = vadd.f32 0.0, %v1885
          %v1887 = vpop.f32.mrf.mxu0
          %1888 = vmatprep.mubr.f32.mxu0 0.0
          %1889 = vmatmul.mubr.f32.gmra.mxu0 %v1313
          %v1890 = vpop.f32.mrf.mxu0
          %v1891 = vadd.f32 0.0, %v1890
          %v1892 = vpop.f32.mrf.mxu0
          %1893 = vmatprep.mubr.f32.mxu0 0.0
          %1894 = vmatmul.mubr.f32.gmra.mxu0 %v1316
          %v1895 = vpop.f32.mrf.mxu0
          %v1896 = vadd.f32 0.0, %v1895
          %v1897 = vpop.f32.mrf.mxu0
          %1898 = vmatprep.mubr.f32.mxu0 0.0
          %1899 = vmatmul.mubr.f32.gmra.mxu0 %v1319
          %v1900 = vpop.f32.mrf.mxu0
          %v1901 = vadd.f32 0.0, %v1900
          %v1902 = vpop.f32.mrf.mxu0
          %1903 = vmatprep.mubr.f32.mxu0 0.0
          %1904 = vmatmul.mubr.f32.gmra.mxu0 %v1322
          %v1905 = vpop.f32.mrf.mxu0
          %v1906 = vadd.f32 0.0, %v1905
          %v1907 = vpop.f32.mrf.mxu0
          %1908 = vmatprep.mubr.f32.mxu0 0.0
          %1909 = vmatmul.mubr.f32.gmra.mxu0 %v1325
          %v1910 = vpop.f32.mrf.mxu0
          %v1911 = vadd.f32 0.0, %v1910
          %v1912 = vpop.f32.mrf.mxu0
          %1913 = vmatprep.mubr.f32.mxu0 0.0
          %1914 = vmatmul.mubr.f32.gmra.mxu0 %v1328
          %v1915 = vpop.f32.mrf.mxu0
          %v1916 = vadd.f32 0.0, %v1915
          %v1917 = vpop.f32.mrf.mxu0
          %1918 = vmatprep.mubr.f32.mxu0 0.0
          %1919 = vmatmul.mubr.f32.gmra.mxu0 %v1331
          %v1920 = vpop.f32.mrf.mxu0
          %v1921 = vadd.f32 0.0, %v1920
          %v1922 = vpop.f32.mrf.mxu0
          %1923 = vmatprep.mubr.f32.mxu0 0.0
          %1924 = vmatmul.mubr.f32.gmra.mxu0 %v1334
          %v1925 = vpop.f32.mrf.mxu0
          %v1926 = vadd.f32 0.0, %v1925
          %v1927 = vpop.f32.mrf.mxu0
          %1928 = vmatprep.mubr.f32.mxu0 0.0
          %1929 = vmatmul.mubr.f32.gmra.mxu0 %v1337
          %v1930 = vpop.f32.mrf.mxu0
          %v1931 = vadd.f32 0.0, %v1930
          %v1932 = vpop.f32.mrf.mxu0
          %1933 = vmatprep.mubr.f32.mxu0 0.0
          %1934 = vmatmul.mubr.f32.gmra.mxu0 %v1340
          %v1935 = vpop.f32.mrf.mxu0
          %v1936 = vadd.f32 0.0, %v1935
          %v1937 = vpop.f32.mrf.mxu0
          %1938 = vmatprep.mubr.f32.mxu0 0.0
          %1939 = vmatmul.mubr.f32.gmra.mxu0 %v1343
          %v1940 = vpop.f32.mrf.mxu0
          %v1941 = vadd.f32 0.0, %v1940
          %v1942 = vpop.f32.mrf.mxu0
          %1943 = vmatprep.mubr.f32.mxu0 0.0
          %1944 = vmatmul.mubr.f32.gmra.mxu0 %v1346
          %v1945 = vpop.f32.mrf.mxu0
          %v1946 = vadd.f32 0.0, %v1945
          %v1947 = vpop.f32.mrf.mxu0
          %1948 = vmatprep.mubr.f32.mxu0 0.0
          %1949 = vmatmul.mubr.f32.gmra.mxu0 %v1349
          %v1950 = vpop.f32.mrf.mxu0
          %v1951 = vadd.f32 0.0, %v1950
          %v1952 = vpop.f32.mrf.mxu0
          %1953 = vmatprep.mubr.f32.mxu0 0.0
          %1954 = vmatmul.mubr.f32.gmra.mxu0 %v1352
          %v1955 = vpop.f32.mrf.mxu0
          %v1956 = vadd.f32 0.0, %v1955
          %v1957 = vpop.f32.mrf.mxu0
          %1958 = vmatprep.mubr.f32.mxu0 0.0
          %1959 = vmatmul.mubr.f32.gmra.mxu0 %v1355
          %v1960 = vpop.f32.mrf.mxu0
          %v1961 = vadd.f32 0.0, %v1960
          %v1962 = vpop.f32.mrf.mxu0
          %1963 = vmatprep.mubr.f32.mxu0 0.0
          %1964 = vmatmul.mubr.f32.gmra.mxu0 %v1358
          %v1965 = vpop.f32.mrf.mxu0
          %v1966 = vadd.f32 0.0, %v1965
          %v1967 = vpop.f32.mrf.mxu0
          %1968 = vmatprep.mubr.f32.mxu0 0.0
          %1969 = vmatmul.mubr.f32.gmra.mxu0 %v1361
          %v1970 = vpop.f32.mrf.mxu0
          %v1971 = vadd.f32 0.0, %v1970
          %v1972 = vpop.f32.mrf.mxu0
          %1973 = vmatprep.mubr.f32.mxu0 0.0
          %1974 = vmatmul.mubr.f32.gmra.mxu0 %v1364
          %v1975 = vpop.f32.mrf.mxu0
          %v1976 = vadd.f32 0.0, %v1975
          %v1977 = vpop.f32.mrf.mxu0
          %1978 = vmatprep.mubr.f32.mxu0 0.0
          %1979 = vmatmul.mubr.f32.gmra.mxu0 %v1367
          %v1980 = vpop.f32.mrf.mxu0
          %v1981 = vadd.f32 0.0, %v1980
          %v1982 = vpop.f32.mrf.mxu0
          %1983 = vmatprep.mubr.f32.mxu0 0.0
          %1984 = vmatmul.mubr.f32.gmra.mxu0 %v1370
          %v1985 = vpop.f32.mrf.mxu0
          %v1986 = vadd.f32 0.0, %v1985
          %v1987 = vpop.f32.mrf.mxu0
          %1988 = vmatprep.mubr.f32.mxu0 0.0
          %1989 = vmatmul.mubr.f32.gmra.mxu0 %v1373
          %v1990 = vpop.f32.mrf.mxu0
          %v1991 = vadd.f32 0.0, %v1990
          %v1992 = vpop.f32.mrf.mxu0
          %1993 = vmatprep.mubr.f32.mxu0 0.0
          %1994 = vmatmul.mubr.f32.gmra.mxu0 %v1376
          %v1995 = vpop.f32.mrf.mxu0
          %v1996 = vadd.f32 0.0, %v1995
          %v1997 = vpop.f32.mrf.mxu0
          %1998 = vmatprep.mubr.f32.mxu0 0.0
          %1999 = vmatmul.mubr.f32.gmra.mxu0 %v1379
          %v2000 = vpop.f32.mrf.mxu0
          %v2001 = vadd.f32 0.0, %v2000
          %v2002 = vpop.f32.mrf.mxu0
          %2003 = vmatprep.mubr.f32.mxu0 0.0
          %2004 = vmatmul.mubr.f32.gmra.mxu0 %v1382
          %v2005 = vpop.f32.mrf.mxu0
          %v2006 = vadd.f32 0.0, %v2005
          %v2007 = vpop.f32.mrf.mxu0
          %2008 = vmatprep.mubr.f32.mxu0 0.0
          %2009 = vmatmul.mubr.f32.gmra.mxu0 %v1385
          %v2010 = vpop.f32.mrf.mxu0
          %v2011 = vadd.f32 0.0, %v2010
          %v2012 = vpop.f32.mrf.mxu0
          %2013 = vmatprep.mubr.f32.mxu0 0.0
          %2014 = vmatmul.mubr.f32.gmra.mxu0 %v1388
          %v2015 = vpop.f32.mrf.mxu0
          %v2016 = vadd.f32 0.0, %v2015
          %v2017 = vpop.f32.mrf.mxu0
          %2018 = vmatprep.mubr.f32.mxu0 0.0
          %2019 = vmatmul.mubr.f32.gmra.mxu0 %v1391
          %v2020 = vpop.f32.mrf.mxu0
          %v2021 = vadd.f32 0.0, %v2020
          %v2022 = vpop.f32.mrf.mxu0
          %2023 = vmatprep.mubr.f32.mxu0 0.0
          %2024 = vmatmul.mubr.f32.gmra.mxu0 %v1394
          %v2025 = vpop.f32.mrf.mxu0
          %v2026 = vadd.f32 0.0, %v2025
          %v2027 = vpop.f32.mrf.mxu0
          %2028 = vmatprep.mubr.f32.mxu0 0.0
          %2029 = vmatmul.mubr.f32.gmra.mxu0 %v1397
          %v2030 = vpop.f32.mrf.mxu0
          %v2031 = vadd.f32 0.0, %v2030
          %v2032 = vpop.f32.mrf.mxu0
          %2033 = vmatprep.mubr.f32.mxu0 0.0
          %2034 = vmatmul.mubr.f32.gmra.mxu0 %v1400
          %v2035 = vpop.f32.mrf.mxu0
          %v2036 = vadd.f32 0.0, %v2035
          %v2037 = vpop.f32.mrf.mxu0
          %2038 = vmatprep.mubr.f32.mxu0 0.0
          %2039 = vmatmul.mubr.f32.gmra.mxu0 %v1403
          %v2040 = vpop.f32.mrf.mxu0
          %v2041 = vadd.f32 0.0, %v2040
          %v2042 = vpop.f32.mrf.mxu0
          %2043 = vmatprep.mubr.f32.mxu0 0.0
          %2044 = vmatmul.mubr.f32.gmra.mxu0 %v1406
          %v2045 = vpop.f32.mrf.mxu0
          %v2046 = vadd.f32 0.0, %v2045
          %v2047 = vpop.f32.mrf.mxu0
          %2048 = vmatprep.mubr.f32.mxu0 0.0
          %2049 = vmatmul.mubr.f32.gmra.mxu0 %v1409
          %v2050 = vpop.f32.mrf.mxu0
          %v2051 = vadd.f32 0.0, %v2050
          %v2052 = vpop.f32.mrf.mxu0
          %2053 = vmatprep.mubr.f32.mxu0 0.0
          %2054 = vmatmul.mubr.f32.gmra.mxu0 %v1412
          %v2055 = vpop.f32.mrf.mxu0
          %v2056 = vadd.f32 0.0, %v2055
          %v2057 = vpop.f32.mrf.mxu0
          %2058 = vmatprep.mubr.f32.mxu0 0.0
          %2059 = vmatmul.mubr.f32.gmra.mxu0 %v1415
          %v2060 = vpop.f32.mrf.mxu0
          %v2061 = vadd.f32 0.0, %v2060
          %v2062 = vpop.f32.mrf.mxu0
          %2063 = vmatprep.mubr.f32.mxu0 0.0
          %2064 = vmatmul.mubr.f32.gmra.mxu0 %v1418
          %v2065 = vpop.f32.mrf.mxu0
          %v2066 = vadd.f32 0.0, %v2065
          %v2067 = vpop.f32.mrf.mxu0
          %2068 = vmatprep.mubr.f32.mxu0 0.0
          %2069 = vmatmul.mubr.f32.gmra.mxu0 %v1421
          %v2070 = vpop.f32.mrf.mxu0
          %v2071 = vadd.f32 0.0, %v2070
          %v2072 = vpop.f32.mrf.mxu0
          %2073 = vmatprep.mubr.f32.mxu0 0.0
          %2074 = vmatmul.mubr.f32.gmra.mxu0 %v1424
          %v2075 = vpop.f32.mrf.mxu0
          %v2076 = vadd.f32 0.0, %v2075
          %v2077 = vpop.f32.mrf.mxu0
          %2078 = vmatprep.mubr.f32.mxu0 0.0
          %2079 = vmatmul.mubr.f32.gmra.mxu0 %v1427
          %v2080 = vpop.f32.mrf.mxu0
          %v2081 = vadd.f32 0.0, %v2080
          %v2082 = vpop.f32.mrf.mxu0
          %2083 = vmatprep.mubr.f32.mxu0 0.0
          %2084 = vmatmul.mubr.f32.gmra.mxu0 %v1430
          %v2085 = vpop.f32.mrf.mxu0
          %v2086 = vadd.f32 0.0, %v2085
          %v2087 = vpop.f32.mrf.mxu0
          %2088 = vmatprep.mubr.f32.mxu0 0.0
          %2089 = vmatmul.mubr.f32.gmra.mxu0 %v1433
          %v2090 = vpop.f32.mrf.mxu0
          %v2091 = vadd.f32 0.0, %v2090
          %v2092 = vpop.f32.mrf.mxu0
          %2093 = vmatprep.mubr.f32.mxu0 0.0
          %2094 = vmatmul.mubr.f32.gmra.mxu0 %v1436
          %v2095 = vpop.f32.mrf.mxu0
          %v2096 = vadd.f32 0.0, %v2095
          %v2097 = vpop.f32.mrf.mxu0
          %2098 = vmatprep.mubr.f32.mxu0 0.0
          %2099 = vmatmul.mubr.f32.gmra.mxu0 %v1439
          %v2100 = vpop.f32.mrf.mxu0
          %v2101 = vadd.f32 0.0, %v2100
          %v2102 = vpop.f32.mrf.mxu0
          %2103 = vmatprep.mubr.f32.mxu0 0.0
          %2104 = vmatmul.mubr.f32.gmra.mxu0 %v1442
          %v2105 = vpop.f32.mrf.mxu0
          %v2106 = vadd.f32 0.0, %v2105
          %v2107 = vpop.f32.mrf.mxu0
          %2108 = vmatprep.mubr.f32.mxu0 0.0
          %2109 = vmatmul.mubr.f32.gmra.mxu0 %v1445
          %v2110 = vpop.f32.mrf.mxu0
          %v2111 = vadd.f32 0.0, %v2110
          %v2112 = vpop.f32.mrf.mxu0
          %2113 = vmatprep.mubr.f32.mxu0 0.0
          %2114 = vmatmul.mubr.f32.gmra.mxu0 %v1448
          %v2115 = vpop.f32.mrf.mxu0
          %v2116 = vadd.f32 0.0, %v2115
          %v2117 = vpop.f32.mrf.mxu0
          %2118 = vmatprep.mubr.f32.mxu0 0.0
          %2119 = vmatmul.mubr.f32.gmra.mxu0 %v1451
          %v2120 = vpop.f32.mrf.mxu0
          %v2121 = vadd.f32 0.0, %v2120
          %v2122 = vpop.f32.mrf.mxu0
          %2123 = vmatprep.mubr.f32.mxu0 0.0
          %2124 = vmatmul.mubr.f32.gmra.mxu0 %v1454
          %v2125 = vpop.f32.mrf.mxu0
          %v2126 = vadd.f32 0.0, %v2125
          %v2127 = vpop.f32.mrf.mxu0
          %2128 = vmatprep.mubr.f32.mxu0 0.0
          %2129 = vmatmul.mubr.f32.gmra.mxu0 %v1457
          %v2130 = vpop.f32.mrf.mxu0
          %v2131 = vadd.f32 0.0, %v2130
          %v2132 = vpop.f32.mrf.mxu0
          %2133 = vmatprep.mubr.f32.mxu0 0.0
          %2134 = vmatmul.mubr.f32.gmra.mxu0 %v1460
          %v2135 = vpop.f32.mrf.mxu0
          %v2136 = vadd.f32 0.0, %v2135
          %v2137 = vpop.f32.mrf.mxu0
          %2138 = vmatprep.mubr.f32.mxu0 0.0
          %2139 = vmatmul.mubr.f32.gmra.mxu0 %v1463
          %v2140 = vpop.f32.mrf.mxu0
          %v2141 = vadd.f32 0.0, %v2140
          %v2142 = vpop.f32.mrf.mxu0
          %2143 = vmatprep.mubr.f32.mxu0 0.0
          %2144 = vmatmul.mubr.f32.gmra.mxu0 %v1466
          %v2145 = vpop.f32.mrf.mxu0
          %v2146 = vadd.f32 0.0, %v2145
          %v2147 = vpop.f32.mrf.mxu0
          %2148 = vmatprep.mubr.f32.mxu0 0.0
          %2149 = vmatmul.mubr.f32.gmra.mxu0 %v1469
          %v2150 = vpop.f32.mrf.mxu0
          %v2151 = vadd.f32 0.0, %v2150
          %v2152 = vpop.f32.mrf.mxu0
          %2153 = vmatprep.mubr.f32.mxu0 0.0
          %2154 = vmatmul.mubr.f32.gmra.mxu0 %v1472
          %v2155 = vpop.f32.mrf.mxu0
          %v2156 = vadd.f32 0.0, %v2155
          %v2157 = vpop.f32.mrf.mxu0
          %2158 = vmatprep.mubr.f32.mxu0 0.0
          %2159 = vmatmul.mubr.f32.gmra.mxu0 %v1475
          %v2160 = vpop.f32.mrf.mxu0
          %v2161 = vadd.f32 0.0, %v2160
          %v2162 = vpop.f32.mrf.mxu0
          %2163 = vmatprep.mubr.f32.mxu0 0.0
          %2164 = vmatmul.mubr.f32.gmra.mxu0 %v1478
          %v2165 = vpop.f32.mrf.mxu0
          %v2166 = vadd.f32 0.0, %v2165
          %v2167 = vpop.f32.mrf.mxu0
          %2168 = vmatprep.mubr.f32.mxu0 0.0
          %2169 = vmatmul.mubr.f32.gmra.mxu0 %v1481
          %v2170 = vpop.f32.mrf.mxu0
          %v2171 = vadd.f32 0.0, %v2170
          %v2172 = vpop.f32.mrf.mxu0
          %2173 = vmatprep.mubr.f32.mxu0 0.0
          %2174 = vmatmul.mubr.f32.gmra.mxu0 %v1484
          %v2175 = vpop.f32.mrf.mxu0
          %v2176 = vadd.f32 0.0, %v2175
          %v2177 = vpop.f32.mrf.mxu0
          %2178 = vmatprep.mubr.f32.mxu0 0.0
          %2179 = vmatmul.mubr.f32.gmra.mxu0 %v1487
          %v2180 = vpop.f32.mrf.mxu0
          %v2181 = vadd.f32 0.0, %v2180
          %v2182 = vpop.f32.mrf.mxu0
          %2183 = vmatprep.mubr.f32.mxu0 0.0
          %2184 = vmatmul.mubr.f32.gmra.mxu0 %v1490
          %v2185 = vpop.f32.mrf.mxu0
          %v2186 = vadd.f32 0.0, %v2185
          %v2187 = vpop.f32.mrf.mxu0
          %2188 = vmatprep.mubr.f32.mxu0 0.0
          %2189 = vmatmul.mubr.f32.gmra.mxu0 %v1493
          %v2190 = vpop.f32.mrf.mxu0
          %v2191 = vadd.f32 0.0, %v2190
          %v2192 = vpop.f32.mrf.mxu0
          %2193 = vmatprep.mubr.f32.mxu0 0.0
          %2194 = vmatmul.mubr.f32.gmra.mxu0 %v1496
          %v2195 = vpop.f32.mrf.mxu0
          %v2196 = vadd.f32 0.0, %v2195
          %v2197 = vpop.f32.mrf.mxu0
          %2198 = vmatprep.mubr.f32.mxu0 0.0
          %2199 = vmatmul.mubr.f32.gmra.mxu0 %v1499
          %v2200 = vpop.f32.mrf.mxu0
          %v2201 = vadd.f32 0.0, %v2200
          %v2202 = vpop.f32.mrf.mxu0
          %2203 = vmatprep.mubr.f32.mxu0 0.0
          %2204 = vmatmul.mubr.f32.gmra.mxu0 %v1502
          %v2205 = vpop.f32.mrf.mxu0
          %v2206 = vadd.f32 0.0, %v2205
          %v2207 = vpop.f32.mrf.mxu0
          %2208 = vdwg.mxu0
          %v2209 = vld [vmem:[#allocation2] sm:$0xff]
          %v2211 = vcombine.high %v2209, %v2209
          %v2213 = vunpack.c.l.s4 1966171168
          %v2214 = vunpack.c.0.s8 %v2213
          %v2215 = vlaneseq
          %v2216 = vshrl.u32 %v2215, 7
          %v2217 = vsub.s32 %v2214, %v2216
          %v2218 = vrot.slane %v2209, %v2217
          %v2220 = vunpack.c.l.s4 1966171168
          %v2221 = vunpack.c.0.s8 %v2220
          %v2222 = vlaneseq
          %v2223 = vshrl.u32 %v2222, 7
          %v2224 = vsub.s32 %v2221, %v2223
          %v2225 = vrot.slane %v2211, %v2224
          %v2226 = vcombine.high %v2218, %v2218
          %v2227 = vcombine.high %v2225, %v2225
          %v2229 = vunpack.c.l.s4 1966171168
          %v2230 = vunpack.c.0.s8 %v2229
          %v2231 = vlaneseq
          %v2232 = vshrl.u32 %v2231, 7
          %v2233 = vsub.s32 %v2230, %v2232
          %v2234 = vrot.slane %v2218, %v2233
          %v2236 = vunpack.c.l.s4 1966171168
          %v2237 = vunpack.c.0.s8 %v2236
          %v2238 = vlaneseq
          %v2239 = vshrl.u32 %v2238, 7
          %v2240 = vsub.s32 %v2237, %v2239
          %v2241 = vrot.slane %v2225, %v2240
          %v2243 = vunpack.c.l.s4 1966171168
          %v2244 = vunpack.c.0.s8 %v2243
          %v2245 = vlaneseq
          %v2246 = vshrl.u32 %v2245, 7
          %v2247 = vsub.s32 %v2244, %v2246
          %v2248 = vrot.slane %v2226, %v2247
          %v2250 = vunpack.c.l.s4 1966171168
          %v2251 = vunpack.c.0.s8 %v2250
          %v2252 = vlaneseq
          %v2253 = vshrl.u32 %v2252, 7
          %v2254 = vsub.s32 %v2251, %v2253
          %v2255 = vrot.slane %v2227, %v2254
          %v2256 = vcombine.high %v2234, %v2234
          %v2257 = vcombine.high %v2241, %v2241
          %v2258 = vcombine.high %v2248, %v2248
          %v2259 = vcombine.high %v2255, %v2255
          %v2260 = vlaneseq
          %v2261 = vshrl.u32 %v2260, 7
          %v2262 = vsub.s32 0, %v2261
          %v2263 = vrot.slane %v2234, %v2262
          %v2264 = vlaneseq
          %v2265 = vshrl.u32 %v2264, 7
          %v2266 = vsub.s32 0, %v2265
          %v2267 = vrot.slane %v2248, %v2266
          %v2268 = vlaneseq
          %v2269 = vshrl.u32 %v2268, 7
          %v2270 = vsub.s32 0, %v2269
          %v2271 = vrot.slane %v2256, %v2270
          %v2272 = vlaneseq
          %v2273 = vshrl.u32 %v2272, 7
          %v2274 = vsub.s32 0, %v2273
          %v2275 = vrot.slane %v2258, %v2274
          %v2276 = vlaneseq
          %v2277 = vshrl.u32 %v2276, 7
          %v2278 = vsub.s32 0, %v2277
          %v2279 = vrot.slane %v2241, %v2278
          %v2280 = vlaneseq
          %v2281 = vshrl.u32 %v2280, 7
          %v2282 = vsub.s32 0, %v2281
          %v2283 = vrot.slane %v2255, %v2282
          %v2284 = vlaneseq
          %v2285 = vshrl.u32 %v2284, 7
          %v2286 = vsub.s32 0, %v2285
          %v2287 = vrot.slane %v2257, %v2286
          %v2288 = vlaneseq
          %v2289 = vshrl.u32 %v2288, 7
          %v2290 = vsub.s32 0, %v2289
          %v2291 = vrot.slane %v2259, %v2290
          %v2300 = vadd.f32 %v1571, %v2263
          %v2301 = vadd.f32 %v1576, %v2263
          %v2302 = vadd.f32 %v1581, %v2263
          %v2303 = vadd.f32 %v1586, %v2263
          %v2304 = vadd.f32 %v1591, %v2263
          %v2305 = vadd.f32 %v1596, %v2263
          %v2306 = vadd.f32 %v1601, %v2263
          %v2307 = vadd.f32 %v1606, %v2263
          %v2308 = vadd.f32 %v1611, %v2263
          %v2309 = vadd.f32 %v1616, %v2263
          %v2310 = vadd.f32 %v1621, %v2263
          %v2311 = vadd.f32 %v1626, %v2263
          %v2312 = vadd.f32 %v1631, %v2263
          %v2313 = vadd.f32 %v1636, %v2263
          %v2314 = vadd.f32 %v1641, %v2263
          %v2315 = vadd.f32 %v1646, %v2263
          %v2316 = vadd.f32 %v1651, %v2267
          %v2317 = vadd.f32 %v1656, %v2267
          %v2318 = vadd.f32 %v1661, %v2267
          %v2319 = vadd.f32 %v1666, %v2267
          %v2320 = vadd.f32 %v1671, %v2267
          %v2321 = vadd.f32 %v1676, %v2267
          %v2322 = vadd.f32 %v1681, %v2267
          %v2323 = vadd.f32 %v1686, %v2267
          %v2324 = vadd.f32 %v1691, %v2267
          %v2325 = vadd.f32 %v1696, %v2267
          %v2326 = vadd.f32 %v1701, %v2267
          %v2327 = vadd.f32 %v1706, %v2267
          %v2328 = vadd.f32 %v1711, %v2267
          %v2329 = vadd.f32 %v1716, %v2267
          %v2330 = vadd.f32 %v1721, %v2267
          %v2331 = vadd.f32 %v1726, %v2267
          %v2332 = vadd.f32 %v1731, %v2271
          %v2333 = vadd.f32 %v1736, %v2271
          %v2334 = vadd.f32 %v1741, %v2271
          %v2335 = vadd.f32 %v1746, %v2271
          %v2336 = vadd.f32 %v1751, %v2271
          %v2337 = vadd.f32 %v1756, %v2271
          %v2338 = vadd.f32 %v1761, %v2271
          %v2339 = vadd.f32 %v1766, %v2271
          %v2340 = vadd.f32 %v1771, %v2271
          %v2341 = vadd.f32 %v1776, %v2271
          %v2342 = vadd.f32 %v1781, %v2271
          %v2343 = vadd.f32 %v1786, %v2271
          %v2344 = vadd.f32 %v1791, %v2271
          %v2345 = vadd.f32 %v1796, %v2271
          %v2346 = vadd.f32 %v1801, %v2271
          %v2347 = vadd.f32 %v1806, %v2271
          %v2348 = vadd.f32 %v1811, %v2275
          %v2349 = vadd.f32 %v1816, %v2275
          %v2350 = vadd.f32 %v1821, %v2275
          %v2351 = vadd.f32 %v1826, %v2275
          %v2352 = vadd.f32 %v1831, %v2275
          %v2353 = vadd.f32 %v1836, %v2275
          %v2354 = vadd.f32 %v1841, %v2275
          %v2355 = vadd.f32 %v1846, %v2275
          %v2356 = vadd.f32 %v1851, %v2275
          %v2357 = vadd.f32 %v1856, %v2275
          %v2358 = vadd.f32 %v1861, %v2275
          %v2359 = vadd.f32 %v1866, %v2275
          %v2360 = vadd.f32 %v1871, %v2275
          %v2361 = vadd.f32 %v1876, %v2275
          %v2362 = vadd.f32 %v1881, %v2275
          %v2363 = vadd.f32 %v1886, %v2275
          %v2364 = vadd.f32 %v1891, %v2279
          %v2365 = vadd.f32 %v1896, %v2279
          %v2366 = vadd.f32 %v1901, %v2279
          %v2367 = vadd.f32 %v1906, %v2279
          %v2368 = vadd.f32 %v1911, %v2279
          %v2369 = vadd.f32 %v1916, %v2279
          %v2370 = vadd.f32 %v1921, %v2279
          %v2371 = vadd.f32 %v1926, %v2279
          %v2372 = vadd.f32 %v1931, %v2279
          %v2373 = vadd.f32 %v1936, %v2279
          %v2374 = vadd.f32 %v1941, %v2279
          %v2375 = vadd.f32 %v1946, %v2279
          %v2376 = vadd.f32 %v1951, %v2279
          %v2377 = vadd.f32 %v1956, %v2279
          %v2378 = vadd.f32 %v1961, %v2279
          %v2379 = vadd.f32 %v1966, %v2279
          %v2380 = vadd.f32 %v1971, %v2283
          %v2381 = vadd.f32 %v1976, %v2283
          %v2382 = vadd.f32 %v1981, %v2283
          %v2383 = vadd.f32 %v1986, %v2283
          %v2384 = vadd.f32 %v1991, %v2283
          %v2385 = vadd.f32 %v1996, %v2283
          %v2386 = vadd.f32 %v2001, %v2283
          %v2387 = vadd.f32 %v2006, %v2283
          %v2388 = vadd.f32 %v2011, %v2283
          %v2389 = vadd.f32 %v2016, %v2283
          %v2390 = vadd.f32 %v2021, %v2283
          %v2391 = vadd.f32 %v2026, %v2283
          %v2392 = vadd.f32 %v2031, %v2283
          %v2393 = vadd.f32 %v2036, %v2283
          %v2394 = vadd.f32 %v2041, %v2283
          %v2395 = vadd.f32 %v2046, %v2283
          %v2396 = vadd.f32 %v2051, %v2287
          %v2397 = vadd.f32 %v2056, %v2287
          %v2398 = vadd.f32 %v2061, %v2287
          %v2399 = vadd.f32 %v2066, %v2287
          %v2400 = vadd.f32 %v2071, %v2287
          %v2401 = vadd.f32 %v2076, %v2287
          %v2402 = vadd.f32 %v2081, %v2287
          %v2403 = vadd.f32 %v2086, %v2287
          %v2404 = vadd.f32 %v2091, %v2287
          %v2405 = vadd.f32 %v2096, %v2287
          %v2406 = vadd.f32 %v2101, %v2287
          %v2407 = vadd.f32 %v2106, %v2287
          %v2408 = vadd.f32 %v2111, %v2287
          %v2409 = vadd.f32 %v2116, %v2287
          %v2410 = vadd.f32 %v2121, %v2287
          %v2411 = vadd.f32 %v2126, %v2287
          %v2412 = vadd.f32 %v2131, %v2291
          %v2413 = vadd.f32 %v2136, %v2291
          %v2414 = vadd.f32 %v2141, %v2291
          %v2415 = vadd.f32 %v2146, %v2291
          %v2416 = vadd.f32 %v2151, %v2291
          %v2417 = vadd.f32 %v2156, %v2291
          %v2418 = vadd.f32 %v2161, %v2291
          %v2419 = vadd.f32 %v2166, %v2291
          %v2420 = vadd.f32 %v2171, %v2291
          %v2421 = vadd.f32 %v2176, %v2291
          %v2422 = vadd.f32 %v2181, %v2291
          %v2423 = vadd.f32 %v2186, %v2291
          %v2424 = vadd.f32 %v2191, %v2291
          %v2425 = vadd.f32 %v2196, %v2291
          %v2426 = vadd.f32 %v2201, %v2291
          %v2427 = vadd.f32 %v2206, %v2291
          %v2428 = vtanh.pop %v2300
          %v2429 = vtanh.pop %v2301
          %v2430 = vtanh.pop %v2302
          %v2431 = vtanh.pop %v2303
          %v2432 = vtanh.pop %v2304
          %v2433 = vtanh.pop %v2305
          %v2434 = vtanh.pop %v2306
          %v2435 = vtanh.pop %v2307
          %v2436 = vtanh.pop %v2308
          %v2437 = vtanh.pop %v2309
          %v2438 = vtanh.pop %v2310
          %v2439 = vtanh.pop %v2311
          %v2440 = vtanh.pop %v2312
          %v2441 = vtanh.pop %v2313
          %v2442 = vtanh.pop %v2314
          %v2443 = vtanh.pop %v2315
          %v2444 = vtanh.pop %v2316
          %v2445 = vtanh.pop %v2317
          %v2446 = vtanh.pop %v2318
          %v2447 = vtanh.pop %v2319
          %v2448 = vtanh.pop %v2320
          %v2449 = vtanh.pop %v2321
          %v2450 = vtanh.pop %v2322
          %v2451 = vtanh.pop %v2323
          %v2452 = vtanh.pop %v2324
          %v2453 = vtanh.pop %v2325
          %v2454 = vtanh.pop %v2326
          %v2455 = vtanh.pop %v2327
          %v2456 = vtanh.pop %v2328
          %v2457 = vtanh.pop %v2329
          %v2458 = vtanh.pop %v2330
          %v2459 = vtanh.pop %v2331
          %v2460 = vtanh.pop %v2332
          %v2461 = vtanh.pop %v2333
          %v2462 = vtanh.pop %v2334
          %v2463 = vtanh.pop %v2335
          %v2464 = vtanh.pop %v2336
          %v2465 = vtanh.pop %v2337
          %v2466 = vtanh.pop %v2338
          %v2467 = vtanh.pop %v2339
          %v2468 = vtanh.pop %v2340
          %v2469 = vtanh.pop %v2341
          %v2470 = vtanh.pop %v2342
          %v2471 = vtanh.pop %v2343
          %v2472 = vtanh.pop %v2344
          %v2473 = vtanh.pop %v2345
          %v2474 = vtanh.pop %v2346
          %v2475 = vtanh.pop %v2347
          %v2476 = vtanh.pop %v2348
          %v2477 = vtanh.pop %v2349
          %v2478 = vtanh.pop %v2350
          %v2479 = vtanh.pop %v2351
          %v2480 = vtanh.pop %v2352
          %v2481 = vtanh.pop %v2353
          %v2482 = vtanh.pop %v2354
          %v2483 = vtanh.pop %v2355
          %v2484 = vtanh.pop %v2356
          %v2485 = vtanh.pop %v2357
          %v2486 = vtanh.pop %v2358
          %v2487 = vtanh.pop %v2359
          %v2488 = vtanh.pop %v2360
          %v2489 = vtanh.pop %v2361
          %v2490 = vtanh.pop %v2362
          %v2491 = vtanh.pop %v2363
          %v2492 = vtanh.pop %v2364
          %v2493 = vtanh.pop %v2365
          %v2494 = vtanh.pop %v2366
          %v2495 = vtanh.pop %v2367
          %v2496 = vtanh.pop %v2368
          %v2497 = vtanh.pop %v2369
          %v2498 = vtanh.pop %v2370
          %v2499 = vtanh.pop %v2371
          %v2500 = vtanh.pop %v2372
          %v2501 = vtanh.pop %v2373
          %v2502 = vtanh.pop %v2374
          %v2503 = vtanh.pop %v2375
          %v2504 = vtanh.pop %v2376
          %v2505 = vtanh.pop %v2377
          %v2506 = vtanh.pop %v2378
          %v2507 = vtanh.pop %v2379
          %v2508 = vtanh.pop %v2380
          %v2509 = vtanh.pop %v2381
          %v2510 = vtanh.pop %v2382
          %v2511 = vtanh.pop %v2383
          %v2512 = vtanh.pop %v2384
          %v2513 = vtanh.pop %v2385
          %v2514 = vtanh.pop %v2386
          %v2515 = vtanh.pop %v2387
          %v2516 = vtanh.pop %v2388
          %v2517 = vtanh.pop %v2389
          %v2518 = vtanh.pop %v2390
          %v2519 = vtanh.pop %v2391
          %v2520 = vtanh.pop %v2392
          %v2521 = vtanh.pop %v2393
          %v2522 = vtanh.pop %v2394
          %v2523 = vtanh.pop %v2395
          %v2524 = vtanh.pop %v2396
          %v2525 = vtanh.pop %v2397
          %v2526 = vtanh.pop %v2398
          %v2527 = vtanh.pop %v2399
          %v2528 = vtanh.pop %v2400
          %v2529 = vtanh.pop %v2401
          %v2530 = vtanh.pop %v2402
          %v2531 = vtanh.pop %v2403
          %v2532 = vtanh.pop %v2404
          %v2533 = vtanh.pop %v2405
          %v2534 = vtanh.pop %v2406
          %v2535 = vtanh.pop %v2407
          %v2536 = vtanh.pop %v2408
          %v2537 = vtanh.pop %v2409
          %v2538 = vtanh.pop %v2410
          %v2539 = vtanh.pop %v2411
          %v2540 = vtanh.pop %v2412
          %v2541 = vtanh.pop %v2413
          %v2542 = vtanh.pop %v2414
          %v2543 = vtanh.pop %v2415
          %v2544 = vtanh.pop %v2416
          %v2545 = vtanh.pop %v2417
          %v2546 = vtanh.pop %v2418
          %v2547 = vtanh.pop %v2419
          %v2548 = vtanh.pop %v2420
          %v2549 = vtanh.pop %v2421
          %v2550 = vtanh.pop %v2422
          %v2551 = vtanh.pop %v2423
          %v2552 = vtanh.pop %v2424
          %v2553 = vtanh.pop %v2425
          %v2554 = vtanh.pop %v2426
          %v2555 = vtanh.pop %v2427
          %v2556 = vld [vmem:[%s7] sm:$0x1]
          %v2558 = vlaneseq
          %v2559 = vshrl.u32 %v2558, 7
          %v2560 = vsub.s32 0, %v2559
          %v2561 = vrot.slane %v2556, %v2560
          %v2563 = vmul.f32 %v2428, %v2561
          %v2564 = vmul.f32 %v2429, %v2561
          %v2565 = vmul.f32 %v2430, %v2561
          %v2566 = vmul.f32 %v2431, %v2561
          %v2567 = vmul.f32 %v2432, %v2561
          %v2568 = vmul.f32 %v2433, %v2561
          %v2569 = vmul.f32 %v2434, %v2561
          %v2570 = vmul.f32 %v2435, %v2561
          %v2571 = vmul.f32 %v2436, %v2561
          %v2572 = vmul.f32 %v2437, %v2561
          %v2573 = vmul.f32 %v2438, %v2561
          %v2574 = vmul.f32 %v2439, %v2561
          %v2575 = vmul.f32 %v2440, %v2561
          %v2576 = vmul.f32 %v2441, %v2561
          %v2577 = vmul.f32 %v2442, %v2561
          %v2578 = vmul.f32 %v2443, %v2561
          %v2579 = vmul.f32 %v2444, %v2561
          %v2580 = vmul.f32 %v2445, %v2561
          %v2581 = vmul.f32 %v2446, %v2561
          %v2582 = vmul.f32 %v2447, %v2561
          %v2583 = vmul.f32 %v2448, %v2561
          %v2584 = vmul.f32 %v2449, %v2561
          %v2585 = vmul.f32 %v2450, %v2561
          %v2586 = vmul.f32 %v2451, %v2561
          %v2587 = vmul.f32 %v2452, %v2561
          %v2588 = vmul.f32 %v2453, %v2561
          %v2589 = vmul.f32 %v2454, %v2561
          %v2590 = vmul.f32 %v2455, %v2561
          %v2591 = vmul.f32 %v2456, %v2561
          %v2592 = vmul.f32 %v2457, %v2561
          %v2593 = vmul.f32 %v2458, %v2561
          %v2594 = vmul.f32 %v2459, %v2561
          %v2595 = vmul.f32 %v2460, %v2561
          %v2596 = vmul.f32 %v2461, %v2561
          %v2597 = vmul.f32 %v2462, %v2561
          %v2598 = vmul.f32 %v2463, %v2561
          %v2599 = vmul.f32 %v2464, %v2561
          %v2600 = vmul.f32 %v2465, %v2561
          %v2601 = vmul.f32 %v2466, %v2561
          %v2602 = vmul.f32 %v2467, %v2561
          %v2603 = vmul.f32 %v2468, %v2561
          %v2604 = vmul.f32 %v2469, %v2561
          %v2605 = vmul.f32 %v2470, %v2561
          %v2606 = vmul.f32 %v2471, %v2561
          %v2607 = vmul.f32 %v2472, %v2561
          %v2608 = vmul.f32 %v2473, %v2561
          %v2609 = vmul.f32 %v2474, %v2561
          %v2610 = vmul.f32 %v2475, %v2561
          %v2611 = vmul.f32 %v2476, %v2561
          %v2612 = vmul.f32 %v2477, %v2561
          %v2613 = vmul.f32 %v2478, %v2561
          %v2614 = vmul.f32 %v2479, %v2561
          %v2615 = vmul.f32 %v2480, %v2561
          %v2616 = vmul.f32 %v2481, %v2561
          %v2617 = vmul.f32 %v2482, %v2561
          %v2618 = vmul.f32 %v2483, %v2561
          %v2619 = vmul.f32 %v2484, %v2561
          %v2620 = vmul.f32 %v2485, %v2561
          %v2621 = vmul.f32 %v2486, %v2561
          %v2622 = vmul.f32 %v2487, %v2561
          %v2623 = vmul.f32 %v2488, %v2561
          %v2624 = vmul.f32 %v2489, %v2561
          %v2625 = vmul.f32 %v2490, %v2561
          %v2626 = vmul.f32 %v2491, %v2561
          %v2627 = vmul.f32 %v2492, %v2561
          %v2628 = vmul.f32 %v2493, %v2561
          %v2629 = vmul.f32 %v2494, %v2561
          %v2630 = vmul.f32 %v2495, %v2561
          %v2631 = vmul.f32 %v2496, %v2561
          %v2632 = vmul.f32 %v2497, %v2561
          %v2633 = vmul.f32 %v2498, %v2561
          %v2634 = vmul.f32 %v2499, %v2561
          %v2635 = vmul.f32 %v2500, %v2561
          %v2636 = vmul.f32 %v2501, %v2561
          %v2637 = vmul.f32 %v2502, %v2561
          %v2638 = vmul.f32 %v2503, %v2561
          %v2639 = vmul.f32 %v2504, %v2561
          %v2640 = vmul.f32 %v2505, %v2561
          %v2641 = vmul.f32 %v2506, %v2561
          %v2642 = vmul.f32 %v2507, %v2561
          %v2643 = vmul.f32 %v2508, %v2561
          %v2644 = vmul.f32 %v2509, %v2561
          %v2645 = vmul.f32 %v2510, %v2561
          %v2646 = vmul.f32 %v2511, %v2561
          %v2647 = vmul.f32 %v2512, %v2561
          %v2648 = vmul.f32 %v2513, %v2561
          %v2649 = vmul.f32 %v2514, %v2561
          %v2650 = vmul.f32 %v2515, %v2561
          %v2651 = vmul.f32 %v2516, %v2561
          %v2652 = vmul.f32 %v2517, %v2561
          %v2653 = vmul.f32 %v2518, %v2561
          %v2654 = vmul.f32 %v2519, %v2561
          %v2655 = vmul.f32 %v2520, %v2561
          %v2656 = vmul.f32 %v2521, %v2561
          %v2657 = vmul.f32 %v2522, %v2561
          %v2658 = vmul.f32 %v2523, %v2561
          %v2659 = vmul.f32 %v2524, %v2561
          %v2660 = vmul.f32 %v2525, %v2561
          %v2661 = vmul.f32 %v2526, %v2561
          %v2662 = vmul.f32 %v2527, %v2561
          %v2663 = vmul.f32 %v2528, %v2561
          %v2664 = vmul.f32 %v2529, %v2561
          %v2665 = vmul.f32 %v2530, %v2561
          %v2666 = vmul.f32 %v2531, %v2561
          %v2667 = vmul.f32 %v2532, %v2561
          %v2668 = vmul.f32 %v2533, %v2561
          %v2669 = vmul.f32 %v2534, %v2561
          %v2670 = vmul.f32 %v2535, %v2561
          %v2671 = vmul.f32 %v2536, %v2561
          %v2672 = vmul.f32 %v2537, %v2561
          %v2673 = vmul.f32 %v2538, %v2561
          %v2674 = vmul.f32 %v2539, %v2561
          %v2675 = vmul.f32 %v2540, %v2561
          %v2676 = vmul.f32 %v2541, %v2561
          %v2677 = vmul.f32 %v2542, %v2561
          %v2678 = vmul.f32 %v2543, %v2561
          %v2679 = vmul.f32 %v2544, %v2561
          %v2680 = vmul.f32 %v2545, %v2561
          %v2681 = vmul.f32 %v2546, %v2561
          %v2682 = vmul.f32 %v2547, %v2561
          %v2683 = vmul.f32 %v2548, %v2561
          %v2684 = vmul.f32 %v2549, %v2561
          %v2685 = vmul.f32 %v2550, %v2561
          %v2686 = vmul.f32 %v2551, %v2561
          %v2687 = vmul.f32 %v2552, %v2561
          %v2688 = vmul.f32 %v2553, %v2561
          %v2689 = vmul.f32 %v2554, %v2561
          %v2690 = vmul.f32 %v2555, %v2561
          %v2691 = vsel %vm1119, %v2563, 0.0
          %2692 = vadd.xlane.f32.xlu0 %v2691
          %v2693 = vpop.xlane.xlu0 %2692
          %v2694 = vsel %vm1119, %v2564, 0.0
          %2695 = vadd.xlane.f32.xlu0 %v2694
          %v2696 = vpop.xlane.xlu0 %2695
          %v2697 = vsel %vm1119, %v2565, 0.0
          %2698 = vadd.xlane.f32.xlu0 %v2697
          %v2699 = vpop.xlane.xlu0 %2698
          %v2700 = vsel %vm1119, %v2566, 0.0
          %2701 = vadd.xlane.f32.xlu0 %v2700
          %v2702 = vpop.xlane.xlu0 %2701
          %v2703 = vsel %vm1119, %v2567, 0.0
          %2704 = vadd.xlane.f32.xlu0 %v2703
          %v2705 = vpop.xlane.xlu0 %2704
          %v2706 = vsel %vm1119, %v2568, 0.0
          %2707 = vadd.xlane.f32.xlu0 %v2706
          %v2708 = vpop.xlane.xlu0 %2707
          %v2709 = vsel %vm1119, %v2569, 0.0
          %2710 = vadd.xlane.f32.xlu0 %v2709
          %v2711 = vpop.xlane.xlu0 %2710
          %v2712 = vsel %vm1119, %v2570, 0.0
          %2713 = vadd.xlane.f32.xlu0 %v2712
          %v2714 = vpop.xlane.xlu0 %2713
          %v2715 = vsel %vm1119, %v2571, 0.0
          %2716 = vadd.xlane.f32.xlu0 %v2715
          %v2717 = vpop.xlane.xlu0 %2716
          %v2718 = vsel %vm1119, %v2572, 0.0
          %2719 = vadd.xlane.f32.xlu0 %v2718
          %v2720 = vpop.xlane.xlu0 %2719
          %v2721 = vsel %vm1119, %v2573, 0.0
          %2722 = vadd.xlane.f32.xlu0 %v2721
          %v2723 = vpop.xlane.xlu0 %2722
          %v2724 = vsel %vm1119, %v2574, 0.0
          %2725 = vadd.xlane.f32.xlu0 %v2724
          %v2726 = vpop.xlane.xlu0 %2725
          %v2727 = vsel %vm1119, %v2575, 0.0
          %2728 = vadd.xlane.f32.xlu0 %v2727
          %v2729 = vpop.xlane.xlu0 %2728
          %v2730 = vsel %vm1119, %v2576, 0.0
          %2731 = vadd.xlane.f32.xlu0 %v2730
          %v2732 = vpop.xlane.xlu0 %2731
          %v2733 = vsel %vm1119, %v2577, 0.0
          %2734 = vadd.xlane.f32.xlu0 %v2733
          %v2735 = vpop.xlane.xlu0 %2734
          %v2736 = vsel %vm1119, %v2578, 0.0
          %2737 = vadd.xlane.f32.xlu0 %v2736
          %v2738 = vpop.xlane.xlu0 %2737
          %v2739 = vsel %vm1119, %v2579, 0.0
          %2740 = vadd.xlane.f32.xlu0 %v2739
          %v2741 = vpop.xlane.xlu0 %2740
          %v2742 = vsel %vm1119, %v2580, 0.0
          %2743 = vadd.xlane.f32.xlu0 %v2742
          %v2744 = vpop.xlane.xlu0 %2743
          %v2745 = vsel %vm1119, %v2581, 0.0
          %2746 = vadd.xlane.f32.xlu0 %v2745
          %v2747 = vpop.xlane.xlu0 %2746
          %v2748 = vsel %vm1119, %v2582, 0.0
          %2749 = vadd.xlane.f32.xlu0 %v2748
          %v2750 = vpop.xlane.xlu0 %2749
          %v2751 = vsel %vm1119, %v2583, 0.0
          %2752 = vadd.xlane.f32.xlu0 %v2751
          %v2753 = vpop.xlane.xlu0 %2752
          %v2754 = vsel %vm1119, %v2584, 0.0
          %2755 = vadd.xlane.f32.xlu0 %v2754
          %v2756 = vpop.xlane.xlu0 %2755
          %v2757 = vsel %vm1119, %v2585, 0.0
          %2758 = vadd.xlane.f32.xlu0 %v2757
          %v2759 = vpop.xlane.xlu0 %2758
          %v2760 = vsel %vm1119, %v2586, 0.0
          %2761 = vadd.xlane.f32.xlu0 %v2760
          %v2762 = vpop.xlane.xlu0 %2761
          %v2763 = vsel %vm1119, %v2587, 0.0
          %2764 = vadd.xlane.f32.xlu0 %v2763
          %v2765 = vpop.xlane.xlu0 %2764
          %v2766 = vsel %vm1119, %v2588, 0.0
          %2767 = vadd.xlane.f32.xlu0 %v2766
          %v2768 = vpop.xlane.xlu0 %2767
          %v2769 = vsel %vm1119, %v2589, 0.0
          %2770 = vadd.xlane.f32.xlu0 %v2769
          %v2771 = vpop.xlane.xlu0 %2770
          %v2772 = vsel %vm1119, %v2590, 0.0
          %2773 = vadd.xlane.f32.xlu0 %v2772
          %v2774 = vpop.xlane.xlu0 %2773
          %v2775 = vsel %vm1119, %v2591, 0.0
          %2776 = vadd.xlane.f32.xlu0 %v2775
          %v2777 = vpop.xlane.xlu0 %2776
          %v2778 = vsel %vm1119, %v2592, 0.0
          %2779 = vadd.xlane.f32.xlu0 %v2778
          %v2780 = vpop.xlane.xlu0 %2779
          %v2781 = vsel %vm1119, %v2593, 0.0
          %2782 = vadd.xlane.f32.xlu0 %v2781
          %v2783 = vpop.xlane.xlu0 %2782
          %v2784 = vsel %vm1119, %v2594, 0.0
          %2785 = vadd.xlane.f32.xlu0 %v2784
          %v2786 = vpop.xlane.xlu0 %2785
          %v2787 = vsel %vm1119, %v2595, 0.0
          %2788 = vadd.xlane.f32.xlu0 %v2787
          %v2789 = vpop.xlane.xlu0 %2788
          %v2790 = vsel %vm1119, %v2596, 0.0
          %2791 = vadd.xlane.f32.xlu0 %v2790
          %v2792 = vpop.xlane.xlu0 %2791
          %v2793 = vsel %vm1119, %v2597, 0.0
          %2794 = vadd.xlane.f32.xlu0 %v2793
          %v2795 = vpop.xlane.xlu0 %2794
          %v2796 = vsel %vm1119, %v2598, 0.0
          %2797 = vadd.xlane.f32.xlu0 %v2796
          %v2798 = vpop.xlane.xlu0 %2797
          %v2799 = vsel %vm1119, %v2599, 0.0
          %2800 = vadd.xlane.f32.xlu0 %v2799
          %v2801 = vpop.xlane.xlu0 %2800
          %v2802 = vsel %vm1119, %v2600, 0.0
          %2803 = vadd.xlane.f32.xlu0 %v2802
          %v2804 = vpop.xlane.xlu0 %2803
          %v2805 = vsel %vm1119, %v2601, 0.0
          %2806 = vadd.xlane.f32.xlu0 %v2805
          %v2807 = vpop.xlane.xlu0 %2806
          %v2808 = vsel %vm1119, %v2602, 0.0
          %2809 = vadd.xlane.f32.xlu0 %v2808
          %v2810 = vpop.xlane.xlu0 %2809
          %v2811 = vsel %vm1119, %v2603, 0.0
          %2812 = vadd.xlane.f32.xlu0 %v2811
          %v2813 = vpop.xlane.xlu0 %2812
          %v2814 = vsel %vm1119, %v2604, 0.0
          %2815 = vadd.xlane.f32.xlu0 %v2814
          %v2816 = vpop.xlane.xlu0 %2815
          %v2817 = vsel %vm1119, %v2605, 0.0
          %2818 = vadd.xlane.f32.xlu0 %v2817
          %v2819 = vpop.xlane.xlu0 %2818
          %v2820 = vsel %vm1119, %v2606, 0.0
          %2821 = vadd.xlane.f32.xlu0 %v2820
          %v2822 = vpop.xlane.xlu0 %2821
          %v2823 = vsel %vm1119, %v2607, 0.0
          %2824 = vadd.xlane.f32.xlu0 %v2823
          %v2825 = vpop.xlane.xlu0 %2824
          %v2826 = vsel %vm1119, %v2608, 0.0
          %2827 = vadd.xlane.f32.xlu0 %v2826
          %v2828 = vpop.xlane.xlu0 %2827
          %v2829 = vsel %vm1119, %v2609, 0.0
          %2830 = vadd.xlane.f32.xlu0 %v2829
          %v2831 = vpop.xlane.xlu0 %2830
          %v2832 = vsel %vm1119, %v2610, 0.0
          %2833 = vadd.xlane.f32.xlu0 %v2832
          %v2834 = vpop.xlane.xlu0 %2833
          %v2835 = vsel %vm1119, %v2611, 0.0
          %2836 = vadd.xlane.f32.xlu0 %v2835
          %v2837 = vpop.xlane.xlu0 %2836
          %v2838 = vsel %vm1119, %v2612, 0.0
          %2839 = vadd.xlane.f32.xlu0 %v2838
          %v2840 = vpop.xlane.xlu0 %2839
          %v2841 = vsel %vm1119, %v2613, 0.0
          %2842 = vadd.xlane.f32.xlu0 %v2841
          %v2843 = vpop.xlane.xlu0 %2842
          %v2844 = vsel %vm1119, %v2614, 0.0
          %2845 = vadd.xlane.f32.xlu0 %v2844
          %v2846 = vpop.xlane.xlu0 %2845
          %v2847 = vsel %vm1119, %v2615, 0.0
          %2848 = vadd.xlane.f32.xlu0 %v2847
          %v2849 = vpop.xlane.xlu0 %2848
          %v2850 = vsel %vm1119, %v2616, 0.0
          %2851 = vadd.xlane.f32.xlu0 %v2850
          %v2852 = vpop.xlane.xlu0 %2851
          %v2853 = vsel %vm1119, %v2617, 0.0
          %2854 = vadd.xlane.f32.xlu0 %v2853
          %v2855 = vpop.xlane.xlu0 %2854
          %v2856 = vsel %vm1119, %v2618, 0.0
          %2857 = vadd.xlane.f32.xlu0 %v2856
          %v2858 = vpop.xlane.xlu0 %2857
          %v2859 = vsel %vm1119, %v2619, 0.0
          %2860 = vadd.xlane.f32.xlu0 %v2859
          %v2861 = vpop.xlane.xlu0 %2860
          %v2862 = vsel %vm1119, %v2620, 0.0
          %2863 = vadd.xlane.f32.xlu0 %v2862
          %v2864 = vpop.xlane.xlu0 %2863
          %v2865 = vsel %vm1119, %v2621, 0.0
          %2866 = vadd.xlane.f32.xlu0 %v2865
          %v2867 = vpop.xlane.xlu0 %2866
          %v2868 = vsel %vm1119, %v2622, 0.0
          %2869 = vadd.xlane.f32.xlu0 %v2868
          %v2870 = vpop.xlane.xlu0 %2869
          %v2871 = vsel %vm1119, %v2623, 0.0
          %2872 = vadd.xlane.f32.xlu0 %v2871
          %v2873 = vpop.xlane.xlu0 %2872
          %v2874 = vsel %vm1119, %v2624, 0.0
          %2875 = vadd.xlane.f32.xlu0 %v2874
          %v2876 = vpop.xlane.xlu0 %2875
          %v2877 = vsel %vm1119, %v2625, 0.0
          %2878 = vadd.xlane.f32.xlu0 %v2877
          %v2879 = vpop.xlane.xlu0 %2878
          %v2880 = vsel %vm1119, %v2626, 0.0
          %2881 = vadd.xlane.f32.xlu0 %v2880
          %v2882 = vpop.xlane.xlu0 %2881
          %v2883 = vsel %vm1119, %v2627, 0.0
          %2884 = vadd.xlane.f32.xlu0 %v2883
          %v2885 = vpop.xlane.xlu0 %2884
          %v2886 = vsel %vm1119, %v2628, 0.0
          %2887 = vadd.xlane.f32.xlu0 %v2886
          %v2888 = vpop.xlane.xlu0 %2887
          %v2889 = vsel %vm1119, %v2629, 0.0
          %2890 = vadd.xlane.f32.xlu0 %v2889
          %v2891 = vpop.xlane.xlu0 %2890
          %v2892 = vsel %vm1119, %v2630, 0.0
          %2893 = vadd.xlane.f32.xlu0 %v2892
          %v2894 = vpop.xlane.xlu0 %2893
          %v2895 = vsel %vm1119, %v2631, 0.0
          %2896 = vadd.xlane.f32.xlu0 %v2895
          %v2897 = vpop.xlane.xlu0 %2896
          %v2898 = vsel %vm1119, %v2632, 0.0
          %2899 = vadd.xlane.f32.xlu0 %v2898
          %v2900 = vpop.xlane.xlu0 %2899
          %v2901 = vsel %vm1119, %v2633, 0.0
          %2902 = vadd.xlane.f32.xlu0 %v2901
          %v2903 = vpop.xlane.xlu0 %2902
          %v2904 = vsel %vm1119, %v2634, 0.0
          %2905 = vadd.xlane.f32.xlu0 %v2904
          %v2906 = vpop.xlane.xlu0 %2905
          %v2907 = vsel %vm1119, %v2635, 0.0
          %2908 = vadd.xlane.f32.xlu0 %v2907
          %v2909 = vpop.xlane.xlu0 %2908
          %v2910 = vsel %vm1119, %v2636, 0.0
          %2911 = vadd.xlane.f32.xlu0 %v2910
          %v2912 = vpop.xlane.xlu0 %2911
          %v2913 = vsel %vm1119, %v2637, 0.0
          %2914 = vadd.xlane.f32.xlu0 %v2913
          %v2915 = vpop.xlane.xlu0 %2914
          %v2916 = vsel %vm1119, %v2638, 0.0
          %2917 = vadd.xlane.f32.xlu0 %v2916
          %v2918 = vpop.xlane.xlu0 %2917
          %v2919 = vsel %vm1119, %v2639, 0.0
          %2920 = vadd.xlane.f32.xlu0 %v2919
          %v2921 = vpop.xlane.xlu0 %2920
          %v2922 = vsel %vm1119, %v2640, 0.0
          %2923 = vadd.xlane.f32.xlu0 %v2922
          %v2924 = vpop.xlane.xlu0 %2923
          %v2925 = vsel %vm1119, %v2641, 0.0
          %2926 = vadd.xlane.f32.xlu0 %v2925
          %v2927 = vpop.xlane.xlu0 %2926
          %v2928 = vsel %vm1119, %v2642, 0.0
          %2929 = vadd.xlane.f32.xlu0 %v2928
          %v2930 = vpop.xlane.xlu0 %2929
          %v2931 = vsel %vm1119, %v2643, 0.0
          %2932 = vadd.xlane.f32.xlu0 %v2931
          %v2933 = vpop.xlane.xlu0 %2932
          %v2934 = vsel %vm1119, %v2644, 0.0
          %2935 = vadd.xlane.f32.xlu0 %v2934
          %v2936 = vpop.xlane.xlu0 %2935
          %v2937 = vsel %vm1119, %v2645, 0.0
          %2938 = vadd.xlane.f32.xlu0 %v2937
          %v2939 = vpop.xlane.xlu0 %2938
          %v2940 = vsel %vm1119, %v2646, 0.0
          %2941 = vadd.xlane.f32.xlu0 %v2940
          %v2942 = vpop.xlane.xlu0 %2941
          %v2943 = vsel %vm1119, %v2647, 0.0
          %2944 = vadd.xlane.f32.xlu0 %v2943
          %v2945 = vpop.xlane.xlu0 %2944
          %v2946 = vsel %vm1119, %v2648, 0.0
          %2947 = vadd.xlane.f32.xlu0 %v2946
          %v2948 = vpop.xlane.xlu0 %2947
          %v2949 = vsel %vm1119, %v2649, 0.0
          %2950 = vadd.xlane.f32.xlu0 %v2949
          %v2951 = vpop.xlane.xlu0 %2950
          %v2952 = vsel %vm1119, %v2650, 0.0
          %2953 = vadd.xlane.f32.xlu0 %v2952
          %v2954 = vpop.xlane.xlu0 %2953
          %v2955 = vsel %vm1119, %v2651, 0.0
          %2956 = vadd.xlane.f32.xlu0 %v2955
          %v2957 = vpop.xlane.xlu0 %2956
          %v2958 = vsel %vm1119, %v2652, 0.0
          %2959 = vadd.xlane.f32.xlu0 %v2958
          %v2960 = vpop.xlane.xlu0 %2959
          %v2961 = vsel %vm1119, %v2653, 0.0
          %2962 = vadd.xlane.f32.xlu0 %v2961
          %v2963 = vpop.xlane.xlu0 %2962
          %v2964 = vsel %vm1119, %v2654, 0.0
          %2965 = vadd.xlane.f32.xlu0 %v2964
          %v2966 = vpop.xlane.xlu0 %2965
          %v2967 = vsel %vm1119, %v2655, 0.0
          %2968 = vadd.xlane.f32.xlu0 %v2967
          %v2969 = vpop.xlane.xlu0 %2968
          %v2970 = vsel %vm1119, %v2656, 0.0
          %2971 = vadd.xlane.f32.xlu0 %v2970
          %v2972 = vpop.xlane.xlu0 %2971
          %v2973 = vsel %vm1119, %v2657, 0.0
          %2974 = vadd.xlane.f32.xlu0 %v2973
          %v2975 = vpop.xlane.xlu0 %2974
          %v2976 = vsel %vm1119, %v2658, 0.0
          %2977 = vadd.xlane.f32.xlu0 %v2976
          %v2978 = vpop.xlane.xlu0 %2977
          %v2979 = vsel %vm1119, %v2659, 0.0
          %2980 = vadd.xlane.f32.xlu0 %v2979
          %v2981 = vpop.xlane.xlu0 %2980
          %v2982 = vsel %vm1119, %v2660, 0.0
          %2983 = vadd.xlane.f32.xlu0 %v2982
          %v2984 = vpop.xlane.xlu0 %2983
          %v2985 = vsel %vm1119, %v2661, 0.0
          %2986 = vadd.xlane.f32.xlu0 %v2985
          %v2987 = vpop.xlane.xlu0 %2986
          %v2988 = vsel %vm1119, %v2662, 0.0
          %2989 = vadd.xlane.f32.xlu0 %v2988
          %v2990 = vpop.xlane.xlu0 %2989
          %v2991 = vsel %vm1119, %v2663, 0.0
          %2992 = vadd.xlane.f32.xlu0 %v2991
          %v2993 = vpop.xlane.xlu0 %2992
          %v2994 = vsel %vm1119, %v2664, 0.0
          %2995 = vadd.xlane.f32.xlu0 %v2994
          %v2996 = vpop.xlane.xlu0 %2995
          %v2997 = vsel %vm1119, %v2665, 0.0
          %2998 = vadd.xlane.f32.xlu0 %v2997
          %v2999 = vpop.xlane.xlu0 %2998
          %v3000 = vsel %vm1119, %v2666, 0.0
          %3001 = vadd.xlane.f32.xlu0 %v3000
          %v3002 = vpop.xlane.xlu0 %3001
          %v3003 = vsel %vm1119, %v2667, 0.0
          %3004 = vadd.xlane.f32.xlu0 %v3003
          %v3005 = vpop.xlane.xlu0 %3004
          %v3006 = vsel %vm1119, %v2668, 0.0
          %3007 = vadd.xlane.f32.xlu0 %v3006
          %v3008 = vpop.xlane.xlu0 %3007
          %v3009 = vsel %vm1119, %v2669, 0.0
          %3010 = vadd.xlane.f32.xlu0 %v3009
          %v3011 = vpop.xlane.xlu0 %3010
          %v3012 = vsel %vm1119, %v2670, 0.0
          %3013 = vadd.xlane.f32.xlu0 %v3012
          %v3014 = vpop.xlane.xlu0 %3013
          %v3015 = vsel %vm1119, %v2671, 0.0
          %3016 = vadd.xlane.f32.xlu0 %v3015
          %v3017 = vpop.xlane.xlu0 %3016
          %v3018 = vsel %vm1119, %v2672, 0.0
          %3019 = vadd.xlane.f32.xlu0 %v3018
          %v3020 = vpop.xlane.xlu0 %3019
          %v3021 = vsel %vm1119, %v2673, 0.0
          %3022 = vadd.xlane.f32.xlu0 %v3021
          %v3023 = vpop.xlane.xlu0 %3022
          %v3024 = vsel %vm1119, %v2674, 0.0
          %3025 = vadd.xlane.f32.xlu0 %v3024
          %v3026 = vpop.xlane.xlu0 %3025
          %v3027 = vsel %vm1119, %v2675, 0.0
          %3028 = vadd.xlane.f32.xlu0 %v3027
          %v3029 = vpop.xlane.xlu0 %3028
          %v3030 = vsel %vm1119, %v2676, 0.0
          %3031 = vadd.xlane.f32.xlu0 %v3030
          %v3032 = vpop.xlane.xlu0 %3031
          %v3033 = vsel %vm1119, %v2677, 0.0
          %3034 = vadd.xlane.f32.xlu0 %v3033
          %v3035 = vpop.xlane.xlu0 %3034
          %v3036 = vsel %vm1119, %v2678, 0.0
          %3037 = vadd.xlane.f32.xlu0 %v3036
          %v3038 = vpop.xlane.xlu0 %3037
          %v3039 = vsel %vm1119, %v2679, 0.0
          %3040 = vadd.xlane.f32.xlu0 %v3039
          %v3041 = vpop.xlane.xlu0 %3040
          %v3042 = vsel %vm1119, %v2680, 0.0
          %3043 = vadd.xlane.f32.xlu0 %v3042
          %v3044 = vpop.xlane.xlu0 %3043
          %v3045 = vsel %vm1119, %v2681, 0.0
          %3046 = vadd.xlane.f32.xlu0 %v3045
          %v3047 = vpop.xlane.xlu0 %3046
          %v3048 = vsel %vm1119, %v2682, 0.0
          %3049 = vadd.xlane.f32.xlu0 %v3048
          %v3050 = vpop.xlane.xlu0 %3049
          %v3051 = vsel %vm1119, %v2683, 0.0
          %3052 = vadd.xlane.f32.xlu0 %v3051
          %v3053 = vpop.xlane.xlu0 %3052
          %v3054 = vsel %vm1119, %v2684, 0.0
          %3055 = vadd.xlane.f32.xlu0 %v3054
          %v3056 = vpop.xlane.xlu0 %3055
          %v3057 = vsel %vm1119, %v2685, 0.0
          %3058 = vadd.xlane.f32.xlu0 %v3057
          %v3059 = vpop.xlane.xlu0 %3058
          %v3060 = vsel %vm1119, %v2686, 0.0
          %3061 = vadd.xlane.f32.xlu0 %v3060
          %v3062 = vpop.xlane.xlu0 %3061
          %v3063 = vsel %vm1119, %v2687, 0.0
          %3064 = vadd.xlane.f32.xlu0 %v3063
          %v3065 = vpop.xlane.xlu0 %3064
          %v3066 = vsel %vm1119, %v2688, 0.0
          %3067 = vadd.xlane.f32.xlu0 %v3066
          %v3068 = vpop.xlane.xlu0 %3067
          %v3069 = vsel %vm1119, %v2689, 0.0
          %3070 = vadd.xlane.f32.xlu0 %v3069
          %v3071 = vpop.xlane.xlu0 %3070
          %v3072 = vsel %vm1119, %v2690, 0.0
          %3073 = vadd.xlane.f32.xlu0 %v3072
          %v3074 = vpop.xlane.xlu0 %3073
          %v3075 = vlaneseq
          %v3076 = vand.u32 %v3075, 127
          %v3077 = vstv %s981
          %v3078 = vadd.s32 %v3077, %v3076
          %v3079 = vld [vmem:[%s868] sm:$0xff]
          %3080 = vset.pattern.permute.xlu0 0
          %3081 = vperm.xlu0 %3080, %v3079
          %v3082 = vpop.permute.xlu0 %3081
          %vm3083 = vcmp.lt.s32.totalorder %v3078, %v3082
          %v3212 = vlaneseq
          %v3213 = vshrl.u32 %v3212, 7
          %v3214 = vsub.s32 %v3076, %v3213
          %v3215 = vrot.slane %v2693, %v3214
          %v3216 = vadd.s32 %v3076, 4294967288
          %v3217 = vlaneseq
          %v3218 = vshrl.u32 %v3217, 7
          %v3219 = vsub.s32 %v3216, %v3218
          %v3220 = vrot.slane %v2696, %v3219
          %vm3221 = vcmask 130112
          %v3222 = vsel %vm3221, %v3220, %v3215
          %v3223 = vadd.s32 %v3076, 4294967280
          %v3224 = vlaneseq
          %v3225 = vshrl.u32 %v3224, 7
          %v3226 = vsub.s32 %v3223, %v3225
          %v3227 = vrot.slane %v2699, %v3226
          %vm3228 = vcmask 195712
          %v3229 = vsel %vm3228, %v3227, %v3222
          %v3230 = vadd.s32 %v3076, 4294967272
          %v3231 = vlaneseq
          %v3232 = vshrl.u32 %v3231, 7
          %v3233 = vsub.s32 %v3230, %v3232
          %v3234 = vrot.slane %v2702, %v3233
          %vm3235 = vcmask 261312
          %v3236 = vsel %vm3235, %v3234, %v3229
          %v3237 = vadd.s32 %v3076, 4294967264
          %v3238 = vlaneseq
          %v3239 = vshrl.u32 %v3238, 7
          %v3240 = vsub.s32 %v3237, %v3239
          %v3241 = vrot.slane %v2705, %v3240
          %vm3242 = vcmask 326912
          %v3243 = vsel %vm3242, %v3241, %v3236
          %v3244 = vadd.s32 %v3076, 4294967256
          %v3245 = vlaneseq
          %v3246 = vshrl.u32 %v3245, 7
          %v3247 = vsub.s32 %v3244, %v3246
          %v3248 = vrot.slane %v2708, %v3247
          %vm3249 = vcmask 392512
          %v3250 = vsel %vm3249, %v3248, %v3243
          %v3251 = vadd.s32 %v3076, 4294967248
          %v3252 = vlaneseq
          %v3253 = vshrl.u32 %v3252, 7
          %v3254 = vsub.s32 %v3251, %v3253
          %v3255 = vrot.slane %v2711, %v3254
          %vm3256 = vcmask 458112
          %v3257 = vsel %vm3256, %v3255, %v3250
          %v3258 = vadd.s32 %v3076, 4294967240
          %v3259 = vlaneseq
          %v3260 = vshrl.u32 %v3259, 7
          %v3261 = vsub.s32 %v3258, %v3260
          %v3262 = vrot.slane %v2714, %v3261
          %vm3263 = vcmask 523712
          %v3264 = vsel %vm3263, %v3262, %v3257
          %v3265 = vadd.s32 %v3076, 4294967232
          %v3266 = vlaneseq
          %v3267 = vshrl.u32 %v3266, 7
          %v3268 = vsub.s32 %v3265, %v3267
          %v3269 = vrot.slane %v2717, %v3268
          %vm3270 = vcmask 589312
          %v3271 = vsel %vm3270, %v3269, %v3264
          %v3272 = vadd.s32 %v3076, 4294967224
          %v3273 = vlaneseq
          %v3274 = vshrl.u32 %v3273, 7
          %v3275 = vsub.s32 %v3272, %v3274
          %v3276 = vrot.slane %v2720, %v3275
          %vm3277 = vcmask 654912
          %v3278 = vsel %vm3277, %v3276, %v3271
          %v3279 = vadd.s32 %v3076, 4294967216
          %v3280 = vlaneseq
          %v3281 = vshrl.u32 %v3280, 7
          %v3282 = vsub.s32 %v3279, %v3281
          %v3283 = vrot.slane %v2723, %v3282
          %vm3284 = vcmask 720512
          %v3285 = vsel %vm3284, %v3283, %v3278
          %v3286 = vadd.s32 %v3076, 4294967208
          %v3287 = vlaneseq
          %v3288 = vshrl.u32 %v3287, 7
          %v3289 = vsub.s32 %v3286, %v3288
          %v3290 = vrot.slane %v2726, %v3289
          %vm3291 = vcmask 786112
          %v3292 = vsel %vm3291, %v3290, %v3285
          %v3293 = vadd.s32 %v3076, 4294967200
          %v3294 = vlaneseq
          %v3295 = vshrl.u32 %v3294, 7
          %v3296 = vsub.s32 %v3293, %v3295
          %v3297 = vrot.slane %v2729, %v3296
          %vm3298 = vcmask 851712
          %v3299 = vsel %vm3298, %v3297, %v3292
          %v3300 = vadd.s32 %v3076, 4294967192
          %v3301 = vlaneseq
          %v3302 = vshrl.u32 %v3301, 7
          %v3303 = vsub.s32 %v3300, %v3302
          %v3304 = vrot.slane %v2732, %v3303
          %vm3305 = vcmask 917312
          %v3306 = vsel %vm3305, %v3304, %v3299
          %v3307 = vadd.s32 %v3076, 4294967184
          %v3308 = vlaneseq
          %v3309 = vshrl.u32 %v3308, 7
          %v3310 = vsub.s32 %v3307, %v3309
          %v3311 = vrot.slane %v2735, %v3310
          %vm3312 = vcmask 982912
          %v3313 = vsel %vm3312, %v3311, %v3306
          %v3314 = vadd.s32 %v3076, 4294967176
          %v3315 = vlaneseq
          %v3316 = vshrl.u32 %v3315, 7
          %v3317 = vsub.s32 %v3314, %v3316
          %v3318 = vrot.slane %v2738, %v3317
          %vm3319 = vcmask 1048512
          %v3320 = vsel %vm3319, %v3318, %v3313
          %v3321 = vlaneseq
          %v3322 = vshrl.u32 %v3321, 7
          %v3323 = vsub.s32 %v3076, %v3322
          %v3324 = vrot.slane %v2741, %v3323
          %v3325 = vlaneseq
          %v3326 = vshrl.u32 %v3325, 7
          %v3327 = vsub.s32 %v3216, %v3326
          %v3328 = vrot.slane %v2744, %v3327
          %v3329 = vsel %vm3221, %v3328, %v3324
          %v3330 = vlaneseq
          %v3331 = vshrl.u32 %v3330, 7
          %v3332 = vsub.s32 %v3223, %v3331
          %v3333 = vrot.slane %v2747, %v3332
          %v3334 = vsel %vm3228, %v3333, %v3329
          %v3335 = vlaneseq
          %v3336 = vshrl.u32 %v3335, 7
          %v3337 = vsub.s32 %v3230, %v3336
          %v3338 = vrot.slane %v2750, %v3337
          %v3339 = vsel %vm3235, %v3338, %v3334
          %v3340 = vlaneseq
          %v3341 = vshrl.u32 %v3340, 7
          %v3342 = vsub.s32 %v3237, %v3341
          %v3343 = vrot.slane %v2753, %v3342
          %v3344 = vsel %vm3242, %v3343, %v3339
          %v3345 = vlaneseq
          %v3346 = vshrl.u32 %v3345, 7
          %v3347 = vsub.s32 %v3244, %v3346
          %v3348 = vrot.slane %v2756, %v3347
          %v3349 = vsel %vm3249, %v3348, %v3344
          %v3350 = vlaneseq
          %v3351 = vshrl.u32 %v3350, 7
          %v3352 = vsub.s32 %v3251, %v3351
          %v3353 = vrot.slane %v2759, %v3352
          %v3354 = vsel %vm3256, %v3353, %v3349
          %v3355 = vlaneseq
          %v3356 = vshrl.u32 %v3355, 7
          %v3357 = vsub.s32 %v3258, %v3356
          %v3358 = vrot.slane %v2762, %v3357
          %v3359 = vsel %vm3263, %v3358, %v3354
          %v3360 = vlaneseq
          %v3361 = vshrl.u32 %v3360, 7
          %v3362 = vsub.s32 %v3265, %v3361
          %v3363 = vrot.slane %v2765, %v3362
          %v3364 = vsel %vm3270, %v3363, %v3359
          %v3365 = vlaneseq
          %v3366 = vshrl.u32 %v3365, 7
          %v3367 = vsub.s32 %v3272, %v3366
          %v3368 = vrot.slane %v2768, %v3367
          %v3369 = vsel %vm3277, %v3368, %v3364
          %v3370 = vlaneseq
          %v3371 = vshrl.u32 %v3370, 7
          %v3372 = vsub.s32 %v3279, %v3371
          %v3373 = vrot.slane %v2771, %v3372
          %v3374 = vsel %vm3284, %v3373, %v3369
          %v3375 = vlaneseq
          %v3376 = vshrl.u32 %v3375, 7
          %v3377 = vsub.s32 %v3286, %v3376
          %v3378 = vrot.slane %v2774, %v3377
          %v3379 = vsel %vm3291, %v3378, %v3374
          %v3380 = vlaneseq
          %v3381 = vshrl.u32 %v3380, 7
          %v3382 = vsub.s32 %v3293, %v3381
          %v3383 = vrot.slane %v2777, %v3382
          %v3384 = vsel %vm3298, %v3383, %v3379
          %v3385 = vlaneseq
          %v3386 = vshrl.u32 %v3385, 7
          %v3387 = vsub.s32 %v3300, %v3386
          %v3388 = vrot.slane %v2780, %v3387
          %v3389 = vsel %vm3305, %v3388, %v3384
          %v3390 = vlaneseq
          %v3391 = vshrl.u32 %v3390, 7
          %v3392 = vsub.s32 %v3307, %v3391
          %v3393 = vrot.slane %v2783, %v3392
          %v3394 = vsel %vm3312, %v3393, %v3389
          %v3395 = vlaneseq
          %v3396 = vshrl.u32 %v3395, 7
          %v3397 = vsub.s32 %v3314, %v3396
          %v3398 = vrot.slane %v2786, %v3397
          %v3399 = vsel %vm3319, %v3398, %v3394
          %v3400 = vlaneseq
          %v3401 = vshrl.u32 %v3400, 7
          %v3402 = vsub.s32 %v3076, %v3401
          %v3403 = vrot.slane %v2789, %v3402
          %v3404 = vlaneseq
          %v3405 = vshrl.u32 %v3404, 7
          %v3406 = vsub.s32 %v3216, %v3405
          %v3407 = vrot.slane %v2792, %v3406
          %v3408 = vsel %vm3221, %v3407, %v3403
          %v3409 = vlaneseq
          %v3410 = vshrl.u32 %v3409, 7
          %v3411 = vsub.s32 %v3223, %v3410
          %v3412 = vrot.slane %v2795, %v3411
          %v3413 = vsel %vm3228, %v3412, %v3408
          %v3414 = vlaneseq
          %v3415 = vshrl.u32 %v3414, 7
          %v3416 = vsub.s32 %v3230, %v3415
          %v3417 = vrot.slane %v2798, %v3416
          %v3418 = vsel %vm3235, %v3417, %v3413
          %v3419 = vlaneseq
          %v3420 = vshrl.u32 %v3419, 7
          %v3421 = vsub.s32 %v3237, %v3420
          %v3422 = vrot.slane %v2801, %v3421
          %v3423 = vsel %vm3242, %v3422, %v3418
          %v3424 = vlaneseq
          %v3425 = vshrl.u32 %v3424, 7
          %v3426 = vsub.s32 %v3244, %v3425
          %v3427 = vrot.slane %v2804, %v3426
          %v3428 = vsel %vm3249, %v3427, %v3423
          %v3429 = vlaneseq
          %v3430 = vshrl.u32 %v3429, 7
          %v3431 = vsub.s32 %v3251, %v3430
          %v3432 = vrot.slane %v2807, %v3431
          %v3433 = vsel %vm3256, %v3432, %v3428
          %v3434 = vlaneseq
          %v3435 = vshrl.u32 %v3434, 7
          %v3436 = vsub.s32 %v3258, %v3435
          %v3437 = vrot.slane %v2810, %v3436
          %v3438 = vsel %vm3263, %v3437, %v3433
          %v3439 = vlaneseq
          %v3440 = vshrl.u32 %v3439, 7
          %v3441 = vsub.s32 %v3265, %v3440
          %v3442 = vrot.slane %v2813, %v3441
          %v3443 = vsel %vm3270, %v3442, %v3438
          %v3444 = vlaneseq
          %v3445 = vshrl.u32 %v3444, 7
          %v3446 = vsub.s32 %v3272, %v3445
          %v3447 = vrot.slane %v2816, %v3446
          %v3448 = vsel %vm3277, %v3447, %v3443
          %v3449 = vlaneseq
          %v3450 = vshrl.u32 %v3449, 7
          %v3451 = vsub.s32 %v3279, %v3450
          %v3452 = vrot.slane %v2819, %v3451
          %v3453 = vsel %vm3284, %v3452, %v3448
          %v3454 = vlaneseq
          %v3455 = vshrl.u32 %v3454, 7
          %v3456 = vsub.s32 %v3286, %v3455
          %v3457 = vrot.slane %v2822, %v3456
          %v3458 = vsel %vm3291, %v3457, %v3453
          %v3459 = vlaneseq
          %v3460 = vshrl.u32 %v3459, 7
          %v3461 = vsub.s32 %v3293, %v3460
          %v3462 = vrot.slane %v2825, %v3461
          %v3463 = vsel %vm3298, %v3462, %v3458
          %v3464 = vlaneseq
          %v3465 = vshrl.u32 %v3464, 7
          %v3466 = vsub.s32 %v3300, %v3465
          %v3467 = vrot.slane %v2828, %v3466
          %v3468 = vsel %vm3305, %v3467, %v3463
          %v3469 = vlaneseq
          %v3470 = vshrl.u32 %v3469, 7
          %v3471 = vsub.s32 %v3307, %v3470
          %v3472 = vrot.slane %v2831, %v3471
          %v3473 = vsel %vm3312, %v3472, %v3468
          %v3474 = vlaneseq
          %v3475 = vshrl.u32 %v3474, 7
          %v3476 = vsub.s32 %v3314, %v3475
          %v3477 = vrot.slane %v2834, %v3476
          %v3478 = vsel %vm3319, %v3477, %v3473
          %v3479 = vlaneseq
          %v3480 = vshrl.u32 %v3479, 7
          %v3481 = vsub.s32 %v3076, %v3480
          %v3482 = vrot.slane %v2837, %v3481
          %v3483 = vlaneseq
          %v3484 = vshrl.u32 %v3483, 7
          %v3485 = vsub.s32 %v3216, %v3484
          %v3486 = vrot.slane %v2840, %v3485
          %v3487 = vsel %vm3221, %v3486, %v3482
          %v3488 = vlaneseq
          %v3489 = vshrl.u32 %v3488, 7
          %v3490 = vsub.s32 %v3223, %v3489
          %v3491 = vrot.slane %v2843, %v3490
          %v3492 = vsel %vm3228, %v3491, %v3487
          %v3493 = vlaneseq
          %v3494 = vshrl.u32 %v3493, 7
          %v3495 = vsub.s32 %v3230, %v3494
          %v3496 = vrot.slane %v2846, %v3495
          %v3497 = vsel %vm3235, %v3496, %v3492
          %v3498 = vlaneseq
          %v3499 = vshrl.u32 %v3498, 7
          %v3500 = vsub.s32 %v3237, %v3499
          %v3501 = vrot.slane %v2849, %v3500
          %v3502 = vsel %vm3242, %v3501, %v3497
          %v3503 = vlaneseq
          %v3504 = vshrl.u32 %v3503, 7
          %v3505 = vsub.s32 %v3244, %v3504
          %v3506 = vrot.slane %v2852, %v3505
          %v3507 = vsel %vm3249, %v3506, %v3502
          %v3508 = vlaneseq
          %v3509 = vshrl.u32 %v3508, 7
          %v3510 = vsub.s32 %v3251, %v3509
          %v3511 = vrot.slane %v2855, %v3510
          %v3512 = vsel %vm3256, %v3511, %v3507
          %v3513 = vlaneseq
          %v3514 = vshrl.u32 %v3513, 7
          %v3515 = vsub.s32 %v3258, %v3514
          %v3516 = vrot.slane %v2858, %v3515
          %v3517 = vsel %vm3263, %v3516, %v3512
          %v3518 = vlaneseq
          %v3519 = vshrl.u32 %v3518, 7
          %v3520 = vsub.s32 %v3265, %v3519
          %v3521 = vrot.slane %v2861, %v3520
          %v3522 = vsel %vm3270, %v3521, %v3517
          %v3523 = vlaneseq
          %v3524 = vshrl.u32 %v3523, 7
          %v3525 = vsub.s32 %v3272, %v3524
          %v3526 = vrot.slane %v2864, %v3525
          %v3527 = vsel %vm3277, %v3526, %v3522
          %v3528 = vlaneseq
          %v3529 = vshrl.u32 %v3528, 7
          %v3530 = vsub.s32 %v3279, %v3529
          %v3531 = vrot.slane %v2867, %v3530
          %v3532 = vsel %vm3284, %v3531, %v3527
          %v3533 = vlaneseq
          %v3534 = vshrl.u32 %v3533, 7
          %v3535 = vsub.s32 %v3286, %v3534
          %v3536 = vrot.slane %v2870, %v3535
          %v3537 = vsel %vm3291, %v3536, %v3532
          %v3538 = vlaneseq
          %v3539 = vshrl.u32 %v3538, 7
          %v3540 = vsub.s32 %v3293, %v3539
          %v3541 = vrot.slane %v2873, %v3540
          %v3542 = vsel %vm3298, %v3541, %v3537
          %v3543 = vlaneseq
          %v3544 = vshrl.u32 %v3543, 7
          %v3545 = vsub.s32 %v3300, %v3544
          %v3546 = vrot.slane %v2876, %v3545
          %v3547 = vsel %vm3305, %v3546, %v3542
          %v3548 = vlaneseq
          %v3549 = vshrl.u32 %v3548, 7
          %v3550 = vsub.s32 %v3307, %v3549
          %v3551 = vrot.slane %v2879, %v3550
          %v3552 = vsel %vm3312, %v3551, %v3547
          %v3553 = vlaneseq
          %v3554 = vshrl.u32 %v3553, 7
          %v3555 = vsub.s32 %v3314, %v3554
          %v3556 = vrot.slane %v2882, %v3555
          %v3557 = vsel %vm3319, %v3556, %v3552
          %v3558 = vlaneseq
          %v3559 = vshrl.u32 %v3558, 7
          %v3560 = vsub.s32 %v3076, %v3559
          %v3561 = vrot.slane %v2885, %v3560
          %v3562 = vlaneseq
          %v3563 = vshrl.u32 %v3562, 7
          %v3564 = vsub.s32 %v3216, %v3563
          %v3565 = vrot.slane %v2888, %v3564
          %v3566 = vsel %vm3221, %v3565, %v3561
          %v3567 = vlaneseq
          %v3568 = vshrl.u32 %v3567, 7
          %v3569 = vsub.s32 %v3223, %v3568
          %v3570 = vrot.slane %v2891, %v3569
          %v3571 = vsel %vm3228, %v3570, %v3566
          %v3572 = vlaneseq
          %v3573 = vshrl.u32 %v3572, 7
          %v3574 = vsub.s32 %v3230, %v3573
          %v3575 = vrot.slane %v2894, %v3574
          %v3576 = vsel %vm3235, %v3575, %v3571
          %v3577 = vlaneseq
          %v3578 = vshrl.u32 %v3577, 7
          %v3579 = vsub.s32 %v3237, %v3578
          %v3580 = vrot.slane %v2897, %v3579
          %v3581 = vsel %vm3242, %v3580, %v3576
          %v3582 = vlaneseq
          %v3583 = vshrl.u32 %v3582, 7
          %v3584 = vsub.s32 %v3244, %v3583
          %v3585 = vrot.slane %v2900, %v3584
          %v3586 = vsel %vm3249, %v3585, %v3581
          %v3587 = vlaneseq
          %v3588 = vshrl.u32 %v3587, 7
          %v3589 = vsub.s32 %v3251, %v3588
          %v3590 = vrot.slane %v2903, %v3589
          %v3591 = vsel %vm3256, %v3590, %v3586
          %v3592 = vlaneseq
          %v3593 = vshrl.u32 %v3592, 7
          %v3594 = vsub.s32 %v3258, %v3593
          %v3595 = vrot.slane %v2906, %v3594
          %v3596 = vsel %vm3263, %v3595, %v3591
          %v3597 = vlaneseq
          %v3598 = vshrl.u32 %v3597, 7
          %v3599 = vsub.s32 %v3265, %v3598
          %v3600 = vrot.slane %v2909, %v3599
          %v3601 = vsel %vm3270, %v3600, %v3596
          %v3602 = vlaneseq
          %v3603 = vshrl.u32 %v3602, 7
          %v3604 = vsub.s32 %v3272, %v3603
          %v3605 = vrot.slane %v2912, %v3604
          %v3606 = vsel %vm3277, %v3605, %v3601
          %v3607 = vlaneseq
          %v3608 = vshrl.u32 %v3607, 7
          %v3609 = vsub.s32 %v3279, %v3608
          %v3610 = vrot.slane %v2915, %v3609
          %v3611 = vsel %vm3284, %v3610, %v3606
          %v3612 = vlaneseq
          %v3613 = vshrl.u32 %v3612, 7
          %v3614 = vsub.s32 %v3286, %v3613
          %v3615 = vrot.slane %v2918, %v3614
          %v3616 = vsel %vm3291, %v3615, %v3611
          %v3617 = vlaneseq
          %v3618 = vshrl.u32 %v3617, 7
          %v3619 = vsub.s32 %v3293, %v3618
          %v3620 = vrot.slane %v2921, %v3619
          %v3621 = vsel %vm3298, %v3620, %v3616
          %v3622 = vlaneseq
          %v3623 = vshrl.u32 %v3622, 7
          %v3624 = vsub.s32 %v3300, %v3623
          %v3625 = vrot.slane %v2924, %v3624
          %v3626 = vsel %vm3305, %v3625, %v3621
          %v3627 = vlaneseq
          %v3628 = vshrl.u32 %v3627, 7
          %v3629 = vsub.s32 %v3307, %v3628
          %v3630 = vrot.slane %v2927, %v3629
          %v3631 = vsel %vm3312, %v3630, %v3626
          %v3632 = vlaneseq
          %v3633 = vshrl.u32 %v3632, 7
          %v3634 = vsub.s32 %v3314, %v3633
          %v3635 = vrot.slane %v2930, %v3634
          %v3636 = vsel %vm3319, %v3635, %v3631
          %v3637 = vlaneseq
          %v3638 = vshrl.u32 %v3637, 7
          %v3639 = vsub.s32 %v3076, %v3638
          %v3640 = vrot.slane %v2933, %v3639
          %v3641 = vlaneseq
          %v3642 = vshrl.u32 %v3641, 7
          %v3643 = vsub.s32 %v3216, %v3642
          %v3644 = vrot.slane %v2936, %v3643
          %v3645 = vsel %vm3221, %v3644, %v3640
          %v3646 = vlaneseq
          %v3647 = vshrl.u32 %v3646, 7
          %v3648 = vsub.s32 %v3223, %v3647
          %v3649 = vrot.slane %v2939, %v3648
          %v3650 = vsel %vm3228, %v3649, %v3645
          %v3651 = vlaneseq
          %v3652 = vshrl.u32 %v3651, 7
          %v3653 = vsub.s32 %v3230, %v3652
          %v3654 = vrot.slane %v2942, %v3653
          %v3655 = vsel %vm3235, %v3654, %v3650
          %v3656 = vlaneseq
          %v3657 = vshrl.u32 %v3656, 7
          %v3658 = vsub.s32 %v3237, %v3657
          %v3659 = vrot.slane %v2945, %v3658
          %v3660 = vsel %vm3242, %v3659, %v3655
          %v3661 = vlaneseq
          %v3662 = vshrl.u32 %v3661, 7
          %v3663 = vsub.s32 %v3244, %v3662
          %v3664 = vrot.slane %v2948, %v3663
          %v3665 = vsel %vm3249, %v3664, %v3660
          %v3666 = vlaneseq
          %v3667 = vshrl.u32 %v3666, 7
          %v3668 = vsub.s32 %v3251, %v3667
          %v3669 = vrot.slane %v2951, %v3668
          %v3670 = vsel %vm3256, %v3669, %v3665
          %v3671 = vlaneseq
          %v3672 = vshrl.u32 %v3671, 7
          %v3673 = vsub.s32 %v3258, %v3672
          %v3674 = vrot.slane %v2954, %v3673
          %v3675 = vsel %vm3263, %v3674, %v3670
          %v3676 = vlaneseq
          %v3677 = vshrl.u32 %v3676, 7
          %v3678 = vsub.s32 %v3265, %v3677
          %v3679 = vrot.slane %v2957, %v3678
          %v3680 = vsel %vm3270, %v3679, %v3675
          %v3681 = vlaneseq
          %v3682 = vshrl.u32 %v3681, 7
          %v3683 = vsub.s32 %v3272, %v3682
          %v3684 = vrot.slane %v2960, %v3683
          %v3685 = vsel %vm3277, %v3684, %v3680
          %v3686 = vlaneseq
          %v3687 = vshrl.u32 %v3686, 7
          %v3688 = vsub.s32 %v3279, %v3687
          %v3689 = vrot.slane %v2963, %v3688
          %v3690 = vsel %vm3284, %v3689, %v3685
          %v3691 = vlaneseq
          %v3692 = vshrl.u32 %v3691, 7
          %v3693 = vsub.s32 %v3286, %v3692
          %v3694 = vrot.slane %v2966, %v3693
          %v3695 = vsel %vm3291, %v3694, %v3690
          %v3696 = vlaneseq
          %v3697 = vshrl.u32 %v3696, 7
          %v3698 = vsub.s32 %v3293, %v3697
          %v3699 = vrot.slane %v2969, %v3698
          %v3700 = vsel %vm3298, %v3699, %v3695
          %v3701 = vlaneseq
          %v3702 = vshrl.u32 %v3701, 7
          %v3703 = vsub.s32 %v3300, %v3702
          %v3704 = vrot.slane %v2972, %v3703
          %v3705 = vsel %vm3305, %v3704, %v3700
          %v3706 = vlaneseq
          %v3707 = vshrl.u32 %v3706, 7
          %v3708 = vsub.s32 %v3307, %v3707
          %v3709 = vrot.slane %v2975, %v3708
          %v3710 = vsel %vm3312, %v3709, %v3705
          %v3711 = vlaneseq
          %v3712 = vshrl.u32 %v3711, 7
          %v3713 = vsub.s32 %v3314, %v3712
          %v3714 = vrot.slane %v2978, %v3713
          %v3715 = vsel %vm3319, %v3714, %v3710
          %v3716 = vlaneseq
          %v3717 = vshrl.u32 %v3716, 7
          %v3718 = vsub.s32 %v3076, %v3717
          %v3719 = vrot.slane %v2981, %v3718
          %v3720 = vlaneseq
          %v3721 = vshrl.u32 %v3720, 7
          %v3722 = vsub.s32 %v3216, %v3721
          %v3723 = vrot.slane %v2984, %v3722
          %v3724 = vsel %vm3221, %v3723, %v3719
          %v3725 = vlaneseq
          %v3726 = vshrl.u32 %v3725, 7
          %v3727 = vsub.s32 %v3223, %v3726
          %v3728 = vrot.slane %v2987, %v3727
          %v3729 = vsel %vm3228, %v3728, %v3724
          %v3730 = vlaneseq
          %v3731 = vshrl.u32 %v3730, 7
          %v3732 = vsub.s32 %v3230, %v3731
          %v3733 = vrot.slane %v2990, %v3732
          %v3734 = vsel %vm3235, %v3733, %v3729
          %v3735 = vlaneseq
          %v3736 = vshrl.u32 %v3735, 7
          %v3737 = vsub.s32 %v3237, %v3736
          %v3738 = vrot.slane %v2993, %v3737
          %v3739 = vsel %vm3242, %v3738, %v3734
          %v3740 = vlaneseq
          %v3741 = vshrl.u32 %v3740, 7
          %v3742 = vsub.s32 %v3244, %v3741
          %v3743 = vrot.slane %v2996, %v3742
          %v3744 = vsel %vm3249, %v3743, %v3739
          %v3745 = vlaneseq
          %v3746 = vshrl.u32 %v3745, 7
          %v3747 = vsub.s32 %v3251, %v3746
          %v3748 = vrot.slane %v2999, %v3747
          %v3749 = vsel %vm3256, %v3748, %v3744
          %v3750 = vlaneseq
          %v3751 = vshrl.u32 %v3750, 7
          %v3752 = vsub.s32 %v3258, %v3751
          %v3753 = vrot.slane %v3002, %v3752
          %v3754 = vsel %vm3263, %v3753, %v3749
          %v3755 = vlaneseq
          %v3756 = vshrl.u32 %v3755, 7
          %v3757 = vsub.s32 %v3265, %v3756
          %v3758 = vrot.slane %v3005, %v3757
          %v3759 = vsel %vm3270, %v3758, %v3754
          %v3760 = vlaneseq
          %v3761 = vshrl.u32 %v3760, 7
          %v3762 = vsub.s32 %v3272, %v3761
          %v3763 = vrot.slane %v3008, %v3762
          %v3764 = vsel %vm3277, %v3763, %v3759
          %v3765 = vlaneseq
          %v3766 = vshrl.u32 %v3765, 7
          %v3767 = vsub.s32 %v3279, %v3766
          %v3768 = vrot.slane %v3011, %v3767
          %v3769 = vsel %vm3284, %v3768, %v3764
          %v3770 = vlaneseq
          %v3771 = vshrl.u32 %v3770, 7
          %v3772 = vsub.s32 %v3286, %v3771
          %v3773 = vrot.slane %v3014, %v3772
          %v3774 = vsel %vm3291, %v3773, %v3769
          %v3775 = vlaneseq
          %v3776 = vshrl.u32 %v3775, 7
          %v3777 = vsub.s32 %v3293, %v3776
          %v3778 = vrot.slane %v3017, %v3777
          %v3779 = vsel %vm3298, %v3778, %v3774
          %v3780 = vlaneseq
          %v3781 = vshrl.u32 %v3780, 7
          %v3782 = vsub.s32 %v3300, %v3781
          %v3783 = vrot.slane %v3020, %v3782
          %v3784 = vsel %vm3305, %v3783, %v3779
          %v3785 = vlaneseq
          %v3786 = vshrl.u32 %v3785, 7
          %v3787 = vsub.s32 %v3307, %v3786
          %v3788 = vrot.slane %v3023, %v3787
          %v3789 = vsel %vm3312, %v3788, %v3784
          %v3790 = vlaneseq
          %v3791 = vshrl.u32 %v3790, 7
          %v3792 = vsub.s32 %v3314, %v3791
          %v3793 = vrot.slane %v3026, %v3792
          %v3794 = vsel %vm3319, %v3793, %v3789
          %v3795 = vlaneseq
          %v3796 = vshrl.u32 %v3795, 7
          %v3797 = vsub.s32 %v3076, %v3796
          %v3798 = vrot.slane %v3029, %v3797
          %v3799 = vlaneseq
          %v3800 = vshrl.u32 %v3799, 7
          %v3801 = vsub.s32 %v3216, %v3800
          %v3802 = vrot.slane %v3032, %v3801
          %v3803 = vsel %vm3221, %v3802, %v3798
          %v3804 = vlaneseq
          %v3805 = vshrl.u32 %v3804, 7
          %v3806 = vsub.s32 %v3223, %v3805
          %v3807 = vrot.slane %v3035, %v3806
          %v3808 = vsel %vm3228, %v3807, %v3803
          %v3809 = vlaneseq
          %v3810 = vshrl.u32 %v3809, 7
          %v3811 = vsub.s32 %v3230, %v3810
          %v3812 = vrot.slane %v3038, %v3811
          %v3813 = vsel %vm3235, %v3812, %v3808
          %v3814 = vlaneseq
          %v3815 = vshrl.u32 %v3814, 7
          %v3816 = vsub.s32 %v3237, %v3815
          %v3817 = vrot.slane %v3041, %v3816
          %v3818 = vsel %vm3242, %v3817, %v3813
          %v3819 = vlaneseq
          %v3820 = vshrl.u32 %v3819, 7
          %v3821 = vsub.s32 %v3244, %v3820
          %v3822 = vrot.slane %v3044, %v3821
          %v3823 = vsel %vm3249, %v3822, %v3818
          %v3824 = vlaneseq
          %v3825 = vshrl.u32 %v3824, 7
          %v3826 = vsub.s32 %v3251, %v3825
          %v3827 = vrot.slane %v3047, %v3826
          %v3828 = vsel %vm3256, %v3827, %v3823
          %v3829 = vlaneseq
          %v3830 = vshrl.u32 %v3829, 7
          %v3831 = vsub.s32 %v3258, %v3830
          %v3832 = vrot.slane %v3050, %v3831
          %v3833 = vsel %vm3263, %v3832, %v3828
          %v3834 = vlaneseq
          %v3835 = vshrl.u32 %v3834, 7
          %v3836 = vsub.s32 %v3265, %v3835
          %v3837 = vrot.slane %v3053, %v3836
          %v3838 = vsel %vm3270, %v3837, %v3833
          %v3839 = vlaneseq
          %v3840 = vshrl.u32 %v3839, 7
          %v3841 = vsub.s32 %v3272, %v3840
          %v3842 = vrot.slane %v3056, %v3841
          %v3843 = vsel %vm3277, %v3842, %v3838
          %v3844 = vlaneseq
          %v3845 = vshrl.u32 %v3844, 7
          %v3846 = vsub.s32 %v3279, %v3845
          %v3847 = vrot.slane %v3059, %v3846
          %v3848 = vsel %vm3284, %v3847, %v3843
          %v3849 = vlaneseq
          %v3850 = vshrl.u32 %v3849, 7
          %v3851 = vsub.s32 %v3286, %v3850
          %v3852 = vrot.slane %v3062, %v3851
          %v3853 = vsel %vm3291, %v3852, %v3848
          %v3854 = vlaneseq
          %v3855 = vshrl.u32 %v3854, 7
          %v3856 = vsub.s32 %v3293, %v3855
          %v3857 = vrot.slane %v3065, %v3856
          %v3858 = vsel %vm3298, %v3857, %v3853
          %v3859 = vlaneseq
          %v3860 = vshrl.u32 %v3859, 7
          %v3861 = vsub.s32 %v3300, %v3860
          %v3862 = vrot.slane %v3068, %v3861
          %v3863 = vsel %vm3305, %v3862, %v3858
          %v3864 = vlaneseq
          %v3865 = vshrl.u32 %v3864, 7
          %v3866 = vsub.s32 %v3307, %v3865
          %v3867 = vrot.slane %v3071, %v3866
          %v3868 = vsel %vm3312, %v3867, %v3863
          %v3869 = vlaneseq
          %v3870 = vshrl.u32 %v3869, 7
          %v3871 = vsub.s32 %v3314, %v3870
          %v3872 = vrot.slane %v3074, %v3871
          %v3873 = vsel %vm3319, %v3872, %v3868
          %vm3874 = vcmask 1041409
          %v3875 = vsel %vm3874, %v3399, %v3320
          %vm3876 = vcmask 1042434
          %v3877 = vsel %vm3876, %v3478, %v3875
          %vm3878 = vcmask 1043459
          %v3879 = vsel %vm3878, %v3557, %v3877
          %vm3880 = vcmask 1044484
          %v3881 = vsel %vm3880, %v3636, %v3879
          %vm3882 = vcmask 1045509
          %v3883 = vsel %vm3882, %v3715, %v3881
          %vm3884 = vcmask 1046534
          %v3885 = vsel %vm3884, %v3794, %v3883
          %vm3886 = vcmask 1047559
          %v3887 = vsel %vm3886, %v3873, %v3885
          %v3889 = vsel %vm3083, %v3887, -1e+30
          %v3890 = vld [vmem:[#allocation3] sm:$0xff]
          %3891 = vmax.xlane.f32.xlu0 %v3889
          %v3892 = vpop.xlane.xlu0 %3891
          %v3893 = vmax.f32 %v3890, %v3892
          %v3894 = vsub.f32 %v3890, %v3893
          %v3895 = vmul.f32 %v3894, 1.442695
          %v3896 = vpow.pop %v3895
          %3898 = vset.pattern.permute.xlu0 0
          %3899 = vperm.xlu0 %3898, %v3893
          %v3900 = vpop.permute.xlu0 %3899
          %v3902 = vsub.f32 %v3889, %v3900
          %v3903 = vmul.f32 %v3902, 1.442695
          %v3904 = vpow.pop %v3903
          %v3905 = vsel %vm3083, %v3904, 0.0
          %v3906 = vld [vmem:[#allocation4] sm:$0xff]
          %v3907 = vmul.f32 %v3896, %v3906
          %3908 = vadd.xlane.f32.xlu0 %v3905
          %v3909 = vpop.xlane.xlu0 %3908
          %v3910 = vadd.f32 %v3907, %v3909
          %vm3911 = vcmask 7168
          %3912 = vst.msk [vmem:[#allocation4] sm:$0xff] %vm3911, %v3910
          %3913 = vst.msk [vmem:[#allocation3] sm:$0xff] %vm3911, %v3893
          %v3914 = vld [vmem:[#allocation8] sm:$0x3]
          %v3915 = vld [vmem:[#allocation8 + $0x2] sm:$0x3]
          %v3916 = vld [vmem:[#allocation8 + $0x4] sm:$0x3]
          %v3917 = vld [vmem:[#allocation8 + $0x6] sm:$0x3]
          %v3918 = vld [vmem:[#allocation8 + $0x8] sm:$0x3]
          %v3919 = vld [vmem:[#allocation8 + $0xa] sm:$0x3]
          %v3920 = vld [vmem:[#allocation8 + $0xc] sm:$0x3]
          %v3921 = vld [vmem:[#allocation8 + $0xe] sm:$0x3]
          %v3923 = vcombine.high %v3896, %v3896
          %v3925 = vunpack.c.l.s4 1966171168
          %v3926 = vunpack.c.0.s8 %v3925
          %v3927 = vlaneseq
          %v3928 = vshrl.u32 %v3927, 7
          %v3929 = vsub.s32 %v3926, %v3928
          %v3930 = vrot.slane %v3896, %v3929
          %v3932 = vunpack.c.l.s4 1966171168
          %v3933 = vunpack.c.0.s8 %v3932
          %v3934 = vlaneseq
          %v3935 = vshrl.u32 %v3934, 7
          %v3936 = vsub.s32 %v3933, %v3935
          %v3937 = vrot.slane %v3923, %v3936
          %v3938 = vcombine.high %v3930, %v3930
          %v3939 = vcombine.high %v3937, %v3937
          %v3941 = vunpack.c.l.s4 1966171168
          %v3942 = vunpack.c.0.s8 %v3941
          %v3943 = vlaneseq
          %v3944 = vshrl.u32 %v3943, 7
          %v3945 = vsub.s32 %v3942, %v3944
          %v3946 = vrot.slane %v3930, %v3945
          %v3948 = vunpack.c.l.s4 1966171168
          %v3949 = vunpack.c.0.s8 %v3948
          %v3950 = vlaneseq
          %v3951 = vshrl.u32 %v3950, 7
          %v3952 = vsub.s32 %v3949, %v3951
          %v3953 = vrot.slane %v3937, %v3952
          %v3955 = vunpack.c.l.s4 1966171168
          %v3956 = vunpack.c.0.s8 %v3955
          %v3957 = vlaneseq
          %v3958 = vshrl.u32 %v3957, 7
          %v3959 = vsub.s32 %v3956, %v3958
          %v3960 = vrot.slane %v3938, %v3959
          %v3962 = vunpack.c.l.s4 1966171168
          %v3963 = vunpack.c.0.s8 %v3962
          %v3964 = vlaneseq
          %v3965 = vshrl.u32 %v3964, 7
          %v3966 = vsub.s32 %v3963, %v3965
          %v3967 = vrot.slane %v3939, %v3966
          %v3968 = vcombine.high %v3946, %v3946
          %v3969 = vcombine.high %v3953, %v3953
          %v3970 = vcombine.high %v3960, %v3960
          %v3971 = vcombine.high %v3967, %v3967
          %v3972 = vlaneseq
          %v3973 = vshrl.u32 %v3972, 7
          %v3974 = vsub.s32 0, %v3973
          %v3975 = vrot.slane %v3946, %v3974
          %v3976 = vlaneseq
          %v3977 = vshrl.u32 %v3976, 7
          %v3978 = vsub.s32 0, %v3977
          %v3979 = vrot.slane %v3960, %v3978
          %v3980 = vlaneseq
          %v3981 = vshrl.u32 %v3980, 7
          %v3982 = vsub.s32 0, %v3981
          %v3983 = vrot.slane %v3968, %v3982
          %v3984 = vlaneseq
          %v3985 = vshrl.u32 %v3984, 7
          %v3986 = vsub.s32 0, %v3985
          %v3987 = vrot.slane %v3970, %v3986
          %v3988 = vlaneseq
          %v3989 = vshrl.u32 %v3988, 7
          %v3990 = vsub.s32 0, %v3989
          %v3991 = vrot.slane %v3953, %v3990
          %v3992 = vlaneseq
          %v3993 = vshrl.u32 %v3992, 7
          %v3994 = vsub.s32 0, %v3993
          %v3995 = vrot.slane %v3967, %v3994
          %v3996 = vlaneseq
          %v3997 = vshrl.u32 %v3996, 7
          %v3998 = vsub.s32 0, %v3997
          %v3999 = vrot.slane %v3969, %v3998
          %v4000 = vlaneseq
          %v4001 = vshrl.u32 %v4000, 7
          %v4002 = vsub.s32 0, %v4001
          %v4003 = vrot.slane %v3971, %v4002
          %4004 = vset.pattern.permute.xlu0 0
          %4005 = vperm.xlu0 %4004, %v3975
          %v4006 = vpop.permute.xlu0 %4005
          %4008 = vset.pattern.permute.xlu0 0
          %4009 = vperm.xlu0 %4008, %v3979
          %v4010 = vpop.permute.xlu0 %4009
          %4012 = vset.pattern.permute.xlu0 0
          %4013 = vperm.xlu0 %4012, %v3983
          %v4014 = vpop.permute.xlu0 %4013
          %4016 = vset.pattern.permute.xlu0 0
          %4017 = vperm.xlu0 %4016, %v3987
          %v4018 = vpop.permute.xlu0 %4017
          %4020 = vset.pattern.permute.xlu0 0
          %4021 = vperm.xlu0 %4020, %v3991
          %v4022 = vpop.permute.xlu0 %4021
          %4024 = vset.pattern.permute.xlu0 0
          %4025 = vperm.xlu0 %4024, %v3995
          %v4026 = vpop.permute.xlu0 %4025
          %4028 = vset.pattern.permute.xlu0 0
          %4029 = vperm.xlu0 %4028, %v3999
          %v4030 = vpop.permute.xlu0 %4029
          %4032 = vset.pattern.permute.xlu0 0
          %4033 = vperm.xlu0 %4032, %v4003
          %v4034 = vpop.permute.xlu0 %4033
          %v4036 = vmul.f32 %v3914, %v4006
          %v4037 = vmul.f32 %v3915, %v4010
          %v4038 = vmul.f32 %v3916, %v4014
          %v4039 = vmul.f32 %v3917, %v4018
          %v4040 = vmul.f32 %v3918, %v4022
          %v4041 = vmul.f32 %v3919, %v4026
          %v4042 = vmul.f32 %v3920, %v4030
          %v4043 = vmul.f32 %v3921, %v4034
          %4044 = vst [vmem:[#allocation8] sm:$0x3] %v4036
          %4045 = vst [vmem:[#allocation8 + $0x2] sm:$0x3] %v4037
          %4046 = vst [vmem:[#allocation8 + $0x4] sm:$0x3] %v4038
          %4047 = vst [vmem:[#allocation8 + $0x6] sm:$0x3] %v4039
          %4048 = vst [vmem:[#allocation8 + $0x8] sm:$0x3] %v4040
          %4049 = vst [vmem:[#allocation8 + $0xa] sm:$0x3] %v4041
          %4050 = vst [vmem:[#allocation8 + $0xc] sm:$0x3] %v4042
          %4051 = vst [vmem:[#allocation8 + $0xe] sm:$0x3] %v4043
          %v4053 = vcombine.high %v3905, %v3905
          %v4055 = vunpack.c.l.s4 1966171168
          %v4056 = vunpack.c.0.s8 %v4055
          %v4057 = vlaneseq
          %v4058 = vshrl.u32 %v4057, 7
          %v4059 = vsub.s32 %v4056, %v4058
          %v4060 = vrot.slane %v3905, %v4059
          %v4062 = vunpack.c.l.s4 1966171168
          %v4063 = vunpack.c.0.s8 %v4062
          %v4064 = vlaneseq
          %v4065 = vshrl.u32 %v4064, 7
          %v4066 = vsub.s32 %v4063, %v4065
          %v4067 = vrot.slane %v4053, %v4066
          %v4068 = vcombine.high %v4060, %v4060
          %v4069 = vcombine.high %v4067, %v4067
          %v4071 = vunpack.c.l.s4 1966171168
          %v4072 = vunpack.c.0.s8 %v4071
          %v4073 = vlaneseq
          %v4074 = vshrl.u32 %v4073, 7
          %v4075 = vsub.s32 %v4072, %v4074
          %v4076 = vrot.slane %v4060, %v4075
          %v4078 = vunpack.c.l.s4 1966171168
          %v4079 = vunpack.c.0.s8 %v4078
          %v4080 = vlaneseq
          %v4081 = vshrl.u32 %v4080, 7
          %v4082 = vsub.s32 %v4079, %v4081
          %v4083 = vrot.slane %v4067, %v4082
          %v4085 = vunpack.c.l.s4 1966171168
          %v4086 = vunpack.c.0.s8 %v4085
          %v4087 = vlaneseq
          %v4088 = vshrl.u32 %v4087, 7
          %v4089 = vsub.s32 %v4086, %v4088
          %v4090 = vrot.slane %v4068, %v4089
          %v4092 = vunpack.c.l.s4 1966171168
          %v4093 = vunpack.c.0.s8 %v4092
          %v4094 = vlaneseq
          %v4095 = vshrl.u32 %v4094, 7
          %v4096 = vsub.s32 %v4093, %v4095
          %v4097 = vrot.slane %v4069, %v4096
          %v4098 = vcombine.high %v4076, %v4076
          %v4099 = vcombine.high %v4083, %v4083
          %v4100 = vcombine.high %v4090, %v4090
          %v4101 = vcombine.high %v4097, %v4097
          %s4110 = scalar_lea.vmem [#allocation8], %s26
          %4111 = vst [vmem:[%s4110] sm:$0x1] %v4076
          %4112 = vst [vmem:[%s4110 + $0x2] sm:$0x1] %v4090
          %4113 = vst [vmem:[%s4110 + $0x4] sm:$0x1] %v4098
          %4114 = vst [vmem:[%s4110 + $0x6] sm:$0x1] %v4100
          %4115 = vst [vmem:[%s4110 + $0x8] sm:$0x1] %v4083
          %4116 = vst [vmem:[%s4110 + $0xa] sm:$0x1] %v4097
          %4117 = vst [vmem:[%s4110 + $0xc] sm:$0x1] %v4099
          %4118 = vst [vmem:[%s4110 + $0xe] sm:$0x1] %v4101
        $region94: #{tpu_custom_call.1} parent=81 // pred_fallthru
          _
        %p4119 = scmp.eq.s32.totalorder %s26, 1
        // Predicated region
        $region95: #{tpu_custom_call.1} parent=81 // pred_check
          %p4120 = pneg %p4119
        $region96: #{tpu_custom_call.1} parent=81 // pred_check_branch
          %4122 = sbr.rel (%p4120) target = $region98
        $region97: #{tpu_custom_call.1} parent=81 // pred_region
          %v4123 = vld [vmem:[#allocation4] sm:$0xff]
          %vm4124 = vcmp.gt.f32.partialorder %v4123, 0.0
          %v4125 = vsel %vm4124, %v4123, 1.0
          %v4126 = vld [vmem:[#allocation8] sm:$0x3]
          %v4127 = vld [vmem:[#allocation8 + $0x2] sm:$0x3]
          %v4128 = vld [vmem:[#allocation8 + $0x4] sm:$0x3]
          %v4129 = vld [vmem:[#allocation8 + $0x6] sm:$0x3]
          %v4130 = vld [vmem:[#allocation8 + $0x8] sm:$0x3]
          %v4131 = vld [vmem:[#allocation8 + $0xa] sm:$0x3]
          %v4132 = vld [vmem:[#allocation8 + $0xc] sm:$0x3]
          %v4133 = vld [vmem:[#allocation8 + $0xe] sm:$0x3]
          %v4134 = vrcp.pop %v4125
          %v4135 = vmul.f32 1.0, %v4134
          %v4137 = vcombine.high %v4135, %v4135
          %v4139 = vunpack.c.l.s4 1966171168
          %v4140 = vunpack.c.0.s8 %v4139
          %v4141 = vlaneseq
          %v4142 = vshrl.u32 %v4141, 7
          %v4143 = vsub.s32 %v4140, %v4142
          %v4144 = vrot.slane %v4135, %v4143
          %v4146 = vunpack.c.l.s4 1966171168
          %v4147 = vunpack.c.0.s8 %v4146
          %v4148 = vlaneseq
          %v4149 = vshrl.u32 %v4148, 7
          %v4150 = vsub.s32 %v4147, %v4149
          %v4151 = vrot.slane %v4137, %v4150
          %v4152 = vcombine.high %v4144, %v4144
          %v4153 = vcombine.high %v4151, %v4151
          %v4155 = vunpack.c.l.s4 1966171168
          %v4156 = vunpack.c.0.s8 %v4155
          %v4157 = vlaneseq
          %v4158 = vshrl.u32 %v4157, 7
          %v4159 = vsub.s32 %v4156, %v4158
          %v4160 = vrot.slane %v4144, %v4159
          %v4162 = vunpack.c.l.s4 1966171168
          %v4163 = vunpack.c.0.s8 %v4162
          %v4164 = vlaneseq
          %v4165 = vshrl.u32 %v4164, 7
          %v4166 = vsub.s32 %v4163, %v4165
          %v4167 = vrot.slane %v4151, %v4166
          %v4169 = vunpack.c.l.s4 1966171168
          %v4170 = vunpack.c.0.s8 %v4169
          %v4171 = vlaneseq
          %v4172 = vshrl.u32 %v4171, 7
          %v4173 = vsub.s32 %v4170, %v4172
          %v4174 = vrot.slane %v4152, %v4173
          %v4176 = vunpack.c.l.s4 1966171168
          %v4177 = vunpack.c.0.s8 %v4176
          %v4178 = vlaneseq
          %v4179 = vshrl.u32 %v4178, 7
          %v4180 = vsub.s32 %v4177, %v4179
          %v4181 = vrot.slane %v4153, %v4180
          %v4182 = vcombine.high %v4160, %v4160
          %v4183 = vcombine.high %v4167, %v4167
          %v4184 = vcombine.high %v4174, %v4174
          %v4185 = vcombine.high %v4181, %v4181
          %v4186 = vlaneseq
          %v4187 = vshrl.u32 %v4186, 7
          %v4188 = vsub.s32 0, %v4187
          %v4189 = vrot.slane %v4160, %v4188
          %v4190 = vlaneseq
          %v4191 = vshrl.u32 %v4190, 7
          %v4192 = vsub.s32 0, %v4191
          %v4193 = vrot.slane %v4174, %v4192
          %v4194 = vlaneseq
          %v4195 = vshrl.u32 %v4194, 7
          %v4196 = vsub.s32 0, %v4195
          %v4197 = vrot.slane %v4182, %v4196
          %v4198 = vlaneseq
          %v4199 = vshrl.u32 %v4198, 7
          %v4200 = vsub.s32 0, %v4199
          %v4201 = vrot.slane %v4184, %v4200
          %v4202 = vlaneseq
          %v4203 = vshrl.u32 %v4202, 7
          %v4204 = vsub.s32 0, %v4203
          %v4205 = vrot.slane %v4167, %v4204
          %v4206 = vlaneseq
          %v4207 = vshrl.u32 %v4206, 7
          %v4208 = vsub.s32 0, %v4207
          %v4209 = vrot.slane %v4181, %v4208
          %v4210 = vlaneseq
          %v4211 = vshrl.u32 %v4210, 7
          %v4212 = vsub.s32 0, %v4211
          %v4213 = vrot.slane %v4183, %v4212
          %v4214 = vlaneseq
          %v4215 = vshrl.u32 %v4214, 7
          %v4216 = vsub.s32 0, %v4215
          %v4217 = vrot.slane %v4185, %v4216
          %4218 = vset.pattern.permute.xlu0 0
          %4219 = vperm.xlu0 %4218, %v4189
          %v4220 = vpop.permute.xlu0 %4219
          %4222 = vset.pattern.permute.xlu0 0
          %4223 = vperm.xlu0 %4222, %v4193
          %v4224 = vpop.permute.xlu0 %4223
          %4226 = vset.pattern.permute.xlu0 0
          %4227 = vperm.xlu0 %4226, %v4197
          %v4228 = vpop.permute.xlu0 %4227
          %4230 = vset.pattern.permute.xlu0 0
          %4231 = vperm.xlu0 %4230, %v4201
          %v4232 = vpop.permute.xlu0 %4231
          %4234 = vset.pattern.permute.xlu0 0
          %4235 = vperm.xlu0 %4234, %v4205
          %v4236 = vpop.permute.xlu0 %4235
          %4238 = vset.pattern.permute.xlu0 0
          %4239 = vperm.xlu0 %4238, %v4209
          %v4240 = vpop.permute.xlu0 %4239
          %4242 = vset.pattern.permute.xlu0 0
          %4243 = vperm.xlu0 %4242, %v4213
          %v4244 = vpop.permute.xlu0 %4243
          %4246 = vset.pattern.permute.xlu0 0
          %4247 = vperm.xlu0 %4246, %v4217
          %v4248 = vpop.permute.xlu0 %4247
          %v4250 = vmul.f32 %v4126, %v4220
          %v4251 = vmul.f32 %v4127, %v4224
          %v4252 = vmul.f32 %v4128, %v4228
          %v4253 = vmul.f32 %v4129, %v4232
          %v4254 = vmul.f32 %v4130, %v4236
          %v4255 = vmul.f32 %v4131, %v4240
          %v4256 = vmul.f32 %v4132, %v4244
          %v4257 = vmul.f32 %v4133, %v4248
          %4258 = vst [vmem:[#allocation8] sm:$0x3] %v4250
          %4259 = vst [vmem:[#allocation8 + $0x2] sm:$0x3] %v4251
          %4260 = vst [vmem:[#allocation8 + $0x4] sm:$0x3] %v4252
          %4261 = vst [vmem:[#allocation8 + $0x6] sm:$0x3] %v4253
          %4262 = vst [vmem:[#allocation8 + $0x8] sm:$0x3] %v4254
          %4263 = vst [vmem:[#allocation8 + $0xa] sm:$0x3] %v4255
          %4264 = vst [vmem:[#allocation8 + $0xc] sm:$0x3] %v4256
          %4265 = vst [vmem:[#allocation8 + $0xe] sm:$0x3] %v4257
        $region98: #{tpu_custom_call.1} parent=81 // pred_fallthru
          _
        // Predicated region
        $region99: #{tpu_custom_call.1} parent=81 // pred_check
          %p4266 = pneg %p215
        $region100: #{tpu_custom_call.1} parent=81 // pred_check_branch
          %4268 = sbr.rel (%p4266) target = $region102
        $region101: #{tpu_custom_call.1} parent=81 // pred_region
          %s4269 = smul.u32 8, %s25
          %s4271 = ssub.s32 256, 256
          %4272 = vsyncadd [#allocation9], %s4271
          %s4273 = smul.addr %s4269, 32
          %s4274 = scalar_lea.hbm %s8, %s4273
          %s4275 = sshll.u32 [#allocation8], 4
          %s4276 = int_to_ptr.vmem [resolvable:$true] %s4275
          %4281 = dma.vmem_to_hbm [thread:$0]  %s4276, 256, %s4274, [#allocation9], 32, 32, 2
        $region102: #{tpu_custom_call.1} parent=81 // pred_fallthru
          _
        // Predicated region
        $region103: #{tpu_custom_call.1} parent=81 // pred_check
          %p4282 = pneg %p215
        $region104: #{tpu_custom_call.1} parent=81 // pred_check_branch
          %4284 = sbr.rel (%p4282) target = $region106
        $region105: #{tpu_custom_call.1} parent=81 // pred_region
          %4285 = dma.done [#allocation9], 256
        $region106: #{tpu_custom_call.1} parent=81 // pred_fallthru
          _
      $region82: #{tpu_custom_call.1} parent=5 // pred_fallthru
        _
      %p4286 = scmp.le.s32.totalorder 2, %s16
      // Predicated region
      $region107: #{tpu_custom_call.1} parent=5 // pred_check
        %p4287 = pneg %p4286
      $region108: #{tpu_custom_call.1} parent=5 // pred_check_branch
        %4289 = sbr.rel (%p4287) target = $region110
      $region109: #{tpu_custom_call.1} parent=5 // pred_region
        %s4290 = ssub.s32 %s16, 2
      $region110: #{tpu_custom_call.1} parent=5 // pred_fallthru
        _
    $region6: #{tpu_custom_call.1} parent=1 // loop_footer
      %s20 = sadd.s32 1, %s16
    $region7: #{tpu_custom_call.1} parent=1 // loop_footer_branch
      %15 = sbr.rel target = $region3
    $region8: #{tpu_custom_call.1} parent=1 // loop_exit
      _
    %4291 = vsyncpa [#allocation9], 1
    %s4292 = scalar_lea.sflag [#allocation9], 1
    %4293 = vsyncpa %s4292, 1

</llo_original>
